<compile_context>
chip_gen: v5e
topology: v5e:2x2
jax: 0.10.0
libtpu: 0.0.40
codegen_flags: <defaults>
</compile_context>

<pallas_src>
import functools
import numpy as np
import jax
import jax.numpy as jnp
from jax.experimental import pallas as pl
from jax.experimental.pallas import tpu as pltpu


# ----------------------------- tiling helpers -------------------------------


def _pick_tile(dim, target, align):
    """Largest tile <= target that divides dim and respects TPU alignment.
    If dim <= target the full dim is used (always a legal block)."""
    if dim <= target:
        return dim
    t = (target // align) * align
    while t >= align:
        if dim % t == 0:
            return t
        t -= align
    return dim


# ----------------------------- Pallas kernels ------------------------------


def _linear_kernel(*refs, act, has_bias, has_res):
    """refs = (x, w, [bias], [residual], out, acc_scratch)."""
    idx = 0
    x_ref = refs[idx]; idx += 1
    w_ref = refs[idx]; idx += 1
    b_ref = refs[idx] if has_bias else None
    idx += 1 if has_bias else 0
    r_ref = refs[idx] if has_res else None
    idx += 1 if has_res else 0
    o_ref = refs[idx]
    acc_ref = refs[idx + 1]

    k = pl.program_id(2)

    @pl.when(k == 0)
    def _():
        acc_ref[...] = jnp.zeros_like(acc_ref)

    # bf16 MXU operands, f32 accumulate (do NOT upcast operands to f32).
    acc_ref[...] += jnp.dot(x_ref[...].astype(jnp.bfloat16),
                            w_ref[...].astype(jnp.bfloat16),
                            preferred_element_type=jnp.float32)

    @pl.when(k == pl.num_programs(2) - 1)
    def _():
        y = acc_ref[...]
        if has_bias:
            y = y + b_ref[...].astype(jnp.float32)
        if act == "gelu":
            # TODO(synk): PyTorch F.gelu is exact erf-GELU; tanh approximation used here.
            y = 0.5 * y * (1.0 + jnp.tanh(
                0.7978845608028654 * (y + 0.044715 * y * y * y)))
        if has_res:
            y = y + r_ref[...].astype(jnp.float32)
        o_ref[...] = y.astype(o_ref.dtype)


def pallas_linear(x2d, w, b=None, act=None, residual=None,
                  tm_target=256, tn_target=512, tk_target=512):
    """Tiled (M,K)@(K,N) matmul with fused bias / GELU / residual epilogue."""
    M, K = x2d.shape
    _, N = w.shape
    tm = _pick_tile(M, tm_target, 8)
    tn = _pick_tile(N, tn_target, 128)
    tk = _pick_tile(K, tk_target, 128)
    grid = (M // tm, N // tn, K // tk)

    in_specs = [pl.BlockSpec((tm, tk), lambda i, j, k: (i, k)),
                pl.BlockSpec((tk, tn), lambda i, j, k: (k, j))]
    args = [x2d, w]
    if b is not None:
        in_specs.append(pl.BlockSpec((1, tn), lambda i, j, k: (0, j)))
        args.append(b)
    if residual is not None:
        in_specs.append(pl.BlockSpec((tm, tn), lambda i, j, k: (i, j)))
        args.append(residual)

    kernel = functools.partial(_linear_kernel, act=act,
                               has_bias=b is not None,
                               has_res=residual is not None)
    return pl.pallas_call(
        kernel,
        grid=grid,
        in_specs=in_specs,
        out_specs=pl.BlockSpec((tm, tn), lambda i, j, k: (i, j)),
        out_shape=jax.ShapeDtypeStruct((M, N), x2d.dtype),
        scratch_shapes=[pltpu.VMEM((tm, tn), jnp.float32)],
        compiler_params=pltpu.CompilerParams(
            dimension_semantics=("parallel", "parallel", "arbitrary")),
    )(*args)


def _layernorm_kernel(x_ref, g_ref, b_ref, o_ref, *, eps):
    x = x_ref[...].astype(jnp.float32)
    mu = jnp.mean(x, axis=-1, keepdims=True)
    var = jnp.mean((x - mu) ** 2, axis=-1, keepdims=True)
    y = (x - mu) * jax.lax.rsqrt(var + eps)
    o_ref[...] = (y * g_ref[...] + b_ref[...]).astype(o_ref.dtype)


def pallas_layernorm(x2d, gamma, beta, eps=1e-5):
    M, D = x2d.shape
    tm = _pick_tile(M, 512, 8)
    return pl.pallas_call(
        functools.partial(_layernorm_kernel, eps=eps),
        grid=(M // tm,),
        in_specs=[pl.BlockSpec((tm, D), lambda i: (i, 0)),
                  pl.BlockSpec((1, D), lambda i: (0, 0)),
                  pl.BlockSpec((1, D), lambda i: (0, 0))],
        out_specs=pl.BlockSpec((tm, D), lambda i: (i, 0)),
        out_shape=jax.ShapeDtypeStruct((M, D), x2d.dtype),
        compiler_params=pltpu.CompilerParams(dimension_semantics=("parallel",)),
    )(x2d, gamma, beta)


def _flash_attn_kernel(q_ref, k_ref, v_ref, o_ref, m_sc, l_sc, acc_sc,
                       *, scale, causal, tq, tk):
    qb = pl.program_id(1)
    kb = pl.program_id(2)

    @pl.when(kb == 0)
    def _():
        m_sc[...] = jnp.full_like(m_sc, -1e30)
        l_sc[...] = jnp.zeros_like(l_sc)
        acc_sc[...] = jnp.zeros_like(acc_sc)

    q = q_ref[0]          # (tq, Dh)
    k = k_ref[0]          # (tk, Dh)
    v = v_ref[0]          # (tk, Dh)

    # q @ k^T via dot_general (no explicit transpose), bf16 MXU, f32 acc.
    s = jax.lax.dot_general(q.astype(jnp.bfloat16), k.astype(jnp.bfloat16),
                            (((1,), (1,)), ((), ())),
                            preferred_element_type=jnp.float32) * scale
    if causal:
        qi = jax.lax.broadcasted_iota(jnp.int32, s.shape, 0) + qb * tq
        ki = jax.lax.broadcasted_iota(jnp.int32, s.shape, 1) + kb * tk
        s = jnp.where(ki <= qi, s, -1e30)   # finite mask: no NaN on masked rows

    m_prev = m_sc[...]
    m_new = jnp.maximum(m_prev, jnp.max(s, axis=-1, keepdims=True))
    alpha = jnp.exp(m_prev - m_new)
    p = jnp.exp(s - m_new)
    l_sc[...] = alpha * l_sc[...] + jnp.sum(p, axis=-1, keepdims=True)
    acc_sc[...] = alpha * acc_sc[...] + jnp.dot(
        p.astype(jnp.bfloat16), v.astype(jnp.bfloat16),
        preferred_element_type=jnp.float32)
    m_sc[...] = m_new

    @pl.when(kb == pl.num_programs(2) - 1)
    def _():
        o_ref[0] = (acc_sc[...] *
                    pl.reciprocal(l_sc[...], approx=True)).astype(o_ref.dtype)


def pallas_attention(q, k, v, causal, tq_target=256, tk_target=512):
    """q: (B*H, Tq, Dh), k/v: (B*H, Tk, Dh) -> (B*H, Tq, Dh), flash-style."""
    BH, Tq, Dh = q.shape
    Tk = k.shape[1]
    tq = _pick_tile(Tq, tq_target, 8)
    tk = _pick_tile(Tk, tk_target, 128)
    # Whisper scales q and k by Dh**-0.25 each -> equivalent score scale Dh**-0.5.
    scale = 1.0 / float(np.sqrt(Dh))
    grid = (BH, Tq // tq, Tk // tk)
    return pl.pallas_call(
        functools.partial(_flash_attn_kernel, scale=scale, causal=causal,
                          tq=tq, tk=tk),
        grid=grid,
        in_specs=[
            pl.BlockSpec((1, tq, Dh), lambda i, qb, kb: (i, qb, 0)),
            pl.BlockSpec((1, tk, Dh), lambda i, qb, kb: (i, kb, 0)),
            pl.BlockSpec((1, tk, Dh), lambda i, qb, kb: (i, kb, 0)),
        ],
        out_specs=pl.BlockSpec((1, tq, Dh), lambda i, qb, kb: (i, qb, 0)),
        out_shape=jax.ShapeDtypeStruct((BH, Tq, Dh), q.dtype),
        scratch_shapes=[pltpu.VMEM((tq, 1), jnp.float32),
                        pltpu.VMEM((tq, 1), jnp.float32),
                        pltpu.VMEM((tq, Dh), jnp.float32)],
        compiler_params=pltpu.CompilerParams(
            dimension_semantics=("parallel", "parallel", "arbitrary")),
    )(q, k, v)


# ----------------------------- model pieces (glue + Pallas calls) ----------


def linear3(x, p, act=None, residual=None):
    B, T, D = x.shape
    res2 = residual.reshape(B * T, -1) if residual is not None else None
    y = pallas_linear(x.reshape(B * T, D), p["w"], p.get("b"),
                      act=act, residual=res2)
    return y.reshape(B, T, -1)


def layernorm3(x, g, b):
    B, T, D = x.shape
    return pallas_layernorm(x.reshape(B * T, D), g, b).reshape(B, T, D)


def conv1d_cl(x, w, b, stride, pad, act):
    """Channels-last conv1d via im2col + tiled Pallas matmul.
    x: (B, T, Cin), w: (Cout, Cin, K) (PyTorch layout) -> (B, T_out, Cout)."""
    B, T, Cin = x.shape
    Cout, _, K = w.shape
    x_pad = jnp.pad(x, ((0, 0), (pad, pad), (0, 0)))
    T_out = (T + 2 * pad - K) // stride + 1
    pos = jnp.arange(T_out)[:, None] * stride + jnp.arange(K)[None, :]   # (T_out, K)
    patches = x_pad[:, pos, :]                                           # (B, T_out, K, Cin)
    patches = patches.reshape(B * T_out, K * Cin)
    w_flat = jnp.transpose(w, (2, 1, 0)).reshape(K * Cin, Cout)          # (K*Cin, Cout)
    y = pallas_linear(patches, w_flat, b.reshape(1, Cout), act=act)
    return y.reshape(B, T_out, Cout)


def multi_head_attention(x, xa, p, n_head, causal, residual):
    B, Tq, D = x.shape
    Dh = D // n_head

    if xa is None:
        # Fused Q/K/V projection: one (D, 3D) matmul.
        qkv = linear3(x, p["qkv"])
        q, k, v = jnp.split(qkv, 3, axis=-1)
    else:
        q = linear3(x, p["q"])
        # Fused K/V projection over the encoder features: one (D, 2D) matmul.
        kv = linear3(xa, p["kv"])
        k, v = jnp.split(kv, 2, axis=-1)

    def split_heads(t):
        b, tt, _ = t.shape
        return t.reshape(b, tt, n_head, Dh).transpose(0, 2, 1, 3).reshape(b * n_head, tt, Dh)

    o = pallas_attention(split_heads(q), split_heads(k), split_heads(v), causal)
    o = o.reshape(B, n_head, Tq, Dh).transpose(0, 2, 1, 3).reshape(B, Tq, D)
    # residual add is fused into the output-projection epilogue
    return linear3(o, p["o"], residual=residual)


def residual_block(x, xa, p, n_head, causal, cross):
    x = multi_head_attention(layernorm3(x, p["ln1"]["g"], p["ln1"]["b"]),
                             None, p["attn"], n_head, causal, residual=x)
    if cross:
        x = multi_head_attention(layernorm3(x, p["ln_x"]["g"], p["ln_x"]["b"]),
                                 xa, p["xattn"], n_head, False, residual=x)
    h = linear3(layernorm3(x, p["ln2"]["g"], p["ln2"]["b"]), p["mlp1"], act="gelu")
    x = linear3(h, p["mlp2"], residual=x)     # residual fused into mlp2 epilogue
    return x


def encoder_forward(mel, P, dims):
    x = mel.transpose(0, 2, 1)                 # NCL -> NLC once; channels-last after this
    x = conv1d_cl(x, P["conv1_w"], P["conv1_b"], stride=1, pad=1, act="gelu")
    x = conv1d_cl(x, P["conv2_w"], P["conv2_b"], stride=2, pad=1, act="gelu")
    x = x + P["enc_pos"][None, :, :]           # (B, n_audio_ctx, n_audio_state)
    for blk in P["enc_blocks"]:
        x = residual_block(x, None, blk, dims["n_audio_head"], causal=False, cross=False)
    return layernorm3(x, P["enc_ln_g"], P["enc_ln_b"])


def decoder_forward(tokens, features, P, dims):
    T = tokens.shape[-1]
    x = jnp.take(P["tok_emb"], tokens, axis=0) + P["dec_pos"][:T][None, :, :]
    for blk in P["dec_blocks"]:
        x = residual_block(x, features, blk, dims["n_text_head"], causal=True, cross=True)
    x = layernorm3(x, P["dec_ln_g"], P["dec_ln_b"])
    B, Tt, D = x.shape
    # logits = x @ tok_emb.T ; embedding stored pre-transposed as (D, n_vocab), no bias.
    logits = pallas_linear(x.reshape(B * Tt, D), P["tok_emb_T"], None)
    return logits.reshape(B, Tt, -1)


def asr_whisper_forward(mel, tokens, P, dims, encoder_no_grad=True):
    features = encoder_forward(mel, P, dims)
    if encoder_no_grad:                        # mirrors `with torch.no_grad():`
        features = jax.lax.stop_gradient(features)
    return decoder_forward(tokens, features, P, dims)


# ----------------------------- deterministic parameter init ----------------


def sinusoids(length, channels, max_timescale=10000):
    inc = np.log(max_timescale) / (channels // 2 - 1)
    inv_ts = np.exp(-inc * np.arange(channels // 2))
    t = np.arange(length)[:, None] * inv_ts[None, :]
    return jnp.asarray(np.concatenate([np.sin(t), np.cos(t)], axis=1), jnp.float32)


def init_linear(key, d_in, d_out, bias=True):
    kw, kb = jax.random.split(key)
    w = jax.random.normal(kw, (d_in, d_out), jnp.float32) * 0.02
    p = {"w": w}
    if bias:
        p["b"] = jax.random.normal(kb, (1, d_out), jnp.float32) * 0.02
    return p


def init_ln(d):
    return {"g": jnp.ones((1, d), jnp.float32), "b": jnp.zeros((1, d), jnp.float32)}


def init_attn(key, d, cross):
    """Builds pre-fused projection weights once (outside the forward pass).
    Key projection has no bias (Whisper), so its fused bias segment is zero."""
    ks = jax.random.split(key, 7)
    wq = jax.random.normal(ks[0], (d, d), jnp.float32) * 0.02
    bq = jax.random.normal(ks[1], (1, d), jnp.float32) * 0.02
    wk = jax.random.normal(ks[2], (d, d), jnp.float32) * 0.02
    wv = jax.random.normal(ks[3], (d, d), jnp.float32) * 0.02
    bv = jax.random.normal(ks[4], (1, d), jnp.float32) * 0.02
    wo = jax.random.normal(ks[5], (d, d), jnp.float32) * 0.02
    bo = jax.random.normal(ks[6], (1, d), jnp.float32) * 0.02
    bk = jnp.zeros((1, d), jnp.float32)
    o = {"w": wo, "b": bo}
    if cross:
        return {"q": {"w": wq, "b": bq},
                "kv": {"w": jnp.concatenate([wk, wv], axis=1),
                       "b": jnp.concatenate([bk, bv], axis=1)},
                "o": o}
    return {"qkv": {"w": jnp.concatenate([wq, wk, wv], axis=1),
                    "b": jnp.concatenate([bq, bk, bv], axis=1)},
            "o": o}


def init_block(key, d, cross):
    ks = jax.random.split(key, 5)
    p = {"ln1": init_ln(d), "attn": init_attn(ks[0], d, cross=False),
         "ln2": init_ln(d),
         "mlp1": init_linear(ks[1], d, 4 * d), "mlp2": init_linear(ks[2], 4 * d, d)}
    if cross:
        p["ln_x"] = init_ln(d)
        p["xattn"] = init_attn(ks[3], d, cross=True)
    return p


def init_params(key, dims):
    d_a, d_t = dims["n_audio_state"], dims["n_text_state"]
    keys = jax.random.split(key, 8)
    enc_blocks = [init_block(k, d_a, cross=False)
                  for k in jax.random.split(keys[0], dims["n_audio_layer"])]
    dec_blocks = [init_block(k, d_t, cross=True)
                  for k in jax.random.split(keys[1], dims["n_text_layer"])]
    tok_emb = jax.random.normal(keys[4], (dims["n_vocab"], d_t), jnp.float32) * 0.02
    return {
        "conv1_w": jax.random.normal(keys[2], (d_a, dims["n_mels"], 3), jnp.float32) * 0.02,
        "conv1_b": jnp.zeros((d_a,), jnp.float32),
        "conv2_w": jax.random.normal(keys[3], (d_a, d_a, 3), jnp.float32) * 0.02,
        "conv2_b": jnp.zeros((d_a,), jnp.float32),
        "enc_pos": sinusoids(dims["n_audio_ctx"], d_a),
        "enc_blocks": enc_blocks,
        "enc_ln_g": jnp.ones((1, d_a), jnp.float32),
        "enc_ln_b": jnp.zeros((1, d_a), jnp.float32),
        "tok_emb": tok_emb,
        "tok_emb_T": jnp.asarray(tok_emb.T),          # pre-transposed once for the logits matmul
        "dec_pos": jax.random.normal(keys[5], (dims["n_text_ctx"], d_t), jnp.float32) * 0.02,
        "dec_blocks": dec_blocks,
        "dec_ln_g": jnp.ones((1, d_t), jnp.float32),
        "dec_ln_b": jnp.zeros((1, d_t), jnp.float32),
    }


# ----------------------------- main -----------------------------------------

if __name__ == "__main__":
    dims = dict(n_mels=16, n_audio_ctx=16, n_audio_state=32, n_audio_head=4,
                n_audio_layer=2, n_vocab=64, n_text_ctx=8, n_text_state=32,
                n_text_head=4, n_text_layer=2)

    key = jax.random.PRNGKey(0)
    k_param, k_mel, k_tok = jax.random.split(key, 3)
    params = init_params(k_param, dims)

    B = 2
    T_mel = 2 * dims["n_audio_ctx"]                       # conv2 stride-2 -> n_audio_ctx
    mel = jax.random.normal(k_mel, (B, dims["n_mels"], T_mel), jnp.float32)
    tokens = jax.random.randint(k_tok, (B, dims["n_text_ctx"]), 0, dims["n_vocab"], jnp.int32)

    fwd = jax.jit(functools.partial(asr_whisper_forward, P=params, dims=dims,
                                    encoder_no_grad=True))
    logits = fwd(mel, tokens)
    jax.block_until_ready(logits)
    assert logits.shape == (B, dims["n_text_ctx"], dims["n_vocab"])
    print("KERNEL_OK")
</pallas_src>

<mosaic_0001>
module attributes {stable_mosaic.version = 11 : i64} {
  func.func @_layernorm_kernel(%arg0: i32, %arg1: memref<16x32xf32, #tpu.memory_space<vmem>>, %arg2: memref<1x32xf32, #tpu.memory_space<vmem>>, %arg3: memref<1x32xf32, #tpu.memory_space<vmem>>, %arg4: memref<16x32xf32, #tpu.memory_space<vmem>>) attributes {dimension_semantics = [#tpu.dimension_semantics<parallel>], iteration_bounds = array<i64: 1>, scalar_prefetch = 0 : i64, scratch_operands = 0 : i64, tpu.core_type = #tpu.core_type<tc>, window_params = [{transform_indices = @transform_0, window_bounds = array<i64: 16, 32>}, {pipeline_mode = #tpu.pipeline_mode<synchronous>, transform_indices = @transform_1, window_bounds = array<i64: 1, 32>}, {pipeline_mode = #tpu.pipeline_mode<synchronous>, transform_indices = @transform_2, window_bounds = array<i64: 1, 32>}, {transform_indices = @transform_3, window_bounds = array<i64: 16, 32>}]} {
    %c0 = arith.constant 0 : index
    %c0_0 = arith.constant 0 : index
    %0 = vector.load %arg1[%c0, %c0_0] : memref<16x32xf32, #tpu.memory_space<vmem>>, vector<16x32xf32>
    %cst = arith.constant dense<0.000000e+00> : vector<16xf32>
    %1 = vector.multi_reduction <add>, %0, %cst [1] : vector<16x32xf32> to vector<16xf32>
    %2 = vector.shape_cast %1 : vector<16xf32> to vector<16x1xf32>
    %cst_1 = arith.constant 3.200000e+01 : f32
    %3 = vector.broadcast %cst_1 : f32 to vector<16x1xf32>
    %4 = arith.divf %2, %3 : vector<16x1xf32>
    %5 = vector.broadcast %4 : vector<16x1xf32> to vector<16x32xf32>
    %6 = arith.subf %0, %5 : vector<16x32xf32>
    %7 = arith.mulf %6, %6 : vector<16x32xf32>
    %cst_2 = arith.constant dense<0.000000e+00> : vector<16xf32>
    %8 = vector.multi_reduction <add>, %7, %cst_2 [1] : vector<16x32xf32> to vector<16xf32>
    %9 = vector.shape_cast %8 : vector<16xf32> to vector<16x1xf32>
    %cst_3 = arith.constant 3.200000e+01 : f32
    %10 = vector.broadcast %cst_3 : f32 to vector<16x1xf32>
    %11 = arith.divf %9, %10 : vector<16x1xf32>
    %12 = vector.broadcast %4 : vector<16x1xf32> to vector<16x32xf32>
    %13 = arith.subf %0, %12 : vector<16x32xf32>
    %cst_4 = arith.constant 9.99999974E-6 : f32
    %14 = vector.broadcast %cst_4 : f32 to vector<16x1xf32>
    %15 = arith.addf %11, %14 : vector<16x1xf32>
    %16 = math.rsqrt %15 : vector<16x1xf32>
    %17 = vector.broadcast %16 : vector<16x1xf32> to vector<16x32xf32>
    %18 = arith.mulf %13, %17 : vector<16x32xf32>
    %c0_5 = arith.constant 0 : index
    %c0_6 = arith.constant 0 : index
    %19 = vector.load %arg2[%c0_5, %c0_6] : memref<1x32xf32, #tpu.memory_space<vmem>>, vector<1x32xf32>
    %20 = vector.broadcast %19 : vector<1x32xf32> to vector<16x32xf32>
    %21 = arith.mulf %18, %20 : vector<16x32xf32>
    %c0_7 = arith.constant 0 : index
    %c0_8 = arith.constant 0 : index
    %22 = vector.load %arg3[%c0_7, %c0_8] : memref<1x32xf32, #tpu.memory_space<vmem>>, vector<1x32xf32>
    %23 = vector.broadcast %22 : vector<1x32xf32> to vector<16x32xf32>
    %24 = arith.addf %21, %23 : vector<16x32xf32>
    %c0_9 = arith.constant 0 : index
    %c0_10 = arith.constant 0 : index
    %25 = vector.load %arg4[%c0_9, %c0_10] : memref<16x32xf32, #tpu.memory_space<vmem>>, vector<16x32xf32>
    tpu.vector_store %arg4[%c0_9, %c0_10], %24 {strides = array<i32>} : memref<16x32xf32, #tpu.memory_space<vmem>>, vector<16x32xf32>,
    return
  }
  func.func @transform_0(%arg0: i32) -> (i32, i32) {
    %c0_i32 = arith.constant 0 : i32
    %c0_i32_0 = arith.constant 0 : i32
    return %arg0, %c0_i32 : i32, i32
  }
  func.func @transform_1(%arg0: i32) -> (i32, i32) {
    %c0_i32 = arith.constant 0 : i32
    %c0_i32_0 = arith.constant 0 : i32
    %c0_i32_1 = arith.constant 0 : i32
    return %c0_i32, %c0_i32_0 : i32, i32
  }
  func.func @transform_2(%arg0: i32) -> (i32, i32) {
    %c0_i32 = arith.constant 0 : i32
    %c0_i32_0 = arith.constant 0 : i32
    %c0_i32_1 = arith.constant 0 : i32
    return %c0_i32, %c0_i32_0 : i32, i32
  }
  func.func @transform_3(%arg0: i32) -> (i32, i32) {
    %c0_i32 = arith.constant 0 : i32
    %c0_i32_0 = arith.constant 0 : i32
    return %arg0, %c0_i32 : i32, i32
  }
}

module attributes {stable_mosaic.version = 11 : i64} {
  func.func @_linear_kernel(%arg0: i32, %arg1: i32, %arg2: i32, %arg3: memref<16x32xf32, #tpu.memory_space<vmem>>, %arg4: memref<32x96xf32, #tpu.memory_space<vmem>>, %arg5: memref<1x96xf32, #tpu.memory_space<vmem>>, %arg6: memref<16x96xf32, #tpu.memory_space<vmem>>, %arg7: memref<16x96xf32, #tpu.memory_space<vmem>>) attributes {dimension_semantics = [#tpu.dimension_semantics<parallel>, #tpu.dimension_semantics<parallel>, #tpu.dimension_semantics<arbitrary>], iteration_bounds = array<i64: 1, 1, 1>, scalar_prefetch = 0 : i64, scratch_operands = 1 : i64, tpu.core_type = #tpu.core_type<tc>, window_params = [{transform_indices = @transform_0, window_bounds = array<i64: 16, 32>}, {transform_indices = @transform_1, window_bounds = array<i64: 32, 96>}, {transform_indices = @transform_2, window_bounds = array<i64: 1, 96>}, {transform_indices = @transform_3, window_bounds = array<i64: 16, 96>}]} {
    %c0_i32 = arith.constant 0 : i32
    %0 = arith.cmpi eq, %arg2, %c0_i32 : i32
    %1 = arith.extui %0 : i1 to i32
    %c0_i32_0 = arith.constant 0 : i32
    %2 = arith.cmpi ne, %1, %c0_i32_0 : i32
    scf.if %2 {
      %cst_10 = arith.constant 0.000000e+00 : f32
      %14 = vector.broadcast %cst_10 : f32 to vector<16x96xf32>
      %c0_11 = arith.constant 0 : index
      %c0_12 = arith.constant 0 : index
      %15 = vector.load %arg7[%c0_11, %c0_12] : memref<16x96xf32, #tpu.memory_space<vmem>>, vector<16x96xf32>
      tpu.vector_store %arg7[%c0_11, %c0_12], %14 {strides = array<i32>} : memref<16x96xf32, #tpu.memory_space<vmem>>, vector<16x96xf32>,
    } else {
    }
    %c0 = arith.constant 0 : index
    %c0_1 = arith.constant 0 : index
    %3 = vector.load %arg7[%c0, %c0_1] : memref<16x96xf32, #tpu.memory_space<vmem>>, vector<16x96xf32>
    %c0_2 = arith.constant 0 : index
    %c0_3 = arith.constant 0 : index
    %4 = vector.load %arg3[%c0_2, %c0_3] : memref<16x32xf32, #tpu.memory_space<vmem>>, vector<16x32xf32>
    %5 = arith.truncf %4 : vector<16x32xf32> to vector<16x32xbf16>
    %c0_4 = arith.constant 0 : index
    %c0_5 = arith.constant 0 : index
    %6 = vector.load %arg4[%c0_4, %c0_5] : memref<32x96xf32, #tpu.memory_space<vmem>>, vector<32x96xf32>
    %7 = arith.truncf %6 : vector<32x96xf32> to vector<32x96xbf16>
    %cst = arith.constant dense<0.000000e+00> : vector<16x96xf32>
    %8 = tpu.matmul %5, %7, %cst {dimension_numbers = #tpu.dot_dimension_numbers<[1], [0], [0], [1], [0, 0, 1, 1], [], []>} : vector<16x32xbf16>, vector<32x96xbf16>, vector<16x96xf32> -> vector<16x96xf32>
    %9 = arith.addf %3, %8 : vector<16x96xf32>
    %c0_6 = arith.constant 0 : index
    %c0_7 = arith.constant 0 : index
    %10 = vector.load %arg7[%c0_6, %c0_7] : memref<16x96xf32, #tpu.memory_space<vmem>>, vector<16x96xf32>
    tpu.vector_store %arg7[%c0_6, %c0_7], %9 {strides = array<i32>} : memref<16x96xf32, #tpu.memory_space<vmem>>, vector<16x96xf32>,
    %c0_i32_8 = arith.constant 0 : i32
    %11 = arith.cmpi eq, %arg2, %c0_i32_8 : i32
    %12 = arith.extui %11 : i1 to i32
    %c0_i32_9 = arith.constant 0 : i32
    %13 = arith.cmpi ne, %12, %c0_i32_9 : i32
    scf.if %13 {
      %c0_10 = arith.constant 0 : index
      %c0_11 = arith.constant 0 : index
      %14 = vector.load %arg7[%c0_10, %c0_11] : memref<16x96xf32, #tpu.memory_space<vmem>>, vector<16x96xf32>
      %c0_12 = arith.constant 0 : index
      %c0_13 = arith.constant 0 : index
      %15 = vector.load %arg5[%c0_12, %c0_13] : memref<1x96xf32, #tpu.memory_space<vmem>>, vector<1x96xf32>
      %16 = vector.broadcast %15 : vector<1x96xf32> to vector<16x96xf32>
      %17 = arith.addf %14, %16 : vector<16x96xf32>
      %c0_14 = arith.constant 0 : index
      %c0_15 = arith.constant 0 : index
      %18 = vector.load %arg6[%c0_14, %c0_15] : memref<16x96xf32, #tpu.memory_space<vmem>>, vector<16x96xf32>
      tpu.vector_store %arg6[%c0_14, %c0_15], %17 {strides = array<i32>} : memref<16x96xf32, #tpu.memory_space<vmem>>, vector<16x96xf32>,
    } else {
    }
    return
  }
  func.func @transform_0(%arg0: i32, %arg1: i32, %arg2: i32) -> (i32, i32) {
    %c0_i32 = arith.constant 0 : i32
    return %arg0, %arg2 : i32, i32
  }
  func.func @transform_1(%arg0: i32, %arg1: i32, %arg2: i32) -> (i32, i32) {
    %c0_i32 = arith.constant 0 : i32
    return %arg2, %arg1 : i32, i32
  }
  func.func @transform_2(%arg0: i32, %arg1: i32, %arg2: i32) -> (i32, i32) {
    %c0_i32 = arith.constant 0 : i32
    %c0_i32_0 = arith.constant 0 : i32
    return %c0_i32, %arg1 : i32, i32
  }
  func.func @transform_3(%arg0: i32, %arg1: i32, %arg2: i32) -> (i32, i32) {
    %c0_i32 = arith.constant 0 : i32
    return %arg0, %arg1 : i32, i32
  }
}

module attributes {stable_mosaic.version = 11 : i64} {
  func.func @_flash_attn_kernel(%arg0: i32, %arg1: i32, %arg2: i32, %arg3: memref<1x8x8xf32, #tpu.memory_space<vmem>>, %arg4: memref<1x8x8xf32, #tpu.memory_space<vmem>>, %arg5: memref<1x8x8xf32, #tpu.memory_space<vmem>>, %arg6: memref<1x8x8xf32, #tpu.memory_space<vmem>>, %arg7: memref<8x1xf32, #tpu.memory_space<vmem>>, %arg8: memref<8x1xf32, #tpu.memory_space<vmem>>, %arg9: memref<8x8xf32, #tpu.memory_space<vmem>>) attributes {dimension_semantics = [#tpu.dimension_semantics<parallel>, #tpu.dimension_semantics<parallel>, #tpu.dimension_semantics<arbitrary>], iteration_bounds = array<i64: 8, 1, 1>, scalar_prefetch = 0 : i64, scratch_operands = 3 : i64, tpu.core_type = #tpu.core_type<tc>, window_params = [{transform_indices = @transform_0, window_bounds = array<i64: 1, 8, 8>}, {transform_indices = @transform_1, window_bounds = array<i64: 1, 8, 8>}, {transform_indices = @transform_2, window_bounds = array<i64: 1, 8, 8>}, {transform_indices = @transform_3, window_bounds = array<i64: 1, 8, 8>}]} {
    %c0_i32 = arith.constant 0 : i32
    %0 = arith.cmpi eq, %arg2, %c0_i32 : i32
    %1 = arith.extui %0 : i1 to i32
    %c0_i32_0 = arith.constant 0 : i32
    %2 = arith.cmpi ne, %1, %c0_i32_0 : i32
    scf.if %2 {
      %cst_29 = arith.constant -1.000000e+30 : f32
      %52 = vector.broadcast %cst_29 : f32 to vector<8x1xf32>
      %c0_30 = arith.constant 0 : index
      %c0_31 = arith.constant 0 : index
      %53 = vector.load %arg7[%c0_30, %c0_31] : memref<8x1xf32, #tpu.memory_space<vmem>>, vector<8x1xf32>
      tpu.vector_store %arg7[%c0_30, %c0_31], %52 {strides = array<i32>} : memref<8x1xf32, #tpu.memory_space<vmem>>, vector<8x1xf32>,
      %cst_32 = arith.constant 0.000000e+00 : f32
      %54 = vector.broadcast %cst_32 : f32 to vector<8x1xf32>
      %c0_33 = arith.constant 0 : index
      %c0_34 = arith.constant 0 : index
      %55 = vector.load %arg8[%c0_33, %c0_34] : memref<8x1xf32, #tpu.memory_space<vmem>>, vector<8x1xf32>
      tpu.vector_store %arg8[%c0_33, %c0_34], %54 {strides = array<i32>} : memref<8x1xf32, #tpu.memory_space<vmem>>, vector<8x1xf32>,
      %cst_35 = arith.constant 0.000000e+00 : f32
      %56 = vector.broadcast %cst_35 : f32 to vector<8x8xf32>
      %c0_36 = arith.constant 0 : index
      %c0_37 = arith.constant 0 : index
      %57 = vector.load %arg9[%c0_36, %c0_37] : memref<8x8xf32, #tpu.memory_space<vmem>>, vector<8x8xf32>
      tpu.vector_store %arg9[%c0_36, %c0_37], %56 {strides = array<i32>} : memref<8x8xf32, #tpu.memory_space<vmem>>, vector<8x8xf32>,
    } else {
    }
    %c0 = arith.constant 0 : index
    %c0_1 = arith.constant 0 : index
    %c0_2 = arith.constant 0 : index
    %3 = vector.load %arg3[%c0, %c0_1, %c0_2] : memref<1x8x8xf32, #tpu.memory_space<vmem>>, vector<1x8x8xf32>
    %4 = vector.shape_cast %3 : vector<1x8x8xf32> to vector<8x8xf32>
    %c0_3 = arith.constant 0 : index
    %c0_4 = arith.constant 0 : index
    %c0_5 = arith.constant 0 : index
    %5 = vector.load %arg4[%c0_3, %c0_4, %c0_5] : memref<1x8x8xf32, #tpu.memory_space<vmem>>, vector<1x8x8xf32>
    %6 = vector.shape_cast %5 : vector<1x8x8xf32> to vector<8x8xf32>
    %c0_6 = arith.constant 0 : index
    %c0_7 = arith.constant 0 : index
    %c0_8 = arith.constant 0 : index
    %7 = vector.load %arg5[%c0_6, %c0_7, %c0_8] : memref<1x8x8xf32, #tpu.memory_space<vmem>>, vector<1x8x8xf32>
    %8 = vector.shape_cast %7 : vector<1x8x8xf32> to vector<8x8xf32>
    %9 = arith.truncf %4 : vector<8x8xf32> to vector<8x8xbf16>
    %10 = arith.truncf %6 : vector<8x8xf32> to vector<8x8xbf16>
    %cst = arith.constant dense<0.000000e+00> : vector<8x8xf32>
    %11 = tpu.matmul %9, %10, %cst {dimension_numbers = #tpu.dot_dimension_numbers<[1], [1], [0], [0], [0, 0, 1, 0], [], []>} : vector<8x8xbf16>, vector<8x8xbf16>, vector<8x8xf32> -> vector<8x8xf32>
    %cst_9 = arith.constant 0.353553385 : f32
    %12 = vector.broadcast %cst_9 : f32 to vector<8x8xf32>
    %13 = arith.mulf %11, %12 : vector<8x8xf32>
    %14 = tpu.iota {dimensions = array<i32: 0>} : vector<8x8xi32>
    %c8_i32 = arith.constant 8 : i32
    %15 = arith.muli %arg1, %c8_i32 : i32
    %16 = vector.broadcast %15 : i32 to vector<8x8xi32>
    %17 = arith.addi %14, %16 : vector<8x8xi32>
    %18 = tpu.iota {dimensions = array<i32: 1>} : vector<8x8xi32>
    %c8_i32_10 = arith.constant 8 : i32
    %19 = arith.muli %arg2, %c8_i32_10 : i32
    %20 = vector.broadcast %19 : i32 to vector<8x8xi32>
    %21 = arith.addi %18, %20 : vector<8x8xi32>
    %22 = arith.cmpi sle, %21, %17 : vector<8x8xi32>
    %cst_11 = arith.constant -1.000000e+30 : f32
    %23 = vector.broadcast %cst_11 : f32 to vector<8x8xf32>
    %24 = arith.select %22, %13, %23 : vector<8x8xi1>, vector<8x8xf32>
    %c0_12 = arith.constant 0 : index
    %c0_13 = arith.constant 0 : index
    %25 = vector.load %arg7[%c0_12, %c0_13] : memref<8x1xf32, #tpu.memory_space<vmem>>, vector<8x1xf32>
    %cst_14 = arith.constant dense<0xFF800000> : vector<8xf32>
    %26 = vector.multi_reduction <maximumf>, %24, %cst_14 [1] : vector<8x8xf32> to vector<8xf32>
    %27 = vector.shape_cast %26 : vector<8xf32> to vector<8x1xf32>
    %28 = arith.maximumf %25, %27 : vector<8x1xf32>
    %29 = arith.subf %25, %28 : vector<8x1xf32>
    %30 = math.exp %29 : vector<8x1xf32>
    %31 = vector.broadcast %28 : vector<8x1xf32> to vector<8x8xf32>
    %32 = arith.subf %24, %31 : vector<8x8xf32>
    %33 = math.exp %32 : vector<8x8xf32>
    %c0_15 = arith.constant 0 : index
    %c0_16 = arith.constant 0 : index
    %34 = vector.load %arg8[%c0_15, %c0_16] : memref<8x1xf32, #tpu.memory_space<vmem>>, vector<8x1xf32>
    %35 = arith.mulf %30, %34 : vector<8x1xf32>
    %cst_17 = arith.constant dense<0.000000e+00> : vector<8xf32>
    %36 = vector.multi_reduction <add>, %33, %cst_17 [1] : vector<8x8xf32> to vector<8xf32>
    %37 = vector.shape_cast %36 : vector<8xf32> to vector<8x1xf32>
    %38 = arith.addf %35, %37 : vector<8x1xf32>
    %c0_18 = arith.constant 0 : index
    %c0_19 = arith.constant 0 : index
    %39 = vector.load %arg8[%c0_18, %c0_19] : memref<8x1xf32, #tpu.memory_space<vmem>>, vector<8x1xf32>
    tpu.vector_store %arg8[%c0_18, %c0_19], %38 {strides = array<i32>} : memref<8x1xf32, #tpu.memory_space<vmem>>, vector<8x1xf32>,
    %c0_20 = arith.constant 0 : index
    %c0_21 = arith.constant 0 : index
    %40 = vector.load %arg9[%c0_20, %c0_21] : memref<8x8xf32, #tpu.memory_space<vmem>>, vector<8x8xf32>
    %41 = vector.broadcast %30 : vector<8x1xf32> to vector<8x8xf32>
    %42 = arith.mulf %41, %40 : vector<8x8xf32>
    %43 = arith.truncf %33 : vector<8x8xf32> to vector<8x8xbf16>
    %44 = arith.truncf %8 : vector<8x8xf32> to vector<8x8xbf16>
    %cst_22 = arith.constant dense<0.000000e+00> : vector<8x8xf32>
    %45 = tpu.matmul %43, %44, %cst_22 {dimension_numbers = #tpu.dot_dimension_numbers<[1], [0], [0], [1], [0, 0, 1, 1], [], []>} : vector<8x8xbf16>, vector<8x8xbf16>, vector<8x8xf32> -> vector<8x8xf32>
    %46 = arith.addf %42, %45 : vector<8x8xf32>
    %c0_23 = arith.constant 0 : index
    %c0_24 = arith.constant 0 : index
    %47 = vector.load %arg9[%c0_23, %c0_24] : memref<8x8xf32, #tpu.memory_space<vmem>>, vector<8x8xf32>
    tpu.vector_store %arg9[%c0_23, %c0_24], %46 {strides = array<i32>} : memref<8x8xf32, #tpu.memory_space<vmem>>, vector<8x8xf32>,
    %c0_25 = arith.constant 0 : index
    %c0_26 = arith.constant 0 : index
    %48 = vector.load %arg7[%c0_25, %c0_26] : memref<8x1xf32, #tpu.memory_space<vmem>>, vector<8x1xf32>
    tpu.vector_store %arg7[%c0_25, %c0_26], %28 {strides = array<i32>} : memref<8x1xf32, #tpu.memory_space<vmem>>, vector<8x1xf32>,
    %c0_i32_27 = arith.constant 0 : i32
    %49 = arith.cmpi eq, %arg2, %c0_i32_27 : i32
    %50 = arith.extui %49 : i1 to i32
    %c0_i32_28 = arith.constant 0 : i32
    %51 = arith.cmpi ne, %50, %c0_i32_28 : i32
    scf.if %51 {
      %c0_29 = arith.constant 0 : index
      %c0_30 = arith.constant 0 : index
      %52 = vector.load %arg9[%c0_29, %c0_30] : memref<8x8xf32, #tpu.memory_space<vmem>>, vector<8x8xf32>
      %c0_31 = arith.constant 0 : index
      %c0_32 = arith.constant 0 : index
      %53 = vector.load %arg8[%c0_31, %c0_32] : memref<8x1xf32, #tpu.memory_space<vmem>>, vector<8x1xf32>
      %54 = tpu.reciprocal %53 {approx = true} : vector<8x1xf32> -> vector<8x1xf32>
      %55 = vector.broadcast %54 : vector<8x1xf32> to vector<8x8xf32>
      %56 = arith.mulf %52, %55 : vector<8x8xf32>
      %c0_33 = arith.constant 0 : index
      %c0_34 = arith.constant 0 : index
      %c0_35 = arith.constant 0 : index
      %57 = vector.load %arg6[%c0_33, %c0_34, %c0_35] : memref<1x8x8xf32, #tpu.memory_space<vmem>>, vector<1x8x8xf32>
      %58 = vector.shape_cast %57 : vector<1x8x8xf32> to vector<8x8xf32>
      %59 = vector.shape_cast %56 : vector<8x8xf32> to vector<1x8x8xf32>
      tpu.vector_store %arg6[%c0_33, %c0_34, %c0_35], %59 {strides = array<i32>} : memref<1x8x8xf32, #tpu.memory_space<vmem>>, vector<1x8x8xf32>,
    } else {
    }
    return
  }
  func.func @transform_0(%arg0: i32, %arg1: i32, %arg2: i32) -> (i32, i32, i32) {
    %c0_i32 = arith.constant 0 : i32
    %c0_i32_0 = arith.constant 0 : i32
    return %arg0, %arg1, %c0_i32 : i32, i32, i32
  }
  func.func @transform_1(%arg0: i32, %arg1: i32, %arg2: i32) -> (i32, i32, i32) {
    %c0_i32 = arith.constant 0 : i32
    %c0_i32_0 = arith.constant 0 : i32
    return %arg0, %arg2, %c0_i32 : i32, i32, i32
  }
  func.func @transform_2(%arg0: i32, %arg1: i32, %arg2: i32) -> (i32, i32, i32) {
    %c0_i32 = arith.constant 0 : i32
    %c0_i32_0 = arith.constant 0 : i32
    return %arg0, %arg2, %c0_i32 : i32, i32, i32
  }
  func.func @transform_3(%arg0: i32, %arg1: i32, %arg2: i32) -> (i32, i32, i32) {
    %c0_i32 = arith.constant 0 : i32
    %c0_i32_0 = arith.constant 0 : i32
    return %arg0, %arg1, %c0_i32 : i32, i32, i32
  }
}

module attributes {stable_mosaic.version = 11 : i64} {
  func.func @_linear_kernel(%arg0: i32, %arg1: i32, %arg2: i32, %arg3: memref<16x32xf32, #tpu.memory_space<vmem>>, %arg4: memref<32x32xf32, #tpu.memory_space<vmem>>, %arg5: memref<1x32xf32, #tpu.memory_space<vmem>>, %arg6: memref<16x32xf32, #tpu.memory_space<vmem>>, %arg7: memref<16x32xf32, #tpu.memory_space<vmem>>, %arg8: memref<16x32xf32, #tpu.memory_space<vmem>>) attributes {dimension_semantics = [#tpu.dimension_semantics<parallel>, #tpu.dimension_semantics<parallel>, #tpu.dimension_semantics<arbitrary>], iteration_bounds = array<i64: 1, 1, 1>, scalar_prefetch = 0 : i64, scratch_operands = 1 : i64, tpu.core_type = #tpu.core_type<tc>, window_params = [{transform_indices = @transform_0, window_bounds = array<i64: 16, 32>}, {transform_indices = @transform_1, window_bounds = array<i64: 32, 32>}, {transform_indices = @transform_2, window_bounds = array<i64: 1, 32>}, {transform_indices = @transform_3, window_bounds = array<i64: 16, 32>}, {transform_indices = @transform_4, window_bounds = array<i64: 16, 32>}]} {
    %c0_i32 = arith.constant 0 : i32
    %0 = arith.cmpi eq, %arg2, %c0_i32 : i32
    %1 = arith.extui %0 : i1 to i32
    %c0_i32_0 = arith.constant 0 : i32
    %2 = arith.cmpi ne, %1, %c0_i32_0 : i32
    scf.if %2 {
      %cst_10 = arith.constant 0.000000e+00 : f32
      %14 = vector.broadcast %cst_10 : f32 to vector<16x32xf32>
      %c0_11 = arith.constant 0 : index
      %c0_12 = arith.constant 0 : index
      %15 = vector.load %arg8[%c0_11, %c0_12] : memref<16x32xf32, #tpu.memory_space<vmem>>, vector<16x32xf32>
      tpu.vector_store %arg8[%c0_11, %c0_12], %14 {strides = array<i32>} : memref<16x32xf32, #tpu.memory_space<vmem>>, vector<16x32xf32>,
    } else {
    }
    %c0 = arith.constant 0 : index
    %c0_1 = arith.constant 0 : index
    %3 = vector.load %arg8[%c0, %c0_1] : memref<16x32xf32, #tpu.memory_space<vmem>>, vector<16x32xf32>
    %c0_2 = arith.constant 0 : index
    %c0_3 = arith.constant 0 : index
    %4 = vector.load %arg3[%c0_2, %c0_3] : memref<16x32xf32, #tpu.memory_space<vmem>>, vector<16x32xf32>
    %5 = arith.truncf %4 : vector<16x32xf32> to vector<16x32xbf16>
    %c0_4 = arith.constant 0 : index
    %c0_5 = arith.constant 0 : index
    %6 = vector.load %arg4[%c0_4, %c0_5] : memref<32x32xf32, #tpu.memory_space<vmem>>, vector<32x32xf32>
    %7 = arith.truncf %6 : vector<32x32xf32> to vector<32x32xbf16>
    %cst = arith.constant dense<0.000000e+00> : vector<16x32xf32>
    %8 = tpu.matmul %5, %7, %cst {dimension_numbers = #tpu.dot_dimension_numbers<[1], [0], [0], [1], [0, 0, 1, 1], [], []>} : vector<16x32xbf16>, vector<32x32xbf16>, vector<16x32xf32> -> vector<16x32xf32>
    %9 = arith.addf %3, %8 : vector<16x32xf32>
    %c0_6 = arith.constant 0 : index
    %c0_7 = arith.constant 0 : index
    %10 = vector.load %arg8[%c0_6, %c0_7] : memref<16x32xf32, #tpu.memory_space<vmem>>, vector<16x32xf32>
    tpu.vector_store %arg8[%c0_6, %c0_7], %9 {strides = array<i32>} : memref<16x32xf32, #tpu.memory_space<vmem>>, vector<16x32xf32>,
    %c0_i32_8 = arith.constant 0 : i32
    %11 = arith.cmpi eq, %arg2, %c0_i32_8 : i32
    %12 = arith.extui %11 : i1 to i32
    %c0_i32_9 = arith.constant 0 : i32
    %13 = arith.cmpi ne, %12, %c0_i32_9 : i32
    scf.if %13 {
      %c0_10 = arith.constant 0 : index
      %c0_11 = arith.constant 0 : index
      %14 = vector.load %arg8[%c0_10, %c0_11] : memref<16x32xf32, #tpu.memory_space<vmem>>, vector<16x32xf32>
      %c0_12 = arith.constant 0 : index
      %c0_13 = arith.constant 0 : index
      %15 = vector.load %arg5[%c0_12, %c0_13] : memref<1x32xf32, #tpu.memory_space<vmem>>, vector<1x32xf32>
      %16 = vector.broadcast %15 : vector<1x32xf32> to vector<16x32xf32>
      %17 = arith.addf %14, %16 : vector<16x32xf32>
      %c0_14 = arith.constant 0 : index
      %c0_15 = arith.constant 0 : index
      %18 = vector.load %arg6[%c0_14, %c0_15] : memref<16x32xf32, #tpu.memory_space<vmem>>, vector<16x32xf32>
      %19 = arith.addf %17, %18 : vector<16x32xf32>
      %c0_16 = arith.constant 0 : index
      %c0_17 = arith.constant 0 : index
      %20 = vector.load %arg7[%c0_16, %c0_17] : memref<16x32xf32, #tpu.memory_space<vmem>>, vector<16x32xf32>
      tpu.vector_store %arg7[%c0_16, %c0_17], %19 {strides = array<i32>} : memref<16x32xf32, #tpu.memory_space<vmem>>, vector<16x32xf32>,
    } else {
    }
    return
  }
  func.func @transform_0(%arg0: i32, %arg1: i32, %arg2: i32) -> (i32, i32) {
    %c0_i32 = arith.constant 0 : i32
    return %arg0, %arg2 : i32, i32
  }
  func.func @transform_1(%arg0: i32, %arg1: i32, %arg2: i32) -> (i32, i32) {
    %c0_i32 = arith.constant 0 : i32
    return %arg2, %arg1 : i32, i32
  }
  func.func @transform_2(%arg0: i32, %arg1: i32, %arg2: i32) -> (i32, i32) {
    %c0_i32 = arith.constant 0 : i32
    %c0_i32_0 = arith.constant 0 : i32
    return %c0_i32, %arg1 : i32, i32
  }
  func.func @transform_3(%arg0: i32, %arg1: i32, %arg2: i32) -> (i32, i32) {
    %c0_i32 = arith.constant 0 : i32
    return %arg0, %arg1 : i32, i32
  }
  func.func @transform_4(%arg0: i32, %arg1: i32, %arg2: i32) -> (i32, i32) {
    %c0_i32 = arith.constant 0 : i32
    return %arg0, %arg1 : i32, i32
  }
}

module attributes {stable_mosaic.version = 11 : i64} {
  func.func @_linear_kernel(%arg0: i32, %arg1: i32, %arg2: i32, %arg3: memref<16x32xf32, #tpu.memory_space<vmem>>, %arg4: memref<32x32xf32, #tpu.memory_space<vmem>>, %arg5: memref<1x32xf32, #tpu.memory_space<vmem>>, %arg6: memref<16x32xf32, #tpu.memory_space<vmem>>, %arg7: memref<16x32xf32, #tpu.memory_space<vmem>>) attributes {dimension_semantics = [#tpu.dimension_semantics<parallel>, #tpu.dimension_semantics<parallel>, #tpu.dimension_semantics<arbitrary>], iteration_bounds = array<i64: 1, 1, 1>, scalar_prefetch = 0 : i64, scratch_operands = 1 : i64, tpu.core_type = #tpu.core_type<tc>, window_params = [{transform_indices = @transform_0, window_bounds = array<i64: 16, 32>}, {transform_indices = @transform_1, window_bounds = array<i64: 32, 32>}, {transform_indices = @transform_2, window_bounds = array<i64: 1, 32>}, {transform_indices = @transform_3, window_bounds = array<i64: 16, 32>}]} {
    %c0_i32 = arith.constant 0 : i32
    %0 = arith.cmpi eq, %arg2, %c0_i32 : i32
    %1 = arith.extui %0 : i1 to i32
    %c0_i32_0 = arith.constant 0 : i32
    %2 = arith.cmpi ne, %1, %c0_i32_0 : i32
    scf.if %2 {
      %cst_10 = arith.constant 0.000000e+00 : f32
      %14 = vector.broadcast %cst_10 : f32 to vector<16x32xf32>
      %c0_11 = arith.constant 0 : index
      %c0_12 = arith.constant 0 : index
      %15 = vector.load %arg7[%c0_11, %c0_12] : memref<16x32xf32, #tpu.memory_space<vmem>>, vector<16x32xf32>
      tpu.vector_store %arg7[%c0_11, %c0_12], %14 {strides = array<i32>} : memref<16x32xf32, #tpu.memory_space<vmem>>, vector<16x32xf32>,
    } else {
    }
    %c0 = arith.constant 0 : index
    %c0_1 = arith.constant 0 : index
    %3 = vector.load %arg7[%c0, %c0_1] : memref<16x32xf32, #tpu.memory_space<vmem>>, vector<16x32xf32>
    %c0_2 = arith.constant 0 : index
    %c0_3 = arith.constant 0 : index
    %4 = vector.load %arg3[%c0_2, %c0_3] : memref<16x32xf32, #tpu.memory_space<vmem>>, vector<16x32xf32>
    %5 = arith.truncf %4 : vector<16x32xf32> to vector<16x32xbf16>
    %c0_4 = arith.constant 0 : index
    %c0_5 = arith.constant 0 : index
    %6 = vector.load %arg4[%c0_4, %c0_5] : memref<32x32xf32, #tpu.memory_space<vmem>>, vector<32x32xf32>
    %7 = arith.truncf %6 : vector<32x32xf32> to vector<32x32xbf16>
    %cst = arith.constant dense<0.000000e+00> : vector<16x32xf32>
    %8 = tpu.matmul %5, %7, %cst {dimension_numbers = #tpu.dot_dimension_numbers<[1], [0], [0], [1], [0, 0, 1, 1], [], []>} : vector<16x32xbf16>, vector<32x32xbf16>, vector<16x32xf32> -> vector<16x32xf32>
    %9 = arith.addf %3, %8 : vector<16x32xf32>
    %c0_6 = arith.constant 0 : index
    %c0_7 = arith.constant 0 : index
    %10 = vector.load %arg7[%c0_6, %c0_7] : memref<16x32xf32, #tpu.memory_space<vmem>>, vector<16x32xf32>
    tpu.vector_store %arg7[%c0_6, %c0_7], %9 {strides = array<i32>} : memref<16x32xf32, #tpu.memory_space<vmem>>, vector<16x32xf32>,
    %c0_i32_8 = arith.constant 0 : i32
    %11 = arith.cmpi eq, %arg2, %c0_i32_8 : i32
    %12 = arith.extui %11 : i1 to i32
    %c0_i32_9 = arith.constant 0 : i32
    %13 = arith.cmpi ne, %12, %c0_i32_9 : i32
    scf.if %13 {
      %c0_10 = arith.constant 0 : index
      %c0_11 = arith.constant 0 : index
      %14 = vector.load %arg7[%c0_10, %c0_11] : memref<16x32xf32, #tpu.memory_space<vmem>>, vector<16x32xf32>
      %c0_12 = arith.constant 0 : index
      %c0_13 = arith.constant 0 : index
      %15 = vector.load %arg5[%c0_12, %c0_13] : memref<1x32xf32, #tpu.memory_space<vmem>>, vector<1x32xf32>
      %16 = vector.broadcast %15 : vector<1x32xf32> to vector<16x32xf32>
      %17 = arith.addf %14, %16 : vector<16x32xf32>
      %c0_14 = arith.constant 0 : index
      %c0_15 = arith.constant 0 : index
      %18 = vector.load %arg6[%c0_14, %c0_15] : memref<16x32xf32, #tpu.memory_space<vmem>>, vector<16x32xf32>
      tpu.vector_store %arg6[%c0_14, %c0_15], %17 {strides = array<i32>} : memref<16x32xf32, #tpu.memory_space<vmem>>, vector<16x32xf32>,
    } else {
    }
    return
  }
  func.func @transform_0(%arg0: i32, %arg1: i32, %arg2: i32) -> (i32, i32) {
    %c0_i32 = arith.constant 0 : i32
    return %arg0, %arg2 : i32, i32
  }
  func.func @transform_1(%arg0: i32, %arg1: i32, %arg2: i32) -> (i32, i32) {
    %c0_i32 = arith.constant 0 : i32
    return %arg2, %arg1 : i32, i32
  }
  func.func @transform_2(%arg0: i32, %arg1: i32, %arg2: i32) -> (i32, i32) {
    %c0_i32 = arith.constant 0 : i32
    %c0_i32_0 = arith.constant 0 : i32
    return %c0_i32, %arg1 : i32, i32
  }
  func.func @transform_3(%arg0: i32, %arg1: i32, %arg2: i32) -> (i32, i32) {
    %c0_i32 = arith.constant 0 : i32
    return %arg0, %arg1 : i32, i32
  }
}

module attributes {stable_mosaic.version = 11 : i64} {
  func.func @_linear_kernel(%arg0: i32, %arg1: i32, %arg2: i32, %arg3: memref<64x48xf32, #tpu.memory_space<vmem>>, %arg4: memref<48x32xf32, #tpu.memory_space<vmem>>, %arg5: memref<1x32xf32, #tpu.memory_space<vmem>>, %arg6: memref<64x32xf32, #tpu.memory_space<vmem>>, %arg7: memref<64x32xf32, #tpu.memory_space<vmem>>) attributes {dimension_semantics = [#tpu.dimension_semantics<parallel>, #tpu.dimension_semantics<parallel>, #tpu.dimension_semantics<arbitrary>], iteration_bounds = array<i64: 1, 1, 1>, scalar_prefetch = 0 : i64, scratch_operands = 1 : i64, tpu.core_type = #tpu.core_type<tc>, window_params = [{transform_indices = @transform_0, window_bounds = array<i64: 64, 48>}, {transform_indices = @transform_1, window_bounds = array<i64: 48, 32>}, {transform_indices = @transform_2, window_bounds = array<i64: 1, 32>}, {transform_indices = @transform_3, window_bounds = array<i64: 64, 32>}]} {
    %c0_i32 = arith.constant 0 : i32
    %0 = arith.cmpi eq, %arg2, %c0_i32 : i32
    %1 = arith.extui %0 : i1 to i32
    %c0_i32_0 = arith.constant 0 : i32
    %2 = arith.cmpi ne, %1, %c0_i32_0 : i32
    scf.if %2 {
      %cst_10 = arith.constant 0.000000e+00 : f32
      %14 = vector.broadcast %cst_10 : f32 to vector<64x32xf32>
      %c0_11 = arith.constant 0 : index
      %c0_12 = arith.constant 0 : index
      %15 = vector.load %arg7[%c0_11, %c0_12] : memref<64x32xf32, #tpu.memory_space<vmem>>, vector<64x32xf32>
      tpu.vector_store %arg7[%c0_11, %c0_12], %14 {strides = array<i32>} : memref<64x32xf32, #tpu.memory_space<vmem>>, vector<64x32xf32>,
    } else {
    }
    %c0 = arith.constant 0 : index
    %c0_1 = arith.constant 0 : index
    %3 = vector.load %arg7[%c0, %c0_1] : memref<64x32xf32, #tpu.memory_space<vmem>>, vector<64x32xf32>
    %c0_2 = arith.constant 0 : index
    %c0_3 = arith.constant 0 : index
    %4 = vector.load %arg3[%c0_2, %c0_3] : memref<64x48xf32, #tpu.memory_space<vmem>>, vector<64x48xf32>
    %5 = arith.truncf %4 : vector<64x48xf32> to vector<64x48xbf16>
    %c0_4 = arith.constant 0 : index
    %c0_5 = arith.constant 0 : index
    %6 = vector.load %arg4[%c0_4, %c0_5] : memref<48x32xf32, #tpu.memory_space<vmem>>, vector<48x32xf32>
    %7 = arith.truncf %6 : vector<48x32xf32> to vector<48x32xbf16>
    %cst = arith.constant dense<0.000000e+00> : vector<64x32xf32>
    %8 = tpu.matmul %5, %7, %cst {dimension_numbers = #tpu.dot_dimension_numbers<[1], [0], [0], [1], [0, 0, 1, 1], [], []>} : vector<64x48xbf16>, vector<48x32xbf16>, vector<64x32xf32> -> vector<64x32xf32>
    %9 = arith.addf %3, %8 : vector<64x32xf32>
    %c0_6 = arith.constant 0 : index
    %c0_7 = arith.constant 0 : index
    %10 = vector.load %arg7[%c0_6, %c0_7] : memref<64x32xf32, #tpu.memory_space<vmem>>, vector<64x32xf32>
    tpu.vector_store %arg7[%c0_6, %c0_7], %9 {strides = array<i32>} : memref<64x32xf32, #tpu.memory_space<vmem>>, vector<64x32xf32>,
    %c0_i32_8 = arith.constant 0 : i32
    %11 = arith.cmpi eq, %arg2, %c0_i32_8 : i32
    %12 = arith.extui %11 : i1 to i32
    %c0_i32_9 = arith.constant 0 : i32
    %13 = arith.cmpi ne, %12, %c0_i32_9 : i32
    scf.if %13 {
      %c0_10 = arith.constant 0 : index
      %c0_11 = arith.constant 0 : index
      %14 = vector.load %arg7[%c0_10, %c0_11] : memref<64x32xf32, #tpu.memory_space<vmem>>, vector<64x32xf32>
      %c0_12 = arith.constant 0 : index
      %c0_13 = arith.constant 0 : index
      %15 = vector.load %arg5[%c0_12, %c0_13] : memref<1x32xf32, #tpu.memory_space<vmem>>, vector<1x32xf32>
      %16 = vector.broadcast %15 : vector<1x32xf32> to vector<64x32xf32>
      %17 = arith.addf %14, %16 : vector<64x32xf32>
      %cst_14 = arith.constant 5.000000e-01 : f32
      %18 = vector.broadcast %cst_14 : f32 to vector<64x32xf32>
      %19 = arith.mulf %18, %17 : vector<64x32xf32>
      %cst_15 = arith.constant 4.471500e-02 : f32
      %20 = vector.broadcast %cst_15 : f32 to vector<64x32xf32>
      %21 = arith.mulf %20, %17 : vector<64x32xf32>
      %22 = arith.mulf %21, %17 : vector<64x32xf32>
      %23 = arith.mulf %22, %17 : vector<64x32xf32>
      %24 = arith.addf %17, %23 : vector<64x32xf32>
      %cst_16 = arith.constant 0.797884583 : f32
      %25 = vector.broadcast %cst_16 : f32 to vector<64x32xf32>
      %26 = arith.mulf %25, %24 : vector<64x32xf32>
      %27 = math.tanh %26 : vector<64x32xf32>
      %cst_17 = arith.constant 1.000000e+00 : f32
      %28 = vector.broadcast %cst_17 : f32 to vector<64x32xf32>
      %29 = arith.addf %28, %27 : vector<64x32xf32>
      %30 = arith.mulf %19, %29 : vector<64x32xf32>
      %c0_18 = arith.constant 0 : index
      %c0_19 = arith.constant 0 : index
      %31 = vector.load %arg6[%c0_18, %c0_19] : memref<64x32xf32, #tpu.memory_space<vmem>>, vector<64x32xf32>
      tpu.vector_store %arg6[%c0_18, %c0_19], %30 {strides = array<i32>} : memref<64x32xf32, #tpu.memory_space<vmem>>, vector<64x32xf32>,
    } else {
    }
    return
  }
  func.func @transform_0(%arg0: i32, %arg1: i32, %arg2: i32) -> (i32, i32) {
    %c0_i32 = arith.constant 0 : i32
    return %arg0, %arg2 : i32, i32
  }
  func.func @transform_1(%arg0: i32, %arg1: i32, %arg2: i32) -> (i32, i32) {
    %c0_i32 = arith.constant 0 : i32
    return %arg2, %arg1 : i32, i32
  }
  func.func @transform_2(%arg0: i32, %arg1: i32, %arg2: i32) -> (i32, i32) {
    %c0_i32 = arith.constant 0 : i32
    %c0_i32_0 = arith.constant 0 : i32
    return %c0_i32, %arg1 : i32, i32
  }
  func.func @transform_3(%arg0: i32, %arg1: i32, %arg2: i32) -> (i32, i32) {
    %c0_i32 = arith.constant 0 : i32
    return %arg0, %arg1 : i32, i32
  }
}

module attributes {stable_mosaic.version = 11 : i64} {
  func.func @_linear_kernel(%arg0: i32, %arg1: i32, %arg2: i32, %arg3: memref<32x96xf32, #tpu.memory_space<vmem>>, %arg4: memref<96x32xf32, #tpu.memory_space<vmem>>, %arg5: memref<1x32xf32, #tpu.memory_space<vmem>>, %arg6: memref<32x32xf32, #tpu.memory_space<vmem>>, %arg7: memref<32x32xf32, #tpu.memory_space<vmem>>) attributes {dimension_semantics = [#tpu.dimension_semantics<parallel>, #tpu.dimension_semantics<parallel>, #tpu.dimension_semantics<arbitrary>], iteration_bounds = array<i64: 1, 1, 1>, scalar_prefetch = 0 : i64, scratch_operands = 1 : i64, tpu.core_type = #tpu.core_type<tc>, window_params = [{transform_indices = @transform_0, window_bounds = array<i64: 32, 96>}, {transform_indices = @transform_1, window_bounds = array<i64: 96, 32>}, {transform_indices = @transform_2, window_bounds = array<i64: 1, 32>}, {transform_indices = @transform_3, window_bounds = array<i64: 32, 32>}]} {
    %c0_i32 = arith.constant 0 : i32
    %0 = arith.cmpi eq, %arg2, %c0_i32 : i32
    %1 = arith.extui %0 : i1 to i32
    %c0_i32_0 = arith.constant 0 : i32
    %2 = arith.cmpi ne, %1, %c0_i32_0 : i32
    scf.if %2 {
      %cst_10 = arith.constant 0.000000e+00 : f32
      %14 = vector.broadcast %cst_10 : f32 to vector<32x32xf32>
      %c0_11 = arith.constant 0 : index
      %c0_12 = arith.constant 0 : index
      %15 = vector.load %arg7[%c0_11, %c0_12] : memref<32x32xf32, #tpu.memory_space<vmem>>, vector<32x32xf32>
      tpu.vector_store %arg7[%c0_11, %c0_12], %14 {strides = array<i32>} : memref<32x32xf32, #tpu.memory_space<vmem>>, vector<32x32xf32>,
    } else {
    }
    %c0 = arith.constant 0 : index
    %c0_1 = arith.constant 0 : index
    %3 = vector.load %arg7[%c0, %c0_1] : memref<32x32xf32, #tpu.memory_space<vmem>>, vector<32x32xf32>
    %c0_2 = arith.constant 0 : index
    %c0_3 = arith.constant 0 : index
    %4 = vector.load %arg3[%c0_2, %c0_3] : memref<32x96xf32, #tpu.memory_space<vmem>>, vector<32x96xf32>
    %5 = arith.truncf %4 : vector<32x96xf32> to vector<32x96xbf16>
    %c0_4 = arith.constant 0 : index
    %c0_5 = arith.constant 0 : index
    %6 = vector.load %arg4[%c0_4, %c0_5] : memref<96x32xf32, #tpu.memory_space<vmem>>, vector<96x32xf32>
    %7 = arith.truncf %6 : vector<96x32xf32> to vector<96x32xbf16>
    %cst = arith.constant dense<0.000000e+00> : vector<32x32xf32>
    %8 = tpu.matmul %5, %7, %cst {dimension_numbers = #tpu.dot_dimension_numbers<[1], [0], [0], [1], [0, 0, 1, 1], [], []>} : vector<32x96xbf16>, vector<96x32xbf16>, vector<32x32xf32> -> vector<32x32xf32>
    %9 = arith.addf %3, %8 : vector<32x32xf32>
    %c0_6 = arith.constant 0 : index
    %c0_7 = arith.constant 0 : index
    %10 = vector.load %arg7[%c0_6, %c0_7] : memref<32x32xf32, #tpu.memory_space<vmem>>, vector<32x32xf32>
    tpu.vector_store %arg7[%c0_6, %c0_7], %9 {strides = array<i32>} : memref<32x32xf32, #tpu.memory_space<vmem>>, vector<32x32xf32>,
    %c0_i32_8 = arith.constant 0 : i32
    %11 = arith.cmpi eq, %arg2, %c0_i32_8 : i32
    %12 = arith.extui %11 : i1 to i32
    %c0_i32_9 = arith.constant 0 : i32
    %13 = arith.cmpi ne, %12, %c0_i32_9 : i32
    scf.if %13 {
      %c0_10 = arith.constant 0 : index
      %c0_11 = arith.constant 0 : index
      %14 = vector.load %arg7[%c0_10, %c0_11] : memref<32x32xf32, #tpu.memory_space<vmem>>, vector<32x32xf32>
      %c0_12 = arith.constant 0 : index
      %c0_13 = arith.constant 0 : index
      %15 = vector.load %arg5[%c0_12, %c0_13] : memref<1x32xf32, #tpu.memory_space<vmem>>, vector<1x32xf32>
      %16 = vector.broadcast %15 : vector<1x32xf32> to vector<32x32xf32>
      %17 = arith.addf %14, %16 : vector<32x32xf32>
      %cst_14 = arith.constant 5.000000e-01 : f32
      %18 = vector.broadcast %cst_14 : f32 to vector<32x32xf32>
      %19 = arith.mulf %18, %17 : vector<32x32xf32>
      %cst_15 = arith.constant 4.471500e-02 : f32
      %20 = vector.broadcast %cst_15 : f32 to vector<32x32xf32>
      %21 = arith.mulf %20, %17 : vector<32x32xf32>
      %22 = arith.mulf %21, %17 : vector<32x32xf32>
      %23 = arith.mulf %22, %17 : vector<32x32xf32>
      %24 = arith.addf %17, %23 : vector<32x32xf32>
      %cst_16 = arith.constant 0.797884583 : f32
      %25 = vector.broadcast %cst_16 : f32 to vector<32x32xf32>
      %26 = arith.mulf %25, %24 : vector<32x32xf32>
      %27 = math.tanh %26 : vector<32x32xf32>
      %cst_17 = arith.constant 1.000000e+00 : f32
      %28 = vector.broadcast %cst_17 : f32 to vector<32x32xf32>
      %29 = arith.addf %28, %27 : vector<32x32xf32>
      %30 = arith.mulf %19, %29 : vector<32x32xf32>
      %c0_18 = arith.constant 0 : index
      %c0_19 = arith.constant 0 : index
      %31 = vector.load %arg6[%c0_18, %c0_19] : memref<32x32xf32, #tpu.memory_space<vmem>>, vector<32x32xf32>
      tpu.vector_store %arg6[%c0_18, %c0_19], %30 {strides = array<i32>} : memref<32x32xf32, #tpu.memory_space<vmem>>, vector<32x32xf32>,
    } else {
    }
    return
  }
  func.func @transform_0(%arg0: i32, %arg1: i32, %arg2: i32) -> (i32, i32) {
    %c0_i32 = arith.constant 0 : i32
    return %arg0, %arg2 : i32, i32
  }
  func.func @transform_1(%arg0: i32, %arg1: i32, %arg2: i32) -> (i32, i32) {
    %c0_i32 = arith.constant 0 : i32
    return %arg2, %arg1 : i32, i32
  }
  func.func @transform_2(%arg0: i32, %arg1: i32, %arg2: i32) -> (i32, i32) {
    %c0_i32 = arith.constant 0 : i32
    %c0_i32_0 = arith.constant 0 : i32
    return %c0_i32, %arg1 : i32, i32
  }
  func.func @transform_3(%arg0: i32, %arg1: i32, %arg2: i32) -> (i32, i32) {
    %c0_i32 = arith.constant 0 : i32
    return %arg0, %arg1 : i32, i32
  }
}

module attributes {stable_mosaic.version = 11 : i64} {
  func.func @_layernorm_kernel(%arg0: i32, %arg1: memref<32x32xf32, #tpu.memory_space<vmem>>, %arg2: memref<1x32xf32, #tpu.memory_space<vmem>>, %arg3: memref<1x32xf32, #tpu.memory_space<vmem>>, %arg4: memref<32x32xf32, #tpu.memory_space<vmem>>) attributes {dimension_semantics = [#tpu.dimension_semantics<parallel>], iteration_bounds = array<i64: 1>, scalar_prefetch = 0 : i64, scratch_operands = 0 : i64, tpu.core_type = #tpu.core_type<tc>, window_params = [{transform_indices = @transform_0, window_bounds = array<i64: 32, 32>}, {pipeline_mode = #tpu.pipeline_mode<synchronous>, transform_indices = @transform_1, window_bounds = array<i64: 1, 32>}, {pipeline_mode = #tpu.pipeline_mode<synchronous>, transform_indices = @transform_2, window_bounds = array<i64: 1, 32>}, {transform_indices = @transform_3, window_bounds = array<i64: 32, 32>}]} {
    %c0 = arith.constant 0 : index
    %c0_0 = arith.constant 0 : index
    %0 = vector.load %arg1[%c0, %c0_0] : memref<32x32xf32, #tpu.memory_space<vmem>>, vector<32x32xf32>
    %cst = arith.constant dense<0.000000e+00> : vector<32xf32>
    %1 = vector.multi_reduction <add>, %0, %cst [1] : vector<32x32xf32> to vector<32xf32>
    %2 = vector.shape_cast %1 : vector<32xf32> to vector<32x1xf32>
    %cst_1 = arith.constant 3.200000e+01 : f32
    %3 = vector.broadcast %cst_1 : f32 to vector<32x1xf32>
    %4 = arith.divf %2, %3 : vector<32x1xf32>
    %5 = vector.broadcast %4 : vector<32x1xf32> to vector<32x32xf32>
    %6 = arith.subf %0, %5 : vector<32x32xf32>
    %7 = arith.mulf %6, %6 : vector<32x32xf32>
    %cst_2 = arith.constant dense<0.000000e+00> : vector<32xf32>
    %8 = vector.multi_reduction <add>, %7, %cst_2 [1] : vector<32x32xf32> to vector<32xf32>
    %9 = vector.shape_cast %8 : vector<32xf32> to vector<32x1xf32>
    %cst_3 = arith.constant 3.200000e+01 : f32
    %10 = vector.broadcast %cst_3 : f32 to vector<32x1xf32>
    %11 = arith.divf %9, %10 : vector<32x1xf32>
    %12 = vector.broadcast %4 : vector<32x1xf32> to vector<32x32xf32>
    %13 = arith.subf %0, %12 : vector<32x32xf32>
    %cst_4 = arith.constant 9.99999974E-6 : f32
    %14 = vector.broadcast %cst_4 : f32 to vector<32x1xf32>
    %15 = arith.addf %11, %14 : vector<32x1xf32>
    %16 = math.rsqrt %15 : vector<32x1xf32>
    %17 = vector.broadcast %16 : vector<32x1xf32> to vector<32x32xf32>
    %18 = arith.mulf %13, %17 : vector<32x32xf32>
    %c0_5 = arith.constant 0 : index
    %c0_6 = arith.constant 0 : index
    %19 = vector.load %arg2[%c0_5, %c0_6] : memref<1x32xf32, #tpu.memory_space<vmem>>, vector<1x32xf32>
    %20 = vector.broadcast %19 : vector<1x32xf32> to vector<32x32xf32>
    %21 = arith.mulf %18, %20 : vector<32x32xf32>
    %c0_7 = arith.constant 0 : index
    %c0_8 = arith.constant 0 : index
    %22 = vector.load %arg3[%c0_7, %c0_8] : memref<1x32xf32, #tpu.memory_space<vmem>>, vector<1x32xf32>
    %23 = vector.broadcast %22 : vector<1x32xf32> to vector<32x32xf32>
    %24 = arith.addf %21, %23 : vector<32x32xf32>
    %c0_9 = arith.constant 0 : index
    %c0_10 = arith.constant 0 : index
    %25 = vector.load %arg4[%c0_9, %c0_10] : memref<32x32xf32, #tpu.memory_space<vmem>>, vector<32x32xf32>
    tpu.vector_store %arg4[%c0_9, %c0_10], %24 {strides = array<i32>} : memref<32x32xf32, #tpu.memory_space<vmem>>, vector<32x32xf32>,
    return
  }
  func.func @transform_0(%arg0: i32) -> (i32, i32) {
    %c0_i32 = arith.constant 0 : i32
    %c0_i32_0 = arith.constant 0 : i32
    return %arg0, %c0_i32 : i32, i32
  }
  func.func @transform_1(%arg0: i32) -> (i32, i32) {
    %c0_i32 = arith.constant 0 : i32
    %c0_i32_0 = arith.constant 0 : i32
    %c0_i32_1 = arith.constant 0 : i32
    return %c0_i32, %c0_i32_0 : i32, i32
  }
  func.func @transform_2(%arg0: i32) -> (i32, i32) {
    %c0_i32 = arith.constant 0 : i32
    %c0_i32_0 = arith.constant 0 : i32
    %c0_i32_1 = arith.constant 0 : i32
    return %c0_i32, %c0_i32_0 : i32, i32
  }
  func.func @transform_3(%arg0: i32) -> (i32, i32) {
    %c0_i32 = arith.constant 0 : i32
    %c0_i32_0 = arith.constant 0 : i32
    return %arg0, %c0_i32 : i32, i32
  }
}

module attributes {stable_mosaic.version = 11 : i64} {
  func.func @_linear_kernel(%arg0: i32, %arg1: i32, %arg2: i32, %arg3: memref<32x32xf32, #tpu.memory_space<vmem>>, %arg4: memref<32x96xf32, #tpu.memory_space<vmem>>, %arg5: memref<1x96xf32, #tpu.memory_space<vmem>>, %arg6: memref<32x96xf32, #tpu.memory_space<vmem>>, %arg7: memref<32x96xf32, #tpu.memory_space<vmem>>) attributes {dimension_semantics = [#tpu.dimension_semantics<parallel>, #tpu.dimension_semantics<parallel>, #tpu.dimension_semantics<arbitrary>], iteration_bounds = array<i64: 1, 1, 1>, scalar_prefetch = 0 : i64, scratch_operands = 1 : i64, tpu.core_type = #tpu.core_type<tc>, window_params = [{transform_indices = @transform_0, window_bounds = array<i64: 32, 32>}, {transform_indices = @transform_1, window_bounds = array<i64: 32, 96>}, {transform_indices = @transform_2, window_bounds = array<i64: 1, 96>}, {transform_indices = @transform_3, window_bounds = array<i64: 32, 96>}]} {
    %c0_i32 = arith.constant 0 : i32
    %0 = arith.cmpi eq, %arg2, %c0_i32 : i32
    %1 = arith.extui %0 : i1 to i32
    %c0_i32_0 = arith.constant 0 : i32
    %2 = arith.cmpi ne, %1, %c0_i32_0 : i32
    scf.if %2 {
      %cst_10 = arith.constant 0.000000e+00 : f32
      %14 = vector.broadcast %cst_10 : f32 to vector<32x96xf32>
      %c0_11 = arith.constant 0 : index
      %c0_12 = arith.constant 0 : index
      %15 = vector.load %arg7[%c0_11, %c0_12] : memref<32x96xf32, #tpu.memory_space<vmem>>, vector<32x96xf32>
      tpu.vector_store %arg7[%c0_11, %c0_12], %14 {strides = array<i32>} : memref<32x96xf32, #tpu.memory_space<vmem>>, vector<32x96xf32>,
    } else {
    }
    %c0 = arith.constant 0 : index
    %c0_1 = arith.constant 0 : index
    %3 = vector.load %arg7[%c0, %c0_1] : memref<32x96xf32, #tpu.memory_space<vmem>>, vector<32x96xf32>
    %c0_2 = arith.constant 0 : index
    %c0_3 = arith.constant 0 : index
    %4 = vector.load %arg3[%c0_2, %c0_3] : memref<32x32xf32, #tpu.memory_space<vmem>>, vector<32x32xf32>
    %5 = arith.truncf %4 : vector<32x32xf32> to vector<32x32xbf16>
    %c0_4 = arith.constant 0 : index
    %c0_5 = arith.constant 0 : index
    %6 = vector.load %arg4[%c0_4, %c0_5] : memref<32x96xf32, #tpu.memory_space<vmem>>, vector<32x96xf32>
    %7 = arith.truncf %6 : vector<32x96xf32> to vector<32x96xbf16>
    %cst = arith.constant dense<0.000000e+00> : vector<32x96xf32>
    %8 = tpu.matmul %5, %7, %cst {dimension_numbers = #tpu.dot_dimension_numbers<[1], [0], [0], [1], [0, 0, 1, 1], [], []>} : vector<32x32xbf16>, vector<32x96xbf16>, vector<32x96xf32> -> vector<32x96xf32>
    %9 = arith.addf %3, %8 : vector<32x96xf32>
    %c0_6 = arith.constant 0 : index
    %c0_7 = arith.constant 0 : index
    %10 = vector.load %arg7[%c0_6, %c0_7] : memref<32x96xf32, #tpu.memory_space<vmem>>, vector<32x96xf32>
    tpu.vector_store %arg7[%c0_6, %c0_7], %9 {strides = array<i32>} : memref<32x96xf32, #tpu.memory_space<vmem>>, vector<32x96xf32>,
    %c0_i32_8 = arith.constant 0 : i32
    %11 = arith.cmpi eq, %arg2, %c0_i32_8 : i32
    %12 = arith.extui %11 : i1 to i32
    %c0_i32_9 = arith.constant 0 : i32
    %13 = arith.cmpi ne, %12, %c0_i32_9 : i32
    scf.if %13 {
      %c0_10 = arith.constant 0 : index
      %c0_11 = arith.constant 0 : index
      %14 = vector.load %arg7[%c0_10, %c0_11] : memref<32x96xf32, #tpu.memory_space<vmem>>, vector<32x96xf32>
      %c0_12 = arith.constant 0 : index
      %c0_13 = arith.constant 0 : index
      %15 = vector.load %arg5[%c0_12, %c0_13] : memref<1x96xf32, #tpu.memory_space<vmem>>, vector<1x96xf32>
      %16 = vector.broadcast %15 : vector<1x96xf32> to vector<32x96xf32>
      %17 = arith.addf %14, %16 : vector<32x96xf32>
      %c0_14 = arith.constant 0 : index
      %c0_15 = arith.constant 0 : index
      %18 = vector.load %arg6[%c0_14, %c0_15] : memref<32x96xf32, #tpu.memory_space<vmem>>, vector<32x96xf32>
      tpu.vector_store %arg6[%c0_14, %c0_15], %17 {strides = array<i32>} : memref<32x96xf32, #tpu.memory_space<vmem>>, vector<32x96xf32>,
    } else {
    }
    return
  }
  func.func @transform_0(%arg0: i32, %arg1: i32, %arg2: i32) -> (i32, i32) {
    %c0_i32 = arith.constant 0 : i32
    return %arg0, %arg2 : i32, i32
  }
  func.func @transform_1(%arg0: i32, %arg1: i32, %arg2: i32) -> (i32, i32) {
    %c0_i32 = arith.constant 0 : i32
    return %arg2, %arg1 : i32, i32
  }
  func.func @transform_2(%arg0: i32, %arg1: i32, %arg2: i32) -> (i32, i32) {
    %c0_i32 = arith.constant 0 : i32
    %c0_i32_0 = arith.constant 0 : i32
    return %c0_i32, %arg1 : i32, i32
  }
  func.func @transform_3(%arg0: i32, %arg1: i32, %arg2: i32) -> (i32, i32) {
    %c0_i32 = arith.constant 0 : i32
    return %arg0, %arg1 : i32, i32
  }
}

module attributes {stable_mosaic.version = 11 : i64} {
  func.func @_flash_attn_kernel(%arg0: i32, %arg1: i32, %arg2: i32, %arg3: memref<1x16x8xf32, #tpu.memory_space<vmem>>, %arg4: memref<1x16x8xf32, #tpu.memory_space<vmem>>, %arg5: memref<1x16x8xf32, #tpu.memory_space<vmem>>, %arg6: memref<1x16x8xf32, #tpu.memory_space<vmem>>, %arg7: memref<16x1xf32, #tpu.memory_space<vmem>>, %arg8: memref<16x1xf32, #tpu.memory_space<vmem>>, %arg9: memref<16x8xf32, #tpu.memory_space<vmem>>) attributes {dimension_semantics = [#tpu.dimension_semantics<parallel>, #tpu.dimension_semantics<parallel>, #tpu.dimension_semantics<arbitrary>], iteration_bounds = array<i64: 8, 1, 1>, scalar_prefetch = 0 : i64, scratch_operands = 3 : i64, tpu.core_type = #tpu.core_type<tc>, window_params = [{transform_indices = @transform_0, window_bounds = array<i64: 1, 16, 8>}, {transform_indices = @transform_1, window_bounds = array<i64: 1, 16, 8>}, {transform_indices = @transform_2, window_bounds = array<i64: 1, 16, 8>}, {transform_indices = @transform_3, window_bounds = array<i64: 1, 16, 8>}]} {
    %c0_i32 = arith.constant 0 : i32
    %0 = arith.cmpi eq, %arg2, %c0_i32 : i32
    %1 = arith.extui %0 : i1 to i32
    %c0_i32_0 = arith.constant 0 : i32
    %2 = arith.cmpi ne, %1, %c0_i32_0 : i32
    scf.if %2 {
      %cst_27 = arith.constant -1.000000e+30 : f32
      %41 = vector.broadcast %cst_27 : f32 to vector<16x1xf32>
      %c0_28 = arith.constant 0 : index
      %c0_29 = arith.constant 0 : index
      %42 = vector.load %arg7[%c0_28, %c0_29] : memref<16x1xf32, #tpu.memory_space<vmem>>, vector<16x1xf32>
      tpu.vector_store %arg7[%c0_28, %c0_29], %41 {strides = array<i32>} : memref<16x1xf32, #tpu.memory_space<vmem>>, vector<16x1xf32>,
      %cst_30 = arith.constant 0.000000e+00 : f32
      %43 = vector.broadcast %cst_30 : f32 to vector<16x1xf32>
      %c0_31 = arith.constant 0 : index
      %c0_32 = arith.constant 0 : index
      %44 = vector.load %arg8[%c0_31, %c0_32] : memref<16x1xf32, #tpu.memory_space<vmem>>, vector<16x1xf32>
      tpu.vector_store %arg8[%c0_31, %c0_32], %43 {strides = array<i32>} : memref<16x1xf32, #tpu.memory_space<vmem>>, vector<16x1xf32>,
      %cst_33 = arith.constant 0.000000e+00 : f32
      %45 = vector.broadcast %cst_33 : f32 to vector<16x8xf32>
      %c0_34 = arith.constant 0 : index
      %c0_35 = arith.constant 0 : index
      %46 = vector.load %arg9[%c0_34, %c0_35] : memref<16x8xf32, #tpu.memory_space<vmem>>, vector<16x8xf32>
      tpu.vector_store %arg9[%c0_34, %c0_35], %45 {strides = array<i32>} : memref<16x8xf32, #tpu.memory_space<vmem>>, vector<16x8xf32>,
    } else {
    }
    %c0 = arith.constant 0 : index
    %c0_1 = arith.constant 0 : index
    %c0_2 = arith.constant 0 : index
    %3 = vector.load %arg3[%c0, %c0_1, %c0_2] : memref<1x16x8xf32, #tpu.memory_space<vmem>>, vector<1x16x8xf32>
    %4 = vector.shape_cast %3 : vector<1x16x8xf32> to vector<16x8xf32>
    %c0_3 = arith.constant 0 : index
    %c0_4 = arith.constant 0 : index
    %c0_5 = arith.constant 0 : index
    %5 = vector.load %arg4[%c0_3, %c0_4, %c0_5] : memref<1x16x8xf32, #tpu.memory_space<vmem>>, vector<1x16x8xf32>
    %6 = vector.shape_cast %5 : vector<1x16x8xf32> to vector<16x8xf32>
    %c0_6 = arith.constant 0 : index
    %c0_7 = arith.constant 0 : index
    %c0_8 = arith.constant 0 : index
    %7 = vector.load %arg5[%c0_6, %c0_7, %c0_8] : memref<1x16x8xf32, #tpu.memory_space<vmem>>, vector<1x16x8xf32>
    %8 = vector.shape_cast %7 : vector<1x16x8xf32> to vector<16x8xf32>
    %9 = arith.truncf %4 : vector<16x8xf32> to vector<16x8xbf16>
    %10 = arith.truncf %6 : vector<16x8xf32> to vector<16x8xbf16>
    %cst = arith.constant dense<0.000000e+00> : vector<16x16xf32>
    %11 = tpu.matmul %9, %10, %cst {dimension_numbers = #tpu.dot_dimension_numbers<[1], [1], [0], [0], [0, 0, 1, 0], [], []>} : vector<16x8xbf16>, vector<16x8xbf16>, vector<16x16xf32> -> vector<16x16xf32>
    %cst_9 = arith.constant 0.353553385 : f32
    %12 = vector.broadcast %cst_9 : f32 to vector<16x16xf32>
    %13 = arith.mulf %11, %12 : vector<16x16xf32>
    %c0_10 = arith.constant 0 : index
    %c0_11 = arith.constant 0 : index
    %14 = vector.load %arg7[%c0_10, %c0_11] : memref<16x1xf32, #tpu.memory_space<vmem>>, vector<16x1xf32>
    %cst_12 = arith.constant dense<0xFF800000> : vector<16xf32>
    %15 = vector.multi_reduction <maximumf>, %13, %cst_12 [1] : vector<16x16xf32> to vector<16xf32>
    %16 = vector.shape_cast %15 : vector<16xf32> to vector<16x1xf32>
    %17 = arith.maximumf %14, %16 : vector<16x1xf32>
    %18 = arith.subf %14, %17 : vector<16x1xf32>
    %19 = math.exp %18 : vector<16x1xf32>
    %20 = vector.broadcast %17 : vector<16x1xf32> to vector<16x16xf32>
    %21 = arith.subf %13, %20 : vector<16x16xf32>
    %22 = math.exp %21 : vector<16x16xf32>
    %c0_13 = arith.constant 0 : index
    %c0_14 = arith.constant 0 : index
    %23 = vector.load %arg8[%c0_13, %c0_14] : memref<16x1xf32, #tpu.memory_space<vmem>>, vector<16x1xf32>
    %24 = arith.mulf %19, %23 : vector<16x1xf32>
    %cst_15 = arith.constant dense<0.000000e+00> : vector<16xf32>
    %25 = vector.multi_reduction <add>, %22, %cst_15 [1] : vector<16x16xf32> to vector<16xf32>
    %26 = vector.shape_cast %25 : vector<16xf32> to vector<16x1xf32>
    %27 = arith.addf %24, %26 : vector<16x1xf32>
    %c0_16 = arith.constant 0 : index
    %c0_17 = arith.constant 0 : index
    %28 = vector.load %arg8[%c0_16, %c0_17] : memref<16x1xf32, #tpu.memory_space<vmem>>, vector<16x1xf32>
    tpu.vector_store %arg8[%c0_16, %c0_17], %27 {strides = array<i32>} : memref<16x1xf32, #tpu.memory_space<vmem>>, vector<16x1xf32>,
    %c0_18 = arith.constant 0 : index
    %c0_19 = arith.constant 0 : index
    %29 = vector.load %arg9[%c0_18, %c0_19] : memref<16x8xf32, #tpu.memory_space<vmem>>, vector<16x8xf32>
    %30 = vector.broadcast %19 : vector<16x1xf32> to vector<16x8xf32>
    %31 = arith.mulf %30, %29 : vector<16x8xf32>
    %32 = arith.truncf %22 : vector<16x16xf32> to vector<16x16xbf16>
    %33 = arith.truncf %8 : vector<16x8xf32> to vector<16x8xbf16>
    %cst_20 = arith.constant dense<0.000000e+00> : vector<16x8xf32>
    %34 = tpu.matmul %32, %33, %cst_20 {dimension_numbers = #tpu.dot_dimension_numbers<[1], [0], [0], [1], [0, 0, 1, 1], [], []>} : vector<16x16xbf16>, vector<16x8xbf16>, vector<16x8xf32> -> vector<16x8xf32>
    %35 = arith.addf %31, %34 : vector<16x8xf32>
    %c0_21 = arith.constant 0 : index
    %c0_22 = arith.constant 0 : index
    %36 = vector.load %arg9[%c0_21, %c0_22] : memref<16x8xf32, #tpu.memory_space<vmem>>, vector<16x8xf32>
    tpu.vector_store %arg9[%c0_21, %c0_22], %35 {strides = array<i32>} : memref<16x8xf32, #tpu.memory_space<vmem>>, vector<16x8xf32>,
    %c0_23 = arith.constant 0 : index
    %c0_24 = arith.constant 0 : index
    %37 = vector.load %arg7[%c0_23, %c0_24] : memref<16x1xf32, #tpu.memory_space<vmem>>, vector<16x1xf32>
    tpu.vector_store %arg7[%c0_23, %c0_24], %17 {strides = array<i32>} : memref<16x1xf32, #tpu.memory_space<vmem>>, vector<16x1xf32>,
    %c0_i32_25 = arith.constant 0 : i32
    %38 = arith.cmpi eq, %arg2, %c0_i32_25 : i32
    %39 = arith.extui %38 : i1 to i32
    %c0_i32_26 = arith.constant 0 : i32
    %40 = arith.cmpi ne, %39, %c0_i32_26 : i32
    scf.if %40 {
      %c0_27 = arith.constant 0 : index
      %c0_28 = arith.constant 0 : index
      %41 = vector.load %arg9[%c0_27, %c0_28] : memref<16x8xf32, #tpu.memory_space<vmem>>, vector<16x8xf32>
      %c0_29 = arith.constant 0 : index
      %c0_30 = arith.constant 0 : index
      %42 = vector.load %arg8[%c0_29, %c0_30] : memref<16x1xf32, #tpu.memory_space<vmem>>, vector<16x1xf32>
      %43 = tpu.reciprocal %42 {approx = true} : vector<16x1xf32> -> vector<16x1xf32>
      %44 = vector.broadcast %43 : vector<16x1xf32> to vector<16x8xf32>
      %45 = arith.mulf %41, %44 : vector<16x8xf32>
      %c0_31 = arith.constant 0 : index
      %c0_32 = arith.constant 0 : index
      %c0_33 = arith.constant 0 : index
      %46 = vector.load %arg6[%c0_31, %c0_32, %c0_33] : memref<1x16x8xf32, #tpu.memory_space<vmem>>, vector<1x16x8xf32>
      %47 = vector.shape_cast %46 : vector<1x16x8xf32> to vector<16x8xf32>
      %48 = vector.shape_cast %45 : vector<16x8xf32> to vector<1x16x8xf32>
      tpu.vector_store %arg6[%c0_31, %c0_32, %c0_33], %48 {strides = array<i32>} : memref<1x16x8xf32, #tpu.memory_space<vmem>>, vector<1x16x8xf32>,
    } else {
    }
    return
  }
  func.func @transform_0(%arg0: i32, %arg1: i32, %arg2: i32) -> (i32, i32, i32) {
    %c0_i32 = arith.constant 0 : i32
    %c0_i32_0 = arith.constant 0 : i32
    return %arg0, %arg1, %c0_i32 : i32, i32, i32
  }
  func.func @transform_1(%arg0: i32, %arg1: i32, %arg2: i32) -> (i32, i32, i32) {
    %c0_i32 = arith.constant 0 : i32
    %c0_i32_0 = arith.constant 0 : i32
    return %arg0, %arg2, %c0_i32 : i32, i32, i32
  }
  func.func @transform_2(%arg0: i32, %arg1: i32, %arg2: i32) -> (i32, i32, i32) {
    %c0_i32 = arith.constant 0 : i32
    %c0_i32_0 = arith.constant 0 : i32
    return %arg0, %arg2, %c0_i32 : i32, i32, i32
  }
  func.func @transform_3(%arg0: i32, %arg1: i32, %arg2: i32) -> (i32, i32, i32) {
    %c0_i32 = arith.constant 0 : i32
    %c0_i32_0 = arith.constant 0 : i32
    return %arg0, %arg1, %c0_i32 : i32, i32, i32
  }
}

module attributes {stable_mosaic.version = 11 : i64} {
  func.func @_linear_kernel(%arg0: i32, %arg1: i32, %arg2: i32, %arg3: memref<32x32xf32, #tpu.memory_space<vmem>>, %arg4: memref<32x32xf32, #tpu.memory_space<vmem>>, %arg5: memref<1x32xf32, #tpu.memory_space<vmem>>, %arg6: memref<32x32xf32, #tpu.memory_space<vmem>>, %arg7: memref<32x32xf32, #tpu.memory_space<vmem>>, %arg8: memref<32x32xf32, #tpu.memory_space<vmem>>) attributes {dimension_semantics = [#tpu.dimension_semantics<parallel>, #tpu.dimension_semantics<parallel>, #tpu.dimension_semantics<arbitrary>], iteration_bounds = array<i64: 1, 1, 1>, scalar_prefetch = 0 : i64, scratch_operands = 1 : i64, tpu.core_type = #tpu.core_type<tc>, window_params = [{transform_indices = @transform_0, window_bounds = array<i64: 32, 32>}, {transform_indices = @transform_1, window_bounds = array<i64: 32, 32>}, {transform_indices = @transform_2, window_bounds = array<i64: 1, 32>}, {transform_indices = @transform_3, window_bounds = array<i64: 32, 32>}, {transform_indices = @transform_4, window_bounds = array<i64: 32, 32>}]} {
    %c0_i32 = arith.constant 0 : i32
    %0 = arith.cmpi eq, %arg2, %c0_i32 : i32
    %1 = arith.extui %0 : i1 to i32
    %c0_i32_0 = arith.constant 0 : i32
    %2 = arith.cmpi ne, %1, %c0_i32_0 : i32
    scf.if %2 {
      %cst_10 = arith.constant 0.000000e+00 : f32
      %14 = vector.broadcast %cst_10 : f32 to vector<32x32xf32>
      %c0_11 = arith.constant 0 : index
      %c0_12 = arith.constant 0 : index
      %15 = vector.load %arg8[%c0_11, %c0_12] : memref<32x32xf32, #tpu.memory_space<vmem>>, vector<32x32xf32>
      tpu.vector_store %arg8[%c0_11, %c0_12], %14 {strides = array<i32>} : memref<32x32xf32, #tpu.memory_space<vmem>>, vector<32x32xf32>,
    } else {
    }
    %c0 = arith.constant 0 : index
    %c0_1 = arith.constant 0 : index
    %3 = vector.load %arg8[%c0, %c0_1] : memref<32x32xf32, #tpu.memory_space<vmem>>, vector<32x32xf32>
    %c0_2 = arith.constant 0 : index
    %c0_3 = arith.constant 0 : index
    %4 = vector.load %arg3[%c0_2, %c0_3] : memref<32x32xf32, #tpu.memory_space<vmem>>, vector<32x32xf32>
    %5 = arith.truncf %4 : vector<32x32xf32> to vector<32x32xbf16>
    %c0_4 = arith.constant 0 : index
    %c0_5 = arith.constant 0 : index
    %6 = vector.load %arg4[%c0_4, %c0_5] : memref<32x32xf32, #tpu.memory_space<vmem>>, vector<32x32xf32>
    %7 = arith.truncf %6 : vector<32x32xf32> to vector<32x32xbf16>
    %cst = arith.constant dense<0.000000e+00> : vector<32x32xf32>
    %8 = tpu.matmul %5, %7, %cst {dimension_numbers = #tpu.dot_dimension_numbers<[1], [0], [0], [1], [0, 0, 1, 1], [], []>} : vector<32x32xbf16>, vector<32x32xbf16>, vector<32x32xf32> -> vector<32x32xf32>
    %9 = arith.addf %3, %8 : vector<32x32xf32>
    %c0_6 = arith.constant 0 : index
    %c0_7 = arith.constant 0 : index
    %10 = vector.load %arg8[%c0_6, %c0_7] : memref<32x32xf32, #tpu.memory_space<vmem>>, vector<32x32xf32>
    tpu.vector_store %arg8[%c0_6, %c0_7], %9 {strides = array<i32>} : memref<32x32xf32, #tpu.memory_space<vmem>>, vector<32x32xf32>,
    %c0_i32_8 = arith.constant 0 : i32
    %11 = arith.cmpi eq, %arg2, %c0_i32_8 : i32
    %12 = arith.extui %11 : i1 to i32
    %c0_i32_9 = arith.constant 0 : i32
    %13 = arith.cmpi ne, %12, %c0_i32_9 : i32
    scf.if %13 {
      %c0_10 = arith.constant 0 : index
      %c0_11 = arith.constant 0 : index
      %14 = vector.load %arg8[%c0_10, %c0_11] : memref<32x32xf32, #tpu.memory_space<vmem>>, vector<32x32xf32>
      %c0_12 = arith.constant 0 : index
      %c0_13 = arith.constant 0 : index
      %15 = vector.load %arg5[%c0_12, %c0_13] : memref<1x32xf32, #tpu.memory_space<vmem>>, vector<1x32xf32>
      %16 = vector.broadcast %15 : vector<1x32xf32> to vector<32x32xf32>
      %17 = arith.addf %14, %16 : vector<32x32xf32>
      %c0_14 = arith.constant 0 : index
      %c0_15 = arith.constant 0 : index
      %18 = vector.load %arg6[%c0_14, %c0_15] : memref<32x32xf32, #tpu.memory_space<vmem>>, vector<32x32xf32>
      %19 = arith.addf %17, %18 : vector<32x32xf32>
      %c0_16 = arith.constant 0 : index
      %c0_17 = arith.constant 0 : index
      %20 = vector.load %arg7[%c0_16, %c0_17] : memref<32x32xf32, #tpu.memory_space<vmem>>, vector<32x32xf32>
      tpu.vector_store %arg7[%c0_16, %c0_17], %19 {strides = array<i32>} : memref<32x32xf32, #tpu.memory_space<vmem>>, vector<32x32xf32>,
    } else {
    }
    return
  }
  func.func @transform_0(%arg0: i32, %arg1: i32, %arg2: i32) -> (i32, i32) {
    %c0_i32 = arith.constant 0 : i32
    return %arg0, %arg2 : i32, i32
  }
  func.func @transform_1(%arg0: i32, %arg1: i32, %arg2: i32) -> (i32, i32) {
    %c0_i32 = arith.constant 0 : i32
    return %arg2, %arg1 : i32, i32
  }
  func.func @transform_2(%arg0: i32, %arg1: i32, %arg2: i32) -> (i32, i32) {
    %c0_i32 = arith.constant 0 : i32
    %c0_i32_0 = arith.constant 0 : i32
    return %c0_i32, %arg1 : i32, i32
  }
  func.func @transform_3(%arg0: i32, %arg1: i32, %arg2: i32) -> (i32, i32) {
    %c0_i32 = arith.constant 0 : i32
    return %arg0, %arg1 : i32, i32
  }
  func.func @transform_4(%arg0: i32, %arg1: i32, %arg2: i32) -> (i32, i32) {
    %c0_i32 = arith.constant 0 : i32
    return %arg0, %arg1 : i32, i32
  }
}

module attributes {stable_mosaic.version = 11 : i64} {
  func.func @_linear_kernel(%arg0: i32, %arg1: i32, %arg2: i32, %arg3: memref<32x32xf32, #tpu.memory_space<vmem>>, %arg4: memref<32x128xf32, #tpu.memory_space<vmem>>, %arg5: memref<1x128xf32, #tpu.memory_space<vmem>>, %arg6: memref<32x128xf32, #tpu.memory_space<vmem>>, %arg7: memref<32x128xf32, #tpu.memory_space<vmem>>) attributes {dimension_semantics = [#tpu.dimension_semantics<parallel>, #tpu.dimension_semantics<parallel>, #tpu.dimension_semantics<arbitrary>], iteration_bounds = array<i64: 1, 1, 1>, scalar_prefetch = 0 : i64, scratch_operands = 1 : i64, tpu.core_type = #tpu.core_type<tc>, window_params = [{transform_indices = @transform_0, window_bounds = array<i64: 32, 32>}, {transform_indices = @transform_1, window_bounds = array<i64: 32, 128>}, {transform_indices = @transform_2, window_bounds = array<i64: 1, 128>}, {transform_indices = @transform_3, window_bounds = array<i64: 32, 128>}]} {
    %c0_i32 = arith.constant 0 : i32
    %0 = arith.cmpi eq, %arg2, %c0_i32 : i32
    %1 = arith.extui %0 : i1 to i32
    %c0_i32_0 = arith.constant 0 : i32
    %2 = arith.cmpi ne, %1, %c0_i32_0 : i32
    scf.if %2 {
      %cst_10 = arith.constant 0.000000e+00 : f32
      %14 = vector.broadcast %cst_10 : f32 to vector<32x128xf32>
      %c0_11 = arith.constant 0 : index
      %c0_12 = arith.constant 0 : index
      %15 = vector.load %arg7[%c0_11, %c0_12] : memref<32x128xf32, #tpu.memory_space<vmem>>, vector<32x128xf32>
      tpu.vector_store %arg7[%c0_11, %c0_12], %14 {strides = array<i32>} : memref<32x128xf32, #tpu.memory_space<vmem>>, vector<32x128xf32>,
    } else {
    }
    %c0 = arith.constant 0 : index
    %c0_1 = arith.constant 0 : index
    %3 = vector.load %arg7[%c0, %c0_1] : memref<32x128xf32, #tpu.memory_space<vmem>>, vector<32x128xf32>
    %c0_2 = arith.constant 0 : index
    %c0_3 = arith.constant 0 : index
    %4 = vector.load %arg3[%c0_2, %c0_3] : memref<32x32xf32, #tpu.memory_space<vmem>>, vector<32x32xf32>
    %5 = arith.truncf %4 : vector<32x32xf32> to vector<32x32xbf16>
    %c0_4 = arith.constant 0 : index
    %c0_5 = arith.constant 0 : index
    %6 = vector.load %arg4[%c0_4, %c0_5] : memref<32x128xf32, #tpu.memory_space<vmem>>, vector<32x128xf32>
    %7 = arith.truncf %6 : vector<32x128xf32> to vector<32x128xbf16>
    %cst = arith.constant dense<0.000000e+00> : vector<32x128xf32>
    %8 = tpu.matmul %5, %7, %cst {dimension_numbers = #tpu.dot_dimension_numbers<[1], [0], [0], [1], [0, 0, 1, 1], [], []>} : vector<32x32xbf16>, vector<32x128xbf16>, vector<32x128xf32> -> vector<32x128xf32>
    %9 = arith.addf %3, %8 : vector<32x128xf32>
    %c0_6 = arith.constant 0 : index
    %c0_7 = arith.constant 0 : index
    %10 = vector.load %arg7[%c0_6, %c0_7] : memref<32x128xf32, #tpu.memory_space<vmem>>, vector<32x128xf32>
    tpu.vector_store %arg7[%c0_6, %c0_7], %9 {strides = array<i32>} : memref<32x128xf32, #tpu.memory_space<vmem>>, vector<32x128xf32>,
    %c0_i32_8 = arith.constant 0 : i32
    %11 = arith.cmpi eq, %arg2, %c0_i32_8 : i32
    %12 = arith.extui %11 : i1 to i32
    %c0_i32_9 = arith.constant 0 : i32
    %13 = arith.cmpi ne, %12, %c0_i32_9 : i32
    scf.if %13 {
      %c0_10 = arith.constant 0 : index
      %c0_11 = arith.constant 0 : index
      %14 = vector.load %arg7[%c0_10, %c0_11] : memref<32x128xf32, #tpu.memory_space<vmem>>, vector<32x128xf32>
      %c0_12 = arith.constant 0 : index
      %c0_13 = arith.constant 0 : index
      %15 = vector.load %arg5[%c0_12, %c0_13] : memref<1x128xf32, #tpu.memory_space<vmem>>, vector<1x128xf32>
      %16 = vector.broadcast %15 : vector<1x128xf32> to vector<32x128xf32>
      %17 = arith.addf %14, %16 : vector<32x128xf32>
      %cst_14 = arith.constant 5.000000e-01 : f32
      %18 = vector.broadcast %cst_14 : f32 to vector<32x128xf32>
      %19 = arith.mulf %18, %17 : vector<32x128xf32>
      %cst_15 = arith.constant 4.471500e-02 : f32
      %20 = vector.broadcast %cst_15 : f32 to vector<32x128xf32>
      %21 = arith.mulf %20, %17 : vector<32x128xf32>
      %22 = arith.mulf %21, %17 : vector<32x128xf32>
      %23 = arith.mulf %22, %17 : vector<32x128xf32>
      %24 = arith.addf %17, %23 : vector<32x128xf32>
      %cst_16 = arith.constant 0.797884583 : f32
      %25 = vector.broadcast %cst_16 : f32 to vector<32x128xf32>
      %26 = arith.mulf %25, %24 : vector<32x128xf32>
      %27 = math.tanh %26 : vector<32x128xf32>
      %cst_17 = arith.constant 1.000000e+00 : f32
      %28 = vector.broadcast %cst_17 : f32 to vector<32x128xf32>
      %29 = arith.addf %28, %27 : vector<32x128xf32>
      %30 = arith.mulf %19, %29 : vector<32x128xf32>
      %c0_18 = arith.constant 0 : index
      %c0_19 = arith.constant 0 : index
      %31 = vector.load %arg6[%c0_18, %c0_19] : memref<32x128xf32, #tpu.memory_space<vmem>>, vector<32x128xf32>
      tpu.vector_store %arg6[%c0_18, %c0_19], %30 {strides = array<i32>} : memref<32x128xf32, #tpu.memory_space<vmem>>, vector<32x128xf32>,
    } else {
    }
    return
  }
  func.func @transform_0(%arg0: i32, %arg1: i32, %arg2: i32) -> (i32, i32) {
    %c0_i32 = arith.constant 0 : i32
    return %arg0, %arg2 : i32, i32
  }
  func.func @transform_1(%arg0: i32, %arg1: i32, %arg2: i32) -> (i32, i32) {
    %c0_i32 = arith.constant 0 : i32
    return %arg2, %arg1 : i32, i32
  }
  func.func @transform_2(%arg0: i32, %arg1: i32, %arg2: i32) -> (i32, i32) {
    %c0_i32 = arith.constant 0 : i32
    %c0_i32_0 = arith.constant 0 : i32
    return %c0_i32, %arg1 : i32, i32
  }
  func.func @transform_3(%arg0: i32, %arg1: i32, %arg2: i32) -> (i32, i32) {
    %c0_i32 = arith.constant 0 : i32
    return %arg0, %arg1 : i32, i32
  }
}

module attributes {stable_mosaic.version = 11 : i64} {
  func.func @_linear_kernel(%arg0: i32, %arg1: i32, %arg2: i32, %arg3: memref<32x128xf32, #tpu.memory_space<vmem>>, %arg4: memref<128x32xf32, #tpu.memory_space<vmem>>, %arg5: memref<1x32xf32, #tpu.memory_space<vmem>>, %arg6: memref<32x32xf32, #tpu.memory_space<vmem>>, %arg7: memref<32x32xf32, #tpu.memory_space<vmem>>, %arg8: memref<32x32xf32, #tpu.memory_space<vmem>>) attributes {dimension_semantics = [#tpu.dimension_semantics<parallel>, #tpu.dimension_semantics<parallel>, #tpu.dimension_semantics<arbitrary>], iteration_bounds = array<i64: 1, 1, 1>, scalar_prefetch = 0 : i64, scratch_operands = 1 : i64, tpu.core_type = #tpu.core_type<tc>, window_params = [{transform_indices = @transform_0, window_bounds = array<i64: 32, 128>}, {transform_indices = @transform_1, window_bounds = array<i64: 128, 32>}, {transform_indices = @transform_2, window_bounds = array<i64: 1, 32>}, {transform_indices = @transform_3, window_bounds = array<i64: 32, 32>}, {transform_indices = @transform_4, window_bounds = array<i64: 32, 32>}]} {
    %c0_i32 = arith.constant 0 : i32
    %0 = arith.cmpi eq, %arg2, %c0_i32 : i32
    %1 = arith.extui %0 : i1 to i32
    %c0_i32_0 = arith.constant 0 : i32
    %2 = arith.cmpi ne, %1, %c0_i32_0 : i32
    scf.if %2 {
      %cst_10 = arith.constant 0.000000e+00 : f32
      %14 = vector.broadcast %cst_10 : f32 to vector<32x32xf32>
      %c0_11 = arith.constant 0 : index
      %c0_12 = arith.constant 0 : index
      %15 = vector.load %arg8[%c0_11, %c0_12] : memref<32x32xf32, #tpu.memory_space<vmem>>, vector<32x32xf32>
      tpu.vector_store %arg8[%c0_11, %c0_12], %14 {strides = array<i32>} : memref<32x32xf32, #tpu.memory_space<vmem>>, vector<32x32xf32>,
    } else {
    }
    %c0 = arith.constant 0 : index
    %c0_1 = arith.constant 0 : index
    %3 = vector.load %arg8[%c0, %c0_1] : memref<32x32xf32, #tpu.memory_space<vmem>>, vector<32x32xf32>
    %c0_2 = arith.constant 0 : index
    %c0_3 = arith.constant 0 : index
    %4 = vector.load %arg3[%c0_2, %c0_3] : memref<32x128xf32, #tpu.memory_space<vmem>>, vector<32x128xf32>
    %5 = arith.truncf %4 : vector<32x128xf32> to vector<32x128xbf16>
    %c0_4 = arith.constant 0 : index
    %c0_5 = arith.constant 0 : index
    %6 = vector.load %arg4[%c0_4, %c0_5] : memref<128x32xf32, #tpu.memory_space<vmem>>, vector<128x32xf32>
    %7 = arith.truncf %6 : vector<128x32xf32> to vector<128x32xbf16>
    %cst = arith.constant dense<0.000000e+00> : vector<32x32xf32>
    %8 = tpu.matmul %5, %7, %cst {dimension_numbers = #tpu.dot_dimension_numbers<[1], [0], [0], [1], [0, 0, 1, 1], [], []>} : vector<32x128xbf16>, vector<128x32xbf16>, vector<32x32xf32> -> vector<32x32xf32>
    %9 = arith.addf %3, %8 : vector<32x32xf32>
    %c0_6 = arith.constant 0 : index
    %c0_7 = arith.constant 0 : index
    %10 = vector.load %arg8[%c0_6, %c0_7] : memref<32x32xf32, #tpu.memory_space<vmem>>, vector<32x32xf32>
    tpu.vector_store %arg8[%c0_6, %c0_7], %9 {strides = array<i32>} : memref<32x32xf32, #tpu.memory_space<vmem>>, vector<32x32xf32>,
    %c0_i32_8 = arith.constant 0 : i32
    %11 = arith.cmpi eq, %arg2, %c0_i32_8 : i32
    %12 = arith.extui %11 : i1 to i32
    %c0_i32_9 = arith.constant 0 : i32
    %13 = arith.cmpi ne, %12, %c0_i32_9 : i32
    scf.if %13 {
      %c0_10 = arith.constant 0 : index
      %c0_11 = arith.constant 0 : index
      %14 = vector.load %arg8[%c0_10, %c0_11] : memref<32x32xf32, #tpu.memory_space<vmem>>, vector<32x32xf32>
      %c0_12 = arith.constant 0 : index
      %c0_13 = arith.constant 0 : index
      %15 = vector.load %arg5[%c0_12, %c0_13] : memref<1x32xf32, #tpu.memory_space<vmem>>, vector<1x32xf32>
      %16 = vector.broadcast %15 : vector<1x32xf32> to vector<32x32xf32>
      %17 = arith.addf %14, %16 : vector<32x32xf32>
      %c0_14 = arith.constant 0 : index
      %c0_15 = arith.constant 0 : index
      %18 = vector.load %arg6[%c0_14, %c0_15] : memref<32x32xf32, #tpu.memory_space<vmem>>, vector<32x32xf32>
      %19 = arith.addf %17, %18 : vector<32x32xf32>
      %c0_16 = arith.constant 0 : index
      %c0_17 = arith.constant 0 : index
      %20 = vector.load %arg7[%c0_16, %c0_17] : memref<32x32xf32, #tpu.memory_space<vmem>>, vector<32x32xf32>
      tpu.vector_store %arg7[%c0_16, %c0_17], %19 {strides = array<i32>} : memref<32x32xf32, #tpu.memory_space<vmem>>, vector<32x32xf32>,
    } else {
    }
    return
  }
  func.func @transform_0(%arg0: i32, %arg1: i32, %arg2: i32) -> (i32, i32) {
    %c0_i32 = arith.constant 0 : i32
    return %arg0, %arg2 : i32, i32
  }
  func.func @transform_1(%arg0: i32, %arg1: i32, %arg2: i32) -> (i32, i32) {
    %c0_i32 = arith.constant 0 : i32
    return %arg2, %arg1 : i32, i32
  }
  func.func @transform_2(%arg0: i32, %arg1: i32, %arg2: i32) -> (i32, i32) {
    %c0_i32 = arith.constant 0 : i32
    %c0_i32_0 = arith.constant 0 : i32
    return %c0_i32, %arg1 : i32, i32
  }
  func.func @transform_3(%arg0: i32, %arg1: i32, %arg2: i32) -> (i32, i32) {
    %c0_i32 = arith.constant 0 : i32
    return %arg0, %arg1 : i32, i32
  }
  func.func @transform_4(%arg0: i32, %arg1: i32, %arg2: i32) -> (i32, i32) {
    %c0_i32 = arith.constant 0 : i32
    return %arg0, %arg1 : i32, i32
  }
}

module attributes {stable_mosaic.version = 11 : i64} {
  func.func @_linear_kernel(%arg0: i32, %arg1: i32, %arg2: i32, %arg3: memref<32x32xf32, #tpu.memory_space<vmem>>, %arg4: memref<32x64xf32, #tpu.memory_space<vmem>>, %arg5: memref<1x64xf32, #tpu.memory_space<vmem>>, %arg6: memref<32x64xf32, #tpu.memory_space<vmem>>, %arg7: memref<32x64xf32, #tpu.memory_space<vmem>>) attributes {dimension_semantics = [#tpu.dimension_semantics<parallel>, #tpu.dimension_semantics<parallel>, #tpu.dimension_semantics<arbitrary>], iteration_bounds = array<i64: 1, 1, 1>, scalar_prefetch = 0 : i64, scratch_operands = 1 : i64, tpu.core_type = #tpu.core_type<tc>, window_params = [{transform_indices = @transform_0, window_bounds = array<i64: 32, 32>}, {transform_indices = @transform_1, window_bounds = array<i64: 32, 64>}, {transform_indices = @transform_2, window_bounds = array<i64: 1, 64>}, {transform_indices = @transform_3, window_bounds = array<i64: 32, 64>}]} {
    %c0_i32 = arith.constant 0 : i32
    %0 = arith.cmpi eq, %arg2, %c0_i32 : i32
    %1 = arith.extui %0 : i1 to i32
    %c0_i32_0 = arith.constant 0 : i32
    %2 = arith.cmpi ne, %1, %c0_i32_0 : i32
    scf.if %2 {
      %cst_10 = arith.constant 0.000000e+00 : f32
      %14 = vector.broadcast %cst_10 : f32 to vector<32x64xf32>
      %c0_11 = arith.constant 0 : index
      %c0_12 = arith.constant 0 : index
      %15 = vector.load %arg7[%c0_11, %c0_12] : memref<32x64xf32, #tpu.memory_space<vmem>>, vector<32x64xf32>
      tpu.vector_store %arg7[%c0_11, %c0_12], %14 {strides = array<i32>} : memref<32x64xf32, #tpu.memory_space<vmem>>, vector<32x64xf32>,
    } else {
    }
    %c0 = arith.constant 0 : index
    %c0_1 = arith.constant 0 : index
    %3 = vector.load %arg7[%c0, %c0_1] : memref<32x64xf32, #tpu.memory_space<vmem>>, vector<32x64xf32>
    %c0_2 = arith.constant 0 : index
    %c0_3 = arith.constant 0 : index
    %4 = vector.load %arg3[%c0_2, %c0_3] : memref<32x32xf32, #tpu.memory_space<vmem>>, vector<32x32xf32>
    %5 = arith.truncf %4 : vector<32x32xf32> to vector<32x32xbf16>
    %c0_4 = arith.constant 0 : index
    %c0_5 = arith.constant 0 : index
    %6 = vector.load %arg4[%c0_4, %c0_5] : memref<32x64xf32, #tpu.memory_space<vmem>>, vector<32x64xf32>
    %7 = arith.truncf %6 : vector<32x64xf32> to vector<32x64xbf16>
    %cst = arith.constant dense<0.000000e+00> : vector<32x64xf32>
    %8 = tpu.matmul %5, %7, %cst {dimension_numbers = #tpu.dot_dimension_numbers<[1], [0], [0], [1], [0, 0, 1, 1], [], []>} : vector<32x32xbf16>, vector<32x64xbf16>, vector<32x64xf32> -> vector<32x64xf32>
    %9 = arith.addf %3, %8 : vector<32x64xf32>
    %c0_6 = arith.constant 0 : index
    %c0_7 = arith.constant 0 : index
    %10 = vector.load %arg7[%c0_6, %c0_7] : memref<32x64xf32, #tpu.memory_space<vmem>>, vector<32x64xf32>
    tpu.vector_store %arg7[%c0_6, %c0_7], %9 {strides = array<i32>} : memref<32x64xf32, #tpu.memory_space<vmem>>, vector<32x64xf32>,
    %c0_i32_8 = arith.constant 0 : i32
    %11 = arith.cmpi eq, %arg2, %c0_i32_8 : i32
    %12 = arith.extui %11 : i1 to i32
    %c0_i32_9 = arith.constant 0 : i32
    %13 = arith.cmpi ne, %12, %c0_i32_9 : i32
    scf.if %13 {
      %c0_10 = arith.constant 0 : index
      %c0_11 = arith.constant 0 : index
      %14 = vector.load %arg7[%c0_10, %c0_11] : memref<32x64xf32, #tpu.memory_space<vmem>>, vector<32x64xf32>
      %c0_12 = arith.constant 0 : index
      %c0_13 = arith.constant 0 : index
      %15 = vector.load %arg5[%c0_12, %c0_13] : memref<1x64xf32, #tpu.memory_space<vmem>>, vector<1x64xf32>
      %16 = vector.broadcast %15 : vector<1x64xf32> to vector<32x64xf32>
      %17 = arith.addf %14, %16 : vector<32x64xf32>
      %c0_14 = arith.constant 0 : index
      %c0_15 = arith.constant 0 : index
      %18 = vector.load %arg6[%c0_14, %c0_15] : memref<32x64xf32, #tpu.memory_space<vmem>>, vector<32x64xf32>
      tpu.vector_store %arg6[%c0_14, %c0_15], %17 {strides = array<i32>} : memref<32x64xf32, #tpu.memory_space<vmem>>, vector<32x64xf32>,
    } else {
    }
    return
  }
  func.func @transform_0(%arg0: i32, %arg1: i32, %arg2: i32) -> (i32, i32) {
    %c0_i32 = arith.constant 0 : i32
    return %arg0, %arg2 : i32, i32
  }
  func.func @transform_1(%arg0: i32, %arg1: i32, %arg2: i32) -> (i32, i32) {
    %c0_i32 = arith.constant 0 : i32
    return %arg2, %arg1 : i32, i32
  }
  func.func @transform_2(%arg0: i32, %arg1: i32, %arg2: i32) -> (i32, i32) {
    %c0_i32 = arith.constant 0 : i32
    %c0_i32_0 = arith.constant 0 : i32
    return %c0_i32, %arg1 : i32, i32
  }
  func.func @transform_3(%arg0: i32, %arg1: i32, %arg2: i32) -> (i32, i32) {
    %c0_i32 = arith.constant 0 : i32
    return %arg0, %arg1 : i32, i32
  }
}

module attributes {stable_mosaic.version = 11 : i64} {
  func.func @_flash_attn_kernel(%arg0: i32, %arg1: i32, %arg2: i32, %arg3: memref<1x8x8xf32, #tpu.memory_space<vmem>>, %arg4: memref<1x16x8xf32, #tpu.memory_space<vmem>>, %arg5: memref<1x16x8xf32, #tpu.memory_space<vmem>>, %arg6: memref<1x8x8xf32, #tpu.memory_space<vmem>>, %arg7: memref<8x1xf32, #tpu.memory_space<vmem>>, %arg8: memref<8x1xf32, #tpu.memory_space<vmem>>, %arg9: memref<8x8xf32, #tpu.memory_space<vmem>>) attributes {dimension_semantics = [#tpu.dimension_semantics<parallel>, #tpu.dimension_semantics<parallel>, #tpu.dimension_semantics<arbitrary>], iteration_bounds = array<i64: 8, 1, 1>, scalar_prefetch = 0 : i64, scratch_operands = 3 : i64, tpu.core_type = #tpu.core_type<tc>, window_params = [{transform_indices = @transform_0, window_bounds = array<i64: 1, 8, 8>}, {transform_indices = @transform_1, window_bounds = array<i64: 1, 16, 8>}, {transform_indices = @transform_2, window_bounds = array<i64: 1, 16, 8>}, {transform_indices = @transform_3, window_bounds = array<i64: 1, 8, 8>}]} {
    %c0_i32 = arith.constant 0 : i32
    %0 = arith.cmpi eq, %arg2, %c0_i32 : i32
    %1 = arith.extui %0 : i1 to i32
    %c0_i32_0 = arith.constant 0 : i32
    %2 = arith.cmpi ne, %1, %c0_i32_0 : i32
    scf.if %2 {
      %cst_27 = arith.constant -1.000000e+30 : f32
      %41 = vector.broadcast %cst_27 : f32 to vector<8x1xf32>
      %c0_28 = arith.constant 0 : index
      %c0_29 = arith.constant 0 : index
      %42 = vector.load %arg7[%c0_28, %c0_29] : memref<8x1xf32, #tpu.memory_space<vmem>>, vector<8x1xf32>
      tpu.vector_store %arg7[%c0_28, %c0_29], %41 {strides = array<i32>} : memref<8x1xf32, #tpu.memory_space<vmem>>, vector<8x1xf32>,
      %cst_30 = arith.constant 0.000000e+00 : f32
      %43 = vector.broadcast %cst_30 : f32 to vector<8x1xf32>
      %c0_31 = arith.constant 0 : index
      %c0_32 = arith.constant 0 : index
      %44 = vector.load %arg8[%c0_31, %c0_32] : memref<8x1xf32, #tpu.memory_space<vmem>>, vector<8x1xf32>
      tpu.vector_store %arg8[%c0_31, %c0_32], %43 {strides = array<i32>} : memref<8x1xf32, #tpu.memory_space<vmem>>, vector<8x1xf32>,
      %cst_33 = arith.constant 0.000000e+00 : f32
      %45 = vector.broadcast %cst_33 : f32 to vector<8x8xf32>
      %c0_34 = arith.constant 0 : index
      %c0_35 = arith.constant 0 : index
      %46 = vector.load %arg9[%c0_34, %c0_35] : memref<8x8xf32, #tpu.memory_space<vmem>>, vector<8x8xf32>
      tpu.vector_store %arg9[%c0_34, %c0_35], %45 {strides = array<i32>} : memref<8x8xf32, #tpu.memory_space<vmem>>, vector<8x8xf32>,
    } else {
    }
    %c0 = arith.constant 0 : index
    %c0_1 = arith.constant 0 : index
    %c0_2 = arith.constant 0 : index
    %3 = vector.load %arg3[%c0, %c0_1, %c0_2] : memref<1x8x8xf32, #tpu.memory_space<vmem>>, vector<1x8x8xf32>
    %4 = vector.shape_cast %3 : vector<1x8x8xf32> to vector<8x8xf32>
    %c0_3 = arith.constant 0 : index
    %c0_4 = arith.constant 0 : index
    %c0_5 = arith.constant 0 : index
    %5 = vector.load %arg4[%c0_3, %c0_4, %c0_5] : memref<1x16x8xf32, #tpu.memory_space<vmem>>, vector<1x16x8xf32>
    %6 = vector.shape_cast %5 : vector<1x16x8xf32> to vector<16x8xf32>
    %c0_6 = arith.constant 0 : index
    %c0_7 = arith.constant 0 : index
    %c0_8 = arith.constant 0 : index
    %7 = vector.load %arg5[%c0_6, %c0_7, %c0_8] : memref<1x16x8xf32, #tpu.memory_space<vmem>>, vector<1x16x8xf32>
    %8 = vector.shape_cast %7 : vector<1x16x8xf32> to vector<16x8xf32>
    %9 = arith.truncf %4 : vector<8x8xf32> to vector<8x8xbf16>
    %10 = arith.truncf %6 : vector<16x8xf32> to vector<16x8xbf16>
    %cst = arith.constant dense<0.000000e+00> : vector<8x16xf32>
    %11 = tpu.matmul %9, %10, %cst {dimension_numbers = #tpu.dot_dimension_numbers<[1], [1], [0], [0], [0, 0, 1, 0], [], []>} : vector<8x8xbf16>, vector<16x8xbf16>, vector<8x16xf32> -> vector<8x16xf32>
    %cst_9 = arith.constant 0.353553385 : f32
    %12 = vector.broadcast %cst_9 : f32 to vector<8x16xf32>
    %13 = arith.mulf %11, %12 : vector<8x16xf32>
    %c0_10 = arith.constant 0 : index
    %c0_11 = arith.constant 0 : index
    %14 = vector.load %arg7[%c0_10, %c0_11] : memref<8x1xf32, #tpu.memory_space<vmem>>, vector<8x1xf32>
    %cst_12 = arith.constant dense<0xFF800000> : vector<8xf32>
    %15 = vector.multi_reduction <maximumf>, %13, %cst_12 [1] : vector<8x16xf32> to vector<8xf32>
    %16 = vector.shape_cast %15 : vector<8xf32> to vector<8x1xf32>
    %17 = arith.maximumf %14, %16 : vector<8x1xf32>
    %18 = arith.subf %14, %17 : vector<8x1xf32>
    %19 = math.exp %18 : vector<8x1xf32>
    %20 = vector.broadcast %17 : vector<8x1xf32> to vector<8x16xf32>
    %21 = arith.subf %13, %20 : vector<8x16xf32>
    %22 = math.exp %21 : vector<8x16xf32>
    %c0_13 = arith.constant 0 : index
    %c0_14 = arith.constant 0 : index
    %23 = vector.load %arg8[%c0_13, %c0_14] : memref<8x1xf32, #tpu.memory_space<vmem>>, vector<8x1xf32>
    %24 = arith.mulf %19, %23 : vector<8x1xf32>
    %cst_15 = arith.constant dense<0.000000e+00> : vector<8xf32>
    %25 = vector.multi_reduction <add>, %22, %cst_15 [1] : vector<8x16xf32> to vector<8xf32>
    %26 = vector.shape_cast %25 : vector<8xf32> to vector<8x1xf32>
    %27 = arith.addf %24, %26 : vector<8x1xf32>
    %c0_16 = arith.constant 0 : index
    %c0_17 = arith.constant 0 : index
    %28 = vector.load %arg8[%c0_16, %c0_17] : memref<8x1xf32, #tpu.memory_space<vmem>>, vector<8x1xf32>
    tpu.vector_store %arg8[%c0_16, %c0_17], %27 {strides = array<i32>} : memref<8x1xf32, #tpu.memory_space<vmem>>, vector<8x1xf32>,
    %c0_18 = arith.constant 0 : index
    %c0_19 = arith.constant 0 : index
    %29 = vector.load %arg9[%c0_18, %c0_19] : memref<8x8xf32, #tpu.memory_space<vmem>>, vector<8x8xf32>
    %30 = vector.broadcast %19 : vector<8x1xf32> to vector<8x8xf32>
    %31 = arith.mulf %30, %29 : vector<8x8xf32>
    %32 = arith.truncf %22 : vector<8x16xf32> to vector<8x16xbf16>
    %33 = arith.truncf %8 : vector<16x8xf32> to vector<16x8xbf16>
    %cst_20 = arith.constant dense<0.000000e+00> : vector<8x8xf32>
    %34 = tpu.matmul %32, %33, %cst_20 {dimension_numbers = #tpu.dot_dimension_numbers<[1], [0], [0], [1], [0, 0, 1, 1], [], []>} : vector<8x16xbf16>, vector<16x8xbf16>, vector<8x8xf32> -> vector<8x8xf32>
    %35 = arith.addf %31, %34 : vector<8x8xf32>
    %c0_21 = arith.constant 0 : index
    %c0_22 = arith.constant 0 : index
    %36 = vector.load %arg9[%c0_21, %c0_22] : memref<8x8xf32, #tpu.memory_space<vmem>>, vector<8x8xf32>
    tpu.vector_store %arg9[%c0_21, %c0_22], %35 {strides = array<i32>} : memref<8x8xf32, #tpu.memory_space<vmem>>, vector<8x8xf32>,
    %c0_23 = arith.constant 0 : index
    %c0_24 = arith.constant 0 : index
    %37 = vector.load %arg7[%c0_23, %c0_24] : memref<8x1xf32, #tpu.memory_space<vmem>>, vector<8x1xf32>
    tpu.vector_store %arg7[%c0_23, %c0_24], %17 {strides = array<i32>} : memref<8x1xf32, #tpu.memory_space<vmem>>, vector<8x1xf32>,
    %c0_i32_25 = arith.constant 0 : i32
    %38 = arith.cmpi eq, %arg2, %c0_i32_25 : i32
    %39 = arith.extui %38 : i1 to i32
    %c0_i32_26 = arith.constant 0 : i32
    %40 = arith.cmpi ne, %39, %c0_i32_26 : i32
    scf.if %40 {
      %c0_27 = arith.constant 0 : index
      %c0_28 = arith.constant 0 : index
      %41 = vector.load %arg9[%c0_27, %c0_28] : memref<8x8xf32, #tpu.memory_space<vmem>>, vector<8x8xf32>
      %c0_29 = arith.constant 0 : index
      %c0_30 = arith.constant 0 : index
      %42 = vector.load %arg8[%c0_29, %c0_30] : memref<8x1xf32, #tpu.memory_space<vmem>>, vector<8x1xf32>
      %43 = tpu.reciprocal %42 {approx = true} : vector<8x1xf32> -> vector<8x1xf32>
      %44 = vector.broadcast %43 : vector<8x1xf32> to vector<8x8xf32>
      %45 = arith.mulf %41, %44 : vector<8x8xf32>
      %c0_31 = arith.constant 0 : index
      %c0_32 = arith.constant 0 : index
      %c0_33 = arith.constant 0 : index
      %46 = vector.load %arg6[%c0_31, %c0_32, %c0_33] : memref<1x8x8xf32, #tpu.memory_space<vmem>>, vector<1x8x8xf32>
      %47 = vector.shape_cast %46 : vector<1x8x8xf32> to vector<8x8xf32>
      %48 = vector.shape_cast %45 : vector<8x8xf32> to vector<1x8x8xf32>
      tpu.vector_store %arg6[%c0_31, %c0_32, %c0_33], %48 {strides = array<i32>} : memref<1x8x8xf32, #tpu.memory_space<vmem>>, vector<1x8x8xf32>,
    } else {
    }
    return
  }
  func.func @transform_0(%arg0: i32, %arg1: i32, %arg2: i32) -> (i32, i32, i32) {
    %c0_i32 = arith.constant 0 : i32
    %c0_i32_0 = arith.constant 0 : i32
    return %arg0, %arg1, %c0_i32 : i32, i32, i32
  }
  func.func @transform_1(%arg0: i32, %arg1: i32, %arg2: i32) -> (i32, i32, i32) {
    %c0_i32 = arith.constant 0 : i32
    %c0_i32_0 = arith.constant 0 : i32
    return %arg0, %arg2, %c0_i32 : i32, i32, i32
  }
  func.func @transform_2(%arg0: i32, %arg1: i32, %arg2: i32) -> (i32, i32, i32) {
    %c0_i32 = arith.constant 0 : i32
    %c0_i32_0 = arith.constant 0 : i32
    return %arg0, %arg2, %c0_i32 : i32, i32, i32
  }
  func.func @transform_3(%arg0: i32, %arg1: i32, %arg2: i32) -> (i32, i32, i32) {
    %c0_i32 = arith.constant 0 : i32
    %c0_i32_0 = arith.constant 0 : i32
    return %arg0, %arg1, %c0_i32 : i32, i32, i32
  }
}

module attributes {stable_mosaic.version = 11 : i64} {
  func.func @_linear_kernel(%arg0: i32, %arg1: i32, %arg2: i32, %arg3: memref<16x32xf32, #tpu.memory_space<vmem>>, %arg4: memref<32x128xf32, #tpu.memory_space<vmem>>, %arg5: memref<1x128xf32, #tpu.memory_space<vmem>>, %arg6: memref<16x128xf32, #tpu.memory_space<vmem>>, %arg7: memref<16x128xf32, #tpu.memory_space<vmem>>) attributes {dimension_semantics = [#tpu.dimension_semantics<parallel>, #tpu.dimension_semantics<parallel>, #tpu.dimension_semantics<arbitrary>], iteration_bounds = array<i64: 1, 1, 1>, scalar_prefetch = 0 : i64, scratch_operands = 1 : i64, tpu.core_type = #tpu.core_type<tc>, window_params = [{transform_indices = @transform_0, window_bounds = array<i64: 16, 32>}, {transform_indices = @transform_1, window_bounds = array<i64: 32, 128>}, {transform_indices = @transform_2, window_bounds = array<i64: 1, 128>}, {transform_indices = @transform_3, window_bounds = array<i64: 16, 128>}]} {
    %c0_i32 = arith.constant 0 : i32
    %0 = arith.cmpi eq, %arg2, %c0_i32 : i32
    %1 = arith.extui %0 : i1 to i32
    %c0_i32_0 = arith.constant 0 : i32
    %2 = arith.cmpi ne, %1, %c0_i32_0 : i32
    scf.if %2 {
      %cst_10 = arith.constant 0.000000e+00 : f32
      %14 = vector.broadcast %cst_10 : f32 to vector<16x128xf32>
      %c0_11 = arith.constant 0 : index
      %c0_12 = arith.constant 0 : index
      %15 = vector.load %arg7[%c0_11, %c0_12] : memref<16x128xf32, #tpu.memory_space<vmem>>, vector<16x128xf32>
      tpu.vector_store %arg7[%c0_11, %c0_12], %14 {strides = array<i32>} : memref<16x128xf32, #tpu.memory_space<vmem>>, vector<16x128xf32>,
    } else {
    }
    %c0 = arith.constant 0 : index
    %c0_1 = arith.constant 0 : index
    %3 = vector.load %arg7[%c0, %c0_1] : memref<16x128xf32, #tpu.memory_space<vmem>>, vector<16x128xf32>
    %c0_2 = arith.constant 0 : index
    %c0_3 = arith.constant 0 : index
    %4 = vector.load %arg3[%c0_2, %c0_3] : memref<16x32xf32, #tpu.memory_space<vmem>>, vector<16x32xf32>
    %5 = arith.truncf %4 : vector<16x32xf32> to vector<16x32xbf16>
    %c0_4 = arith.constant 0 : index
    %c0_5 = arith.constant 0 : index
    %6 = vector.load %arg4[%c0_4, %c0_5] : memref<32x128xf32, #tpu.memory_space<vmem>>, vector<32x128xf32>
    %7 = arith.truncf %6 : vector<32x128xf32> to vector<32x128xbf16>
    %cst = arith.constant dense<0.000000e+00> : vector<16x128xf32>
    %8 = tpu.matmul %5, %7, %cst {dimension_numbers = #tpu.dot_dimension_numbers<[1], [0], [0], [1], [0, 0, 1, 1], [], []>} : vector<16x32xbf16>, vector<32x128xbf16>, vector<16x128xf32> -> vector<16x128xf32>
    %9 = arith.addf %3, %8 : vector<16x128xf32>
    %c0_6 = arith.constant 0 : index
    %c0_7 = arith.constant 0 : index
    %10 = vector.load %arg7[%c0_6, %c0_7] : memref<16x128xf32, #tpu.memory_space<vmem>>, vector<16x128xf32>
    tpu.vector_store %arg7[%c0_6, %c0_7], %9 {strides = array<i32>} : memref<16x128xf32, #tpu.memory_space<vmem>>, vector<16x128xf32>,
    %c0_i32_8 = arith.constant 0 : i32
    %11 = arith.cmpi eq, %arg2, %c0_i32_8 : i32
    %12 = arith.extui %11 : i1 to i32
    %c0_i32_9 = arith.constant 0 : i32
    %13 = arith.cmpi ne, %12, %c0_i32_9 : i32
    scf.if %13 {
      %c0_10 = arith.constant 0 : index
      %c0_11 = arith.constant 0 : index
      %14 = vector.load %arg7[%c0_10, %c0_11] : memref<16x128xf32, #tpu.memory_space<vmem>>, vector<16x128xf32>
      %c0_12 = arith.constant 0 : index
      %c0_13 = arith.constant 0 : index
      %15 = vector.load %arg5[%c0_12, %c0_13] : memref<1x128xf32, #tpu.memory_space<vmem>>, vector<1x128xf32>
      %16 = vector.broadcast %15 : vector<1x128xf32> to vector<16x128xf32>
      %17 = arith.addf %14, %16 : vector<16x128xf32>
      %cst_14 = arith.constant 5.000000e-01 : f32
      %18 = vector.broadcast %cst_14 : f32 to vector<16x128xf32>
      %19 = arith.mulf %18, %17 : vector<16x128xf32>
      %cst_15 = arith.constant 4.471500e-02 : f32
      %20 = vector.broadcast %cst_15 : f32 to vector<16x128xf32>
      %21 = arith.mulf %20, %17 : vector<16x128xf32>
      %22 = arith.mulf %21, %17 : vector<16x128xf32>
      %23 = arith.mulf %22, %17 : vector<16x128xf32>
      %24 = arith.addf %17, %23 : vector<16x128xf32>
      %cst_16 = arith.constant 0.797884583 : f32
      %25 = vector.broadcast %cst_16 : f32 to vector<16x128xf32>
      %26 = arith.mulf %25, %24 : vector<16x128xf32>
      %27 = math.tanh %26 : vector<16x128xf32>
      %cst_17 = arith.constant 1.000000e+00 : f32
      %28 = vector.broadcast %cst_17 : f32 to vector<16x128xf32>
      %29 = arith.addf %28, %27 : vector<16x128xf32>
      %30 = arith.mulf %19, %29 : vector<16x128xf32>
      %c0_18 = arith.constant 0 : index
      %c0_19 = arith.constant 0 : index
      %31 = vector.load %arg6[%c0_18, %c0_19] : memref<16x128xf32, #tpu.memory_space<vmem>>, vector<16x128xf32>
      tpu.vector_store %arg6[%c0_18, %c0_19], %30 {strides = array<i32>} : memref<16x128xf32, #tpu.memory_space<vmem>>, vector<16x128xf32>,
    } else {
    }
    return
  }
  func.func @transform_0(%arg0: i32, %arg1: i32, %arg2: i32) -> (i32, i32) {
    %c0_i32 = arith.constant 0 : i32
    return %arg0, %arg2 : i32, i32
  }
  func.func @transform_1(%arg0: i32, %arg1: i32, %arg2: i32) -> (i32, i32) {
    %c0_i32 = arith.constant 0 : i32
    return %arg2, %arg1 : i32, i32
  }
  func.func @transform_2(%arg0: i32, %arg1: i32, %arg2: i32) -> (i32, i32) {
    %c0_i32 = arith.constant 0 : i32
    %c0_i32_0 = arith.constant 0 : i32
    return %c0_i32, %arg1 : i32, i32
  }
  func.func @transform_3(%arg0: i32, %arg1: i32, %arg2: i32) -> (i32, i32) {
    %c0_i32 = arith.constant 0 : i32
    return %arg0, %arg1 : i32, i32
  }
}

module attributes {stable_mosaic.version = 11 : i64} {
  func.func @_linear_kernel(%arg0: i32, %arg1: i32, %arg2: i32, %arg3: memref<16x128xf32, #tpu.memory_space<vmem>>, %arg4: memref<128x32xf32, #tpu.memory_space<vmem>>, %arg5: memref<1x32xf32, #tpu.memory_space<vmem>>, %arg6: memref<16x32xf32, #tpu.memory_space<vmem>>, %arg7: memref<16x32xf32, #tpu.memory_space<vmem>>, %arg8: memref<16x32xf32, #tpu.memory_space<vmem>>) attributes {dimension_semantics = [#tpu.dimension_semantics<parallel>, #tpu.dimension_semantics<parallel>, #tpu.dimension_semantics<arbitrary>], iteration_bounds = array<i64: 1, 1, 1>, scalar_prefetch = 0 : i64, scratch_operands = 1 : i64, tpu.core_type = #tpu.core_type<tc>, window_params = [{transform_indices = @transform_0, window_bounds = array<i64: 16, 128>}, {transform_indices = @transform_1, window_bounds = array<i64: 128, 32>}, {transform_indices = @transform_2, window_bounds = array<i64: 1, 32>}, {transform_indices = @transform_3, window_bounds = array<i64: 16, 32>}, {transform_indices = @transform_4, window_bounds = array<i64: 16, 32>}]} {
    %c0_i32 = arith.constant 0 : i32
    %0 = arith.cmpi eq, %arg2, %c0_i32 : i32
    %1 = arith.extui %0 : i1 to i32
    %c0_i32_0 = arith.constant 0 : i32
    %2 = arith.cmpi ne, %1, %c0_i32_0 : i32
    scf.if %2 {
      %cst_10 = arith.constant 0.000000e+00 : f32
      %14 = vector.broadcast %cst_10 : f32 to vector<16x32xf32>
      %c0_11 = arith.constant 0 : index
      %c0_12 = arith.constant 0 : index
      %15 = vector.load %arg8[%c0_11, %c0_12] : memref<16x32xf32, #tpu.memory_space<vmem>>, vector<16x32xf32>
      tpu.vector_store %arg8[%c0_11, %c0_12], %14 {strides = array<i32>} : memref<16x32xf32, #tpu.memory_space<vmem>>, vector<16x32xf32>,
    } else {
    }
    %c0 = arith.constant 0 : index
    %c0_1 = arith.constant 0 : index
    %3 = vector.load %arg8[%c0, %c0_1] : memref<16x32xf32, #tpu.memory_space<vmem>>, vector<16x32xf32>
    %c0_2 = arith.constant 0 : index
    %c0_3 = arith.constant 0 : index
    %4 = vector.load %arg3[%c0_2, %c0_3] : memref<16x128xf32, #tpu.memory_space<vmem>>, vector<16x128xf32>
    %5 = arith.truncf %4 : vector<16x128xf32> to vector<16x128xbf16>
    %c0_4 = arith.constant 0 : index
    %c0_5 = arith.constant 0 : index
    %6 = vector.load %arg4[%c0_4, %c0_5] : memref<128x32xf32, #tpu.memory_space<vmem>>, vector<128x32xf32>
    %7 = arith.truncf %6 : vector<128x32xf32> to vector<128x32xbf16>
    %cst = arith.constant dense<0.000000e+00> : vector<16x32xf32>
    %8 = tpu.matmul %5, %7, %cst {dimension_numbers = #tpu.dot_dimension_numbers<[1], [0], [0], [1], [0, 0, 1, 1], [], []>} : vector<16x128xbf16>, vector<128x32xbf16>, vector<16x32xf32> -> vector<16x32xf32>
    %9 = arith.addf %3, %8 : vector<16x32xf32>
    %c0_6 = arith.constant 0 : index
    %c0_7 = arith.constant 0 : index
    %10 = vector.load %arg8[%c0_6, %c0_7] : memref<16x32xf32, #tpu.memory_space<vmem>>, vector<16x32xf32>
    tpu.vector_store %arg8[%c0_6, %c0_7], %9 {strides = array<i32>} : memref<16x32xf32, #tpu.memory_space<vmem>>, vector<16x32xf32>,
    %c0_i32_8 = arith.constant 0 : i32
    %11 = arith.cmpi eq, %arg2, %c0_i32_8 : i32
    %12 = arith.extui %11 : i1 to i32
    %c0_i32_9 = arith.constant 0 : i32
    %13 = arith.cmpi ne, %12, %c0_i32_9 : i32
    scf.if %13 {
      %c0_10 = arith.constant 0 : index
      %c0_11 = arith.constant 0 : index
      %14 = vector.load %arg8[%c0_10, %c0_11] : memref<16x32xf32, #tpu.memory_space<vmem>>, vector<16x32xf32>
      %c0_12 = arith.constant 0 : index
      %c0_13 = arith.constant 0 : index
      %15 = vector.load %arg5[%c0_12, %c0_13] : memref<1x32xf32, #tpu.memory_space<vmem>>, vector<1x32xf32>
      %16 = vector.broadcast %15 : vector<1x32xf32> to vector<16x32xf32>
      %17 = arith.addf %14, %16 : vector<16x32xf32>
      %c0_14 = arith.constant 0 : index
      %c0_15 = arith.constant 0 : index
      %18 = vector.load %arg6[%c0_14, %c0_15] : memref<16x32xf32, #tpu.memory_space<vmem>>, vector<16x32xf32>
      %19 = arith.addf %17, %18 : vector<16x32xf32>
      %c0_16 = arith.constant 0 : index
      %c0_17 = arith.constant 0 : index
      %20 = vector.load %arg7[%c0_16, %c0_17] : memref<16x32xf32, #tpu.memory_space<vmem>>, vector<16x32xf32>
      tpu.vector_store %arg7[%c0_16, %c0_17], %19 {strides = array<i32>} : memref<16x32xf32, #tpu.memory_space<vmem>>, vector<16x32xf32>,
    } else {
    }
    return
  }
  func.func @transform_0(%arg0: i32, %arg1: i32, %arg2: i32) -> (i32, i32) {
    %c0_i32 = arith.constant 0 : i32
    return %arg0, %arg2 : i32, i32
  }
  func.func @transform_1(%arg0: i32, %arg1: i32, %arg2: i32) -> (i32, i32) {
    %c0_i32 = arith.constant 0 : i32
    return %arg2, %arg1 : i32, i32
  }
  func.func @transform_2(%arg0: i32, %arg1: i32, %arg2: i32) -> (i32, i32) {
    %c0_i32 = arith.constant 0 : i32
    %c0_i32_0 = arith.constant 0 : i32
    return %c0_i32, %arg1 : i32, i32
  }
  func.func @transform_3(%arg0: i32, %arg1: i32, %arg2: i32) -> (i32, i32) {
    %c0_i32 = arith.constant 0 : i32
    return %arg0, %arg1 : i32, i32
  }
  func.func @transform_4(%arg0: i32, %arg1: i32, %arg2: i32) -> (i32, i32) {
    %c0_i32 = arith.constant 0 : i32
    return %arg0, %arg1 : i32, i32
  }
}

module attributes {stable_mosaic.version = 11 : i64} {
  func.func @_linear_kernel(%arg0: i32, %arg1: i32, %arg2: i32, %arg3: memref<16x32xf32, #tpu.memory_space<vmem>>, %arg4: memref<32x64xf32, #tpu.memory_space<vmem>>, %arg5: memref<16x64xf32, #tpu.memory_space<vmem>>, %arg6: memref<16x64xf32, #tpu.memory_space<vmem>>) attributes {dimension_semantics = [#tpu.dimension_semantics<parallel>, #tpu.dimension_semantics<parallel>, #tpu.dimension_semantics<arbitrary>], iteration_bounds = array<i64: 1, 1, 1>, scalar_prefetch = 0 : i64, scratch_operands = 1 : i64, tpu.core_type = #tpu.core_type<tc>, window_params = [{transform_indices = @transform_0, window_bounds = array<i64: 16, 32>}, {transform_indices = @transform_1, window_bounds = array<i64: 32, 64>}, {transform_indices = @transform_2, window_bounds = array<i64: 16, 64>}]} {
    %c0_i32 = arith.constant 0 : i32
    %0 = arith.cmpi eq, %arg2, %c0_i32 : i32
    %1 = arith.extui %0 : i1 to i32
    %c0_i32_0 = arith.constant 0 : i32
    %2 = arith.cmpi ne, %1, %c0_i32_0 : i32
    scf.if %2 {
      %cst_10 = arith.constant 0.000000e+00 : f32
      %14 = vector.broadcast %cst_10 : f32 to vector<16x64xf32>
      %c0_11 = arith.constant 0 : index
      %c0_12 = arith.constant 0 : index
      %15 = vector.load %arg6[%c0_11, %c0_12] : memref<16x64xf32, #tpu.memory_space<vmem>>, vector<16x64xf32>
      tpu.vector_store %arg6[%c0_11, %c0_12], %14 {strides = array<i32>} : memref<16x64xf32, #tpu.memory_space<vmem>>, vector<16x64xf32>,
    } else {
    }
    %c0 = arith.constant 0 : index
    %c0_1 = arith.constant 0 : index
    %3 = vector.load %arg6[%c0, %c0_1] : memref<16x64xf32, #tpu.memory_space<vmem>>, vector<16x64xf32>
    %c0_2 = arith.constant 0 : index
    %c0_3 = arith.constant 0 : index
    %4 = vector.load %arg3[%c0_2, %c0_3] : memref<16x32xf32, #tpu.memory_space<vmem>>, vector<16x32xf32>
    %5 = arith.truncf %4 : vector<16x32xf32> to vector<16x32xbf16>
    %c0_4 = arith.constant 0 : index
    %c0_5 = arith.constant 0 : index
    %6 = vector.load %arg4[%c0_4, %c0_5] : memref<32x64xf32, #tpu.memory_space<vmem>>, vector<32x64xf32>
    %7 = arith.truncf %6 : vector<32x64xf32> to vector<32x64xbf16>
    %cst = arith.constant dense<0.000000e+00> : vector<16x64xf32>
    %8 = tpu.matmul %5, %7, %cst {dimension_numbers = #tpu.dot_dimension_numbers<[1], [0], [0], [1], [0, 0, 1, 1], [], []>} : vector<16x32xbf16>, vector<32x64xbf16>, vector<16x64xf32> -> vector<16x64xf32>
    %9 = arith.addf %3, %8 : vector<16x64xf32>
    %c0_6 = arith.constant 0 : index
    %c0_7 = arith.constant 0 : index
    %10 = vector.load %arg6[%c0_6, %c0_7] : memref<16x64xf32, #tpu.memory_space<vmem>>, vector<16x64xf32>
    tpu.vector_store %arg6[%c0_6, %c0_7], %9 {strides = array<i32>} : memref<16x64xf32, #tpu.memory_space<vmem>>, vector<16x64xf32>,
    %c0_i32_8 = arith.constant 0 : i32
    %11 = arith.cmpi eq, %arg2, %c0_i32_8 : i32
    %12 = arith.extui %11 : i1 to i32
    %c0_i32_9 = arith.constant 0 : i32
    %13 = arith.cmpi ne, %12, %c0_i32_9 : i32
    scf.if %13 {
      %c0_10 = arith.constant 0 : index
      %c0_11 = arith.constant 0 : index
      %14 = vector.load %arg6[%c0_10, %c0_11] : memref<16x64xf32, #tpu.memory_space<vmem>>, vector<16x64xf32>
      %c0_12 = arith.constant 0 : index
      %c0_13 = arith.constant 0 : index
      %15 = vector.load %arg5[%c0_12, %c0_13] : memref<16x64xf32, #tpu.memory_space<vmem>>, vector<16x64xf32>
      tpu.vector_store %arg5[%c0_12, %c0_13], %14 {strides = array<i32>} : memref<16x64xf32, #tpu.memory_space<vmem>>, vector<16x64xf32>,
    } else {
    }
    return
  }
  func.func @transform_0(%arg0: i32, %arg1: i32, %arg2: i32) -> (i32, i32) {
    %c0_i32 = arith.constant 0 : i32
    return %arg0, %arg2 : i32, i32
  }
  func.func @transform_1(%arg0: i32, %arg1: i32, %arg2: i32) -> (i32, i32) {
    %c0_i32 = arith.constant 0 : i32
    return %arg2, %arg1 : i32, i32
  }
  func.func @transform_2(%arg0: i32, %arg1: i32, %arg2: i32) -> (i32, i32) {
    %c0_i32 = arith.constant 0 : i32
    return %arg0, %arg1 : i32, i32
  }
}

</mosaic_0001>

<llo_original>
// kernel: asr_whisper_forward.60
$region0: #{asr_whisper_forward.60}
  #allocation0 [shape = 'u32[]', space=smem, size = 0x4, offset = 0x4, fixed_abs, tag = 'smem constant byte address 0x4 - core index']
  #allocation1 [shape = 'u32[72,128]{1,0:T(1,128)}', space=vmem, size = 0x9000, scoped, tag = 'internal scratch']
  %s0 = inlined_call_operand.vmem [shape: f32[16,32], index: 0, kind: input, shape index: {}]
  %s1 = inlined_call_operand.vmem [shape: f32[1,32], index: 1, kind: input, shape index: {}]
  %s2 = inlined_call_operand.vmem [shape: f32[1,32], index: 2, kind: input, shape index: {}]
  %s3 = inlined_call_operand.vmem [shape: f32[16,32], index: 3, kind: output, shape index: {}]
  %s4 = sld [smem:[#allocation0]]
  $region22: #{asr_whisper_forward.60} parent=0
    _
  %s6 = ssub.s32 1, %s4
  %s7 = scalar_select 0, %s6, %s4
  // Predicated region
  $region2: #{asr_whisper_forward.60} parent=0 // pred_check
    _
  $region3: #{asr_whisper_forward.60} parent=0 // pred_check_branch
    %9 = sbr.rel (0) target = $region5
  $region4: #{asr_whisper_forward.60} parent=0 // pred_region
    _
  $region5: #{asr_whisper_forward.60} parent=0 // pred_fallthru
    _
  // Predicated region
  $region6: #{asr_whisper_forward.60} parent=0 // pred_check
    _
  $region7: #{asr_whisper_forward.60} parent=0 // pred_check_branch
    %11 = sbr.rel (0) target = $region9
  $region8: #{asr_whisper_forward.60} parent=0 // pred_region
    _
  $region9: #{asr_whisper_forward.60} parent=0 // pred_fallthru
    _
  // Predicated region
  $region10: #{asr_whisper_forward.60} parent=0 // pred_check
    _
  $region11: #{asr_whisper_forward.60} parent=0 // pred_check_branch
    %13 = sbr.rel (0) target = $region13
  $region12: #{asr_whisper_forward.60} parent=0 // pred_region
    _
  $region13: #{asr_whisper_forward.60} parent=0 // pred_fallthru
    _
  %v14 = vld [vmem:[%s0] sm:$0xff]
  %v15 = vld [vmem:[%s0 + $0x8] sm:$0xff]
  %vm16 = vcmask 261120
  %v17 = vsel %vm16, %v14, 0.0
  %18 = vadd.xlane.f32.xlu0 %v17
  %v19 = vpop.xlane.xlu0 %18
  %v20 = vsel %vm16, %v15, 0.0
  %21 = vadd.xlane.f32.xlu0 %v20
  %v22 = vpop.xlane.xlu0 %21
  %v23 = vrcp.pop 32.0
  %v24 = vmul.f32 32.0, %v23
  %v25 = vsub.f32 1.0, %v24
  %v26 = vmul.f32 %v23, %v25
  %v27 = vadd.f32 %v23, %v26
  %vm28 = vweird.f32 %v23
  %v29 = vsel %vm28, %v23, %v27
  %v30 = vmul.f32 %v19, %v29
  %v31 = vmul.f32 %v22, %v29
  %v32 = vsub.f32 %v14, %v30
  %v33 = vsub.f32 %v15, %v31
  %v34 = vmul.f32 %v32, %v32
  %v35 = vmul.f32 %v33, %v33
  %v36 = vsel %vm16, %v34, 0.0
  %37 = vadd.xlane.f32.xlu0 %v36
  %v38 = vpop.xlane.xlu0 %37
  %v39 = vsel %vm16, %v35, 0.0
  %40 = vadd.xlane.f32.xlu0 %v39
  %v41 = vpop.xlane.xlu0 %40
  %v42 = vmul.f32 %v38, %v29
  %v43 = vmul.f32 %v41, %v29
  %v44 = vadd.f32 %v42, 1e-05
  %v45 = vadd.f32 %v43, 1e-05
  %v46 = vrsqrt.pop %v44
  %v47 = vmul.f32 %v46, %v44
  %v48 = vmul.f32 %v47, %v46
  %v49 = vmul.f32 0.5, %v48
  %v50 = vsub.f32 1.5, %v49
  %v51 = vmul.f32 %v46, %v50
  %vm52 = vweird.f32 %v44
  %vm53 = vweird.f32 %v46
  %vm54 = vmor %vm52, %vm53
  %v55 = vsel %vm54, %v46, %v51
  %v56 = vrsqrt.pop %v45
  %v57 = vmul.f32 %v56, %v45
  %v58 = vmul.f32 %v57, %v56
  %v59 = vmul.f32 0.5, %v58
  %v60 = vsub.f32 1.5, %v59
  %v61 = vmul.f32 %v56, %v60
  %vm62 = vweird.f32 %v45
  %vm63 = vweird.f32 %v56
  %vm64 = vmor %vm62, %vm63
  %v65 = vsel %vm64, %v56, %v61
  %v66 = vmul.f32 %v32, %v55
  %v67 = vmul.f32 %v33, %v65
  %v68 = vld [vmem:[%s1] sm:$0x1]
  %v70 = vperm.slane %v68, 0
  %v72 = vmul.f32 %v66, %v70
  %v73 = vmul.f32 %v67, %v70
  %v74 = vld [vmem:[%s2] sm:$0x1]
  %v76 = vperm.slane %v74, 0
  %v78 = vadd.f32 %v72, %v76
  %v79 = vadd.f32 %v73, %v76
  %80 = vst.msk [vmem:[%s3] sm:$0xff] %vm16, %v78
  %81 = vst.msk [vmem:[%s3 + $0x8] sm:$0xff] %vm16, %v79
  // Predicated region
  $region14: #{asr_whisper_forward.60} parent=0 // pred_check
    _
  $region15: #{asr_whisper_forward.60} parent=0 // pred_check_branch
    %83 = sbr.rel (0) target = $region17
  $region16: #{asr_whisper_forward.60} parent=0 // pred_region
    _
  $region17: #{asr_whisper_forward.60} parent=0 // pred_fallthru
    _
  // Predicated region
  $region18: #{asr_whisper_forward.60} parent=0 // pred_check
    _
  $region19: #{asr_whisper_forward.60} parent=0 // pred_check_branch
    %85 = sbr.rel (0) target = $region21
  $region20: #{asr_whisper_forward.60} parent=0 // pred_region
    _
  $region21: #{asr_whisper_forward.60} parent=0 // pred_fallthru
    _

// kernel: asr_whisper_forward.61
$region0: #{asr_whisper_forward.61}
  #allocation0 [shape = 'u32[]', space=smem, size = 0x4, offset = 0x4, fixed_abs, tag = 'smem constant byte address 0x4 - core index']
  #allocation1 [shape = 'u32[72,128]{1,0:T(1,128)}', space=vmem, size = 0x9000, scoped, tag = 'internal scratch']
  #allocation2 [shape = 'f32[16,96]{1,0:T(8,128)}', space=vmem, size = 0x2000, scoped, tag = 'scratch operand']
  %s0 = inlined_call_operand.vmem [shape: f32[16,32], index: 0, kind: input, shape index: {}]
  %s1 = inlined_call_operand.vmem [shape: f32[32,96], index: 1, kind: input, shape index: {}]
  %s2 = inlined_call_operand.vmem [shape: f32[1,96], index: 2, kind: input, shape index: {}]
  %s3 = inlined_call_operand.vmem [shape: f32[16,96], index: 3, kind: output, shape index: {}]
  %s4 = sld [smem:[#allocation0]]
  $region30: #{asr_whisper_forward.61} parent=0
    _
  %s6 = ssub.s32 1, %s4
  %s7 = scalar_select 0, %s6, %s4
  // Predicated region
  $region2: #{asr_whisper_forward.61} parent=0 // pred_check
    _
  $region3: #{asr_whisper_forward.61} parent=0 // pred_check_branch
    %9 = sbr.rel (0) target = $region5
  $region4: #{asr_whisper_forward.61} parent=0 // pred_region
    _
  $region5: #{asr_whisper_forward.61} parent=0 // pred_fallthru
    _
  // Predicated region
  $region6: #{asr_whisper_forward.61} parent=0 // pred_check
    _
  $region7: #{asr_whisper_forward.61} parent=0 // pred_check_branch
    %11 = sbr.rel (0) target = $region9
  $region8: #{asr_whisper_forward.61} parent=0 // pred_region
    _
  $region9: #{asr_whisper_forward.61} parent=0 // pred_fallthru
    _
  // Predicated region
  $region10: #{asr_whisper_forward.61} parent=0 // pred_check
    _
  $region11: #{asr_whisper_forward.61} parent=0 // pred_check_branch
    %13 = sbr.rel (0) target = $region13
  $region12: #{asr_whisper_forward.61} parent=0 // pred_region
    _
  $region13: #{asr_whisper_forward.61} parent=0 // pred_fallthru
    _
  %p15 = scmp.eq.s32.totalorder 0, 0
  // Predicated region
  $region14: #{asr_whisper_forward.61} parent=0 // pred_check
    %p16 = pneg %p15
  $region15: #{asr_whisper_forward.61} parent=0 // pred_check_branch
    %18 = sbr.rel (%p16) target = $region17
  $region16: #{asr_whisper_forward.61} parent=0 // pred_region
    %vm19 = vcmask 785408
    %20 = vst.msk [vmem:[#allocation2] sm:$0xff] %vm19, 0.0
    %21 = vst.msk [vmem:[#allocation2 + $0x8] sm:$0xff] %vm19, 0.0
  $region17: #{asr_whisper_forward.61} parent=0 // pred_fallthru
    _
  %v22 = vld [vmem:[#allocation2] sm:$0xff]
  %v23 = vld [vmem:[#allocation2 + $0x8] sm:$0xff]
  %v24 = vld [vmem:[%s0] sm:$0xff]
  %v25 = vld [vmem:[%s0 + $0x8] sm:$0xff]
  %v26 = vpack.c.bf16 %v25, %v24
  %v27 = vld [vmem:[%s1] sm:$0xff]
  %v28 = vld [vmem:[%s1 + $0x8] sm:$0xff]
  %v29 = vld [vmem:[%s1 + $0x10] sm:$0xff]
  %v30 = vld [vmem:[%s1 + $0x18] sm:$0xff]
  %v31 = vpack.c.bf16 %v28, %v27
  %v32 = vpack.c.bf16 %v30, %v29
  %vm33 = vcmask 261120
  %v35 = vsel %vm33, %v26, 0
  %37 = vmatpush.bf16.msra.mxu0 0
  %38 = vmatpush.bf16.msra.mxu0 0
  %39 = vmatpush.bf16.msra.mxu0 0
  %40 = vmatpush.bf16.msra.mxu0 0
  %41 = vmatpush.bf16.msra.mxu0 0
  %42 = vmatpush.bf16.msra.mxu0 0
  %43 = vmatpush.bf16.msra.mxu0 %v32
  %44 = vmatpush.bf16.msra.mxu0 %v31
  %45 = vmatmul.bf16.gmra.mxu0 %v35
  %v46 = vpop.f32.mrf.mxu0
  %v47 = vadd.f32 0.0, %v46
  %v48 = vpop.f32.mrf.mxu0
  %v49 = vadd.f32 0.0, %v48
  %50 = vdwg.mxu0
  %v51 = vadd.f32 %v22, %v47
  %v52 = vadd.f32 %v23, %v49
  %vm53 = vcmask 785408
  %54 = vst.msk [vmem:[#allocation2] sm:$0xff] %vm53, %v51
  %55 = vst.msk [vmem:[#allocation2 + $0x8] sm:$0xff] %vm53, %v52
  // Predicated region
  $region18: #{asr_whisper_forward.61} parent=0 // pred_check
    %p56 = pneg %p15
  $region19: #{asr_whisper_forward.61} parent=0 // pred_check_branch
    %58 = sbr.rel (%p56) target = $region21
  $region20: #{asr_whisper_forward.61} parent=0 // pred_region
    %v59 = vld [vmem:[#allocation2] sm:$0xff]
    %v60 = vld [vmem:[#allocation2 + $0x8] sm:$0xff]
    %v61 = vld [vmem:[%s2] sm:$0x1]
    %v63 = vperm.slane %v61, 0
    %v65 = vadd.f32 %v59, %v63
    %v66 = vadd.f32 %v60, %v63
    %67 = vst.msk [vmem:[%s3] sm:$0xff] %vm53, %v65
    %68 = vst.msk [vmem:[%s3 + $0x8] sm:$0xff] %vm53, %v66
  $region21: #{asr_whisper_forward.61} parent=0 // pred_fallthru
    _
  // Predicated region
  $region22: #{asr_whisper_forward.61} parent=0 // pred_check
    _
  $region23: #{asr_whisper_forward.61} parent=0 // pred_check_branch
    %70 = sbr.rel (0) target = $region25
  $region24: #{asr_whisper_forward.61} parent=0 // pred_region
    _
  $region25: #{asr_whisper_forward.61} parent=0 // pred_fallthru
    _
  // Predicated region
  $region26: #{asr_whisper_forward.61} parent=0 // pred_check
    _
  $region27: #{asr_whisper_forward.61} parent=0 // pred_check_branch
    %72 = sbr.rel (0) target = $region29
  $region28: #{asr_whisper_forward.61} parent=0 // pred_region
    _
  $region29: #{asr_whisper_forward.61} parent=0 // pred_fallthru
    _

// kernel: asr_whisper_forward.63
$region0: #{asr_whisper_forward.63}
  #allocation0 [shape = 'u32[]', space=smem, size = 0x4, offset = 0x4, fixed_abs, tag = 'smem constant byte address 0x4 - core index']
  #allocation1 [shape = 'u32[72,128]{1,0:T(1,128)}', space=vmem, size = 0x9000, scoped, tag = 'internal scratch']
  #allocation2 [shape = 'f32[16,32]{1,0:T(8,128)}', space=vmem, size = 0x2000, scoped, tag = 'scratch operand']
  %s0 = inlined_call_operand.vmem [shape: f32[16,32], index: 0, kind: input, shape index: {}]
  %s1 = inlined_call_operand.vmem [shape: f32[32,32], index: 1, kind: input, shape index: {}]
  %s2 = inlined_call_operand.vmem [shape: f32[1,32], index: 2, kind: input, shape index: {}]
  %s3 = inlined_call_operand.vmem [shape: f32[16,32], index: 3, kind: input, shape index: {}]
  %s4 = inlined_call_operand.vmem [shape: f32[16,32], index: 4, kind: output, shape index: {}]
  %s5 = sld [smem:[#allocation0]]
  $region34: #{asr_whisper_forward.63} parent=0
    _
  %s7 = ssub.s32 1, %s5
  %s8 = scalar_select 0, %s7, %s5
  // Predicated region
  $region2: #{asr_whisper_forward.63} parent=0 // pred_check
    _
  $region3: #{asr_whisper_forward.63} parent=0 // pred_check_branch
    %10 = sbr.rel (0) target = $region5
  $region4: #{asr_whisper_forward.63} parent=0 // pred_region
    _
  $region5: #{asr_whisper_forward.63} parent=0 // pred_fallthru
    _
  // Predicated region
  $region6: #{asr_whisper_forward.63} parent=0 // pred_check
    _
  $region7: #{asr_whisper_forward.63} parent=0 // pred_check_branch
    %12 = sbr.rel (0) target = $region9
  $region8: #{asr_whisper_forward.63} parent=0 // pred_region
    _
  $region9: #{asr_whisper_forward.63} parent=0 // pred_fallthru
    _
  // Predicated region
  $region10: #{asr_whisper_forward.63} parent=0 // pred_check
    _
  $region11: #{asr_whisper_forward.63} parent=0 // pred_check_branch
    %14 = sbr.rel (0) target = $region13
  $region12: #{asr_whisper_forward.63} parent=0 // pred_region
    _
  $region13: #{asr_whisper_forward.63} parent=0 // pred_fallthru
    _
  // Predicated region
  $region14: #{asr_whisper_forward.63} parent=0 // pred_check
    _
  $region15: #{asr_whisper_forward.63} parent=0 // pred_check_branch
    %16 = sbr.rel (0) target = $region17
  $region16: #{asr_whisper_forward.63} parent=0 // pred_region
    _
  $region17: #{asr_whisper_forward.63} parent=0 // pred_fallthru
    _
  %p18 = scmp.eq.s32.totalorder 0, 0
  // Predicated region
  $region18: #{asr_whisper_forward.63} parent=0 // pred_check
    %p19 = pneg %p18
  $region19: #{asr_whisper_forward.63} parent=0 // pred_check_branch
    %21 = sbr.rel (%p19) target = $region21
  $region20: #{asr_whisper_forward.63} parent=0 // pred_region
    %vm22 = vcmask 261120
    %23 = vst.msk [vmem:[#allocation2] sm:$0xff] %vm22, 0.0
    %24 = vst.msk [vmem:[#allocation2 + $0x8] sm:$0xff] %vm22, 0.0
  $region21: #{asr_whisper_forward.63} parent=0 // pred_fallthru
    _
  %v25 = vld [vmem:[#allocation2] sm:$0xff]
  %v26 = vld [vmem:[#allocation2 + $0x8] sm:$0xff]
  %v27 = vld [vmem:[%s0] sm:$0xff]
  %v28 = vld [vmem:[%s0 + $0x8] sm:$0xff]
  %v29 = vpack.c.bf16 %v28, %v27
  %v30 = vld [vmem:[%s1] sm:$0xff]
  %v31 = vld [vmem:[%s1 + $0x8] sm:$0xff]
  %v32 = vld [vmem:[%s1 + $0x10] sm:$0xff]
  %v33 = vld [vmem:[%s1 + $0x18] sm:$0xff]
  %v34 = vpack.c.bf16 %v31, %v30
  %v35 = vpack.c.bf16 %v33, %v32
  %vm36 = vcmask 261120
  %v38 = vsel %vm36, %v29, 0
  %40 = vmatpush.bf16.msra.mxu0 0
  %41 = vmatpush.bf16.msra.mxu0 0
  %42 = vmatpush.bf16.msra.mxu0 0
  %43 = vmatpush.bf16.msra.mxu0 0
  %44 = vmatpush.bf16.msra.mxu0 0
  %45 = vmatpush.bf16.msra.mxu0 0
  %46 = vmatpush.bf16.msra.mxu0 %v35
  %47 = vmatpush.bf16.msra.mxu0 %v34
  %48 = vmatmul.bf16.gmra.mxu0 %v38
  %v49 = vpop.f32.mrf.mxu0
  %v50 = vadd.f32 0.0, %v49
  %v51 = vpop.f32.mrf.mxu0
  %v52 = vadd.f32 0.0, %v51
  %53 = vdwg.mxu0
  %v54 = vadd.f32 %v25, %v50
  %v55 = vadd.f32 %v26, %v52
  %56 = vst.msk [vmem:[#allocation2] sm:$0xff] %vm36, %v54
  %57 = vst.msk [vmem:[#allocation2 + $0x8] sm:$0xff] %vm36, %v55
  // Predicated region
  $region22: #{asr_whisper_forward.63} parent=0 // pred_check
    %p58 = pneg %p18
  $region23: #{asr_whisper_forward.63} parent=0 // pred_check_branch
    %60 = sbr.rel (%p58) target = $region25
  $region24: #{asr_whisper_forward.63} parent=0 // pred_region
    %v61 = vld [vmem:[#allocation2] sm:$0xff]
    %v62 = vld [vmem:[#allocation2 + $0x8] sm:$0xff]
    %v63 = vld [vmem:[%s2] sm:$0x1]
    %v65 = vperm.slane %v63, 0
    %v67 = vadd.f32 %v61, %v65
    %v68 = vadd.f32 %v62, %v65
    %v69 = vld [vmem:[%s3] sm:$0xff]
    %v70 = vld [vmem:[%s3 + $0x8] sm:$0xff]
    %v71 = vadd.f32 %v67, %v69
    %v72 = vadd.f32 %v68, %v70
    %73 = vst.msk [vmem:[%s4] sm:$0xff] %vm36, %v71
    %74 = vst.msk [vmem:[%s4 + $0x8] sm:$0xff] %vm36, %v72
  $region25: #{asr_whisper_forward.63} parent=0 // pred_fallthru
    _
  // Predicated region
  $region26: #{asr_whisper_forward.63} parent=0 // pred_check
    _
  $region27: #{asr_whisper_forward.63} parent=0 // pred_check_branch
    %76 = sbr.rel (0) target = $region29
  $region28: #{asr_whisper_forward.63} parent=0 // pred_region
    _
  $region29: #{asr_whisper_forward.63} parent=0 // pred_fallthru
    _
  // Predicated region
  $region30: #{asr_whisper_forward.63} parent=0 // pred_check
    _
  $region31: #{asr_whisper_forward.63} parent=0 // pred_check_branch
    %78 = sbr.rel (0) target = $region33
  $region32: #{asr_whisper_forward.63} parent=0 // pred_region
    _
  $region33: #{asr_whisper_forward.63} parent=0 // pred_fallthru
    _

// kernel: asr_whisper_forward.62
$region0: #{asr_whisper_forward.62}
  #allocation0 [shape = 'u32[]', space=smem, size = 0x4, offset = 0x4, fixed_abs, tag = 'smem constant byte address 0x4 - core index']
  #allocation1 [shape = 'u32[72,128]{1,0:T(1,128)}', space=vmem, size = 0x9000, scoped, tag = 'internal scratch']
  #allocation2 [shape = 'f32[8,1]{1,0:T(8,128)}', space=vmem, size = 0x1000, scoped, tag = 'scratch operand']
  #allocation3 [shape = 'f32[8,1]{1,0:T(8,128)}', space=vmem, size = 0x1000, scoped, tag = 'scratch operand']
  #allocation4 [shape = 'f32[8,8]{1,0:T(8,128)}', space=vmem, size = 0x1000, scoped, tag = 'scratch operand']
  %s0 = inlined_call_operand.vmem [shape: f32[8,8,8], index: 0, kind: input, shape index: {}]
  %s1 = inlined_call_operand.vmem [shape: f32[8,8,8], index: 1, kind: input, shape index: {}]
  %s2 = inlined_call_operand.vmem [shape: f32[8,8,8], index: 2, kind: input, shape index: {}]
  %s3 = inlined_call_operand.vmem [shape: f32[8,8,8], index: 3, kind: output, shape index: {}]
  %s4 = sld [smem:[#allocation0]]
  $region53: #{asr_whisper_forward.62} parent=0
    _
  %s6 = ssub.s32 1, %s4
  %s7 = scalar_select 0, %s6, %s4
  loop: start=0, step=1, limit=10
  $region2: #{asr_whisper_forward.62} parent=0 // loop_pre_header
    _
  $region3: #{asr_whisper_forward.62} parent=0 // loop_header
    %s9 = sphi 0, %s13
    %p10 = scmp.ge.s32.totalorder %s9, 10
    %s16 = sphi 0, %s35
    %s17 = sphi 0, %s31
    %s18 = sphi 0, %s27
    %s19 = sphi 0, %s16
    %s20 = sphi 0, %s17
    %s21 = sphi 0, %s18
    %s22 = sphi 0, %s19
    %s23 = sphi 0, %s20
    %s24 = sphi 0, %s21
    %s40 = sphi 0, %s42
    %s43 = sphi 0, %s40
    %s44 = sphi 0, %s43
    %s60 = sphi 0, %s44
    %s68 = sphi 0, %s70
    %s71 = sphi 0, %s68
    %s72 = sphi 0, %s71
    %s88 = sphi 0, %s72
    %s96 = sphi 0, %s98
    %s99 = sphi 0, %s96
    %s100 = sphi 0, %s99
    %s116 = sphi 0, %s100
    %s124 = sphi 0, %s126
    %s127 = sphi 0, %s124
    %s128 = sphi 0, %s127
    %s144 = sphi 0, %s128
  $region4: #{asr_whisper_forward.62} parent=0 // loop_header_branch
    %12 = sbr.rel (%p10) target = $region8
  $region5: #{asr_whisper_forward.62} parent=0 // loop_body
    %s14 = ssub.s32 %s9, 1
    %s15 = ssub.s32 %s9, 2
    %s25 = sadd.s32 1, %s18
    %p26 = scmp.ge.s32.totalorder %s25, 1
    %s27 = scalar_select %p26, 0, %s25
    %s28 = sadd.s32 1, %s17
    %s29 = scalar_select %p26, %s28, %s17
    %p30 = scmp.ge.s32.totalorder %s29, 1
    %s31 = scalar_select %p30, 0, %s29
    %s32 = sadd.s32 1, %s16
    %s33 = scalar_select %p30, %s32, %s16
    %p34 = scmp.ge.s32.totalorder %s33, 8
    %s35 = scalar_select %p34, 0, %s33
    %s36 = ssub.s32 %s16, %s35
    %s37 = ssub.s32 %s17, %s31
    %s38 = sor.u32 %s36, %s37
    %p39 = scmp.eq.s32.totalorder %s38, 0
    %s41 = sadd.s32 %s40, 1
    %s42 = scalar_select %p39, %s40, %s41
    %p45 = pneg %p39
    %p46 = scmp.eq.s32.totalorder %s9, 7
    %p47 = por %p45, %p46
    %p48 = scmp.ne.s32.totalorder %s40, %s43
    %p49 = scmp.eq.s32.totalorder %s9, 0
    %p50 = por %p48, %p49
    %p51 = scmp.ne.s32.totalorder %s40, %s43
    %p52 = scmp.eq.s32.totalorder %s14, 7
    %p53 = por %p51, %p52
    %p54 = scmp.ne.s32.totalorder %s43, %s44
    %p55 = scmp.eq.s32.totalorder %s14, 0
    %p56 = por %p54, %p55
    %p57 = scmp.ne.s32.totalorder %s43, %s44
    %p58 = scmp.eq.s32.totalorder %s15, 7
    %p59 = por %p57, %p58
    %p61 = scmp.ne.s32.totalorder %s44, %s60
    %p62 = scmp.eq.s32.totalorder %s15, 0
    %p63 = por %p61, %p62
    %s64 = ssub.s32 %s16, %s35
    %s65 = ssub.s32 %s18, %s27
    %s66 = sor.u32 %s64, %s65
    %p67 = scmp.eq.s32.totalorder %s66, 0
    %s69 = sadd.s32 %s68, 1
    %s70 = scalar_select %p67, %s68, %s69
    %p73 = pneg %p67
    %p74 = scmp.eq.s32.totalorder %s9, 7
    %p75 = por %p73, %p74
    %p76 = scmp.ne.s32.totalorder %s68, %s71
    %p77 = scmp.eq.s32.totalorder %s9, 0
    %p78 = por %p76, %p77
    %p79 = scmp.ne.s32.totalorder %s68, %s71
    %p80 = scmp.eq.s32.totalorder %s14, 7
    %p81 = por %p79, %p80
    %p82 = scmp.ne.s32.totalorder %s71, %s72
    %p83 = scmp.eq.s32.totalorder %s14, 0
    %p84 = por %p82, %p83
    %p85 = scmp.ne.s32.totalorder %s71, %s72
    %p86 = scmp.eq.s32.totalorder %s15, 7
    %p87 = por %p85, %p86
    %p89 = scmp.ne.s32.totalorder %s72, %s88
    %p90 = scmp.eq.s32.totalorder %s15, 0
    %p91 = por %p89, %p90
    %s92 = ssub.s32 %s16, %s35
    %s93 = ssub.s32 %s18, %s27
    %s94 = sor.u32 %s92, %s93
    %p95 = scmp.eq.s32.totalorder %s94, 0
    %s97 = sadd.s32 %s96, 1
    %s98 = scalar_select %p95, %s96, %s97
    %p101 = pneg %p95
    %p102 = scmp.eq.s32.totalorder %s9, 7
    %p103 = por %p101, %p102
    %p104 = scmp.ne.s32.totalorder %s96, %s99
    %p105 = scmp.eq.s32.totalorder %s9, 0
    %p106 = por %p104, %p105
    %p107 = scmp.ne.s32.totalorder %s96, %s99
    %p108 = scmp.eq.s32.totalorder %s14, 7
    %p109 = por %p107, %p108
    %p110 = scmp.ne.s32.totalorder %s99, %s100
    %p111 = scmp.eq.s32.totalorder %s14, 0
    %p112 = por %p110, %p111
    %p113 = scmp.ne.s32.totalorder %s99, %s100
    %p114 = scmp.eq.s32.totalorder %s15, 7
    %p115 = por %p113, %p114
    %p117 = scmp.ne.s32.totalorder %s100, %s116
    %p118 = scmp.eq.s32.totalorder %s15, 0
    %p119 = por %p117, %p118
    %s120 = ssub.s32 %s16, %s35
    %s121 = ssub.s32 %s17, %s31
    %s122 = sor.u32 %s120, %s121
    %p123 = scmp.eq.s32.totalorder %s122, 0
    %s125 = sadd.s32 %s124, 1
    %s126 = scalar_select %p123, %s124, %s125
    %p129 = pneg %p123
    %p130 = scmp.eq.s32.totalorder %s9, 7
    %p131 = por %p129, %p130
    %p132 = scmp.ne.s32.totalorder %s124, %s127
    %p133 = scmp.eq.s32.totalorder %s9, 0
    %p134 = por %p132, %p133
    %p135 = scmp.ne.s32.totalorder %s124, %s127
    %p136 = scmp.eq.s32.totalorder %s14, 7
    %p137 = por %p135, %p136
    %p138 = scmp.ne.s32.totalorder %s127, %s128
    %p139 = scmp.eq.s32.totalorder %s14, 0
    %p140 = por %p138, %p139
    %p141 = scmp.ne.s32.totalorder %s127, %s128
    %p142 = scmp.eq.s32.totalorder %s15, 7
    %p143 = por %p141, %p142
    %p145 = scmp.ne.s32.totalorder %s128, %s144
    %p146 = scmp.eq.s32.totalorder %s15, 0
    %p147 = por %p145, %p146
    %p148 = scmp.le.s32.totalorder 1, %s9
    %p149 = scmp.lt.s32.totalorder %s9, 9
    %p150 = pnand %p148, %p149
    %p151 = pneg %p150
    // Predicated region
    $region9: #{asr_whisper_forward.62} parent=5 // pred_check
      _
    $region10: #{asr_whisper_forward.62} parent=5 // pred_check_branch
      %153 = sbr.rel (%p150) target = $region12
    $region11: #{asr_whisper_forward.62} parent=5 // pred_region
      %s154 = ssub.s32 %s9, 1
    $region12: #{asr_whisper_forward.62} parent=5 // pred_fallthru
      _
    %p155 = scmp.lt.s32.totalorder %s9, 8
    // Predicated region
    $region13: #{asr_whisper_forward.62} parent=5 // pred_check
      %p156 = pneg %p155
    $region14: #{asr_whisper_forward.62} parent=5 // pred_check_branch
      %158 = sbr.rel (%p156) target = $region16
    $region15: #{asr_whisper_forward.62} parent=5 // pred_region
      // Predicated region
      $region17: #{asr_whisper_forward.62} parent=15 // pred_check
        %p159 = pneg %p50
      $region18: #{asr_whisper_forward.62} parent=15 // pred_check_branch
        %161 = sbr.rel (%p159) target = $region20
      $region19: #{asr_whisper_forward.62} parent=15 // pred_region
        %p162 = scmp.lt.s32.totalorder %s16, 7
        %s163 = scalar_select %p162, %s16, 7
        %p164 = scmp.lt.s32.totalorder %s17, 0
        %s165 = scalar_select %p164, %s17, 0
        %s166 = sadd.s32 %s165, %s163
        %s167 = smul.addr %s166, 8
        %s168 = scalar_lea.vmem %s0, %s167
      $region20: #{asr_whisper_forward.62} parent=15 // pred_fallthru
        _
      // Predicated region
      $region21: #{asr_whisper_forward.62} parent=15 // pred_check
        %p169 = pneg %p78
      $region22: #{asr_whisper_forward.62} parent=15 // pred_check_branch
        %171 = sbr.rel (%p169) target = $region24
      $region23: #{asr_whisper_forward.62} parent=15 // pred_region
        %p172 = scmp.lt.s32.totalorder %s16, 7
        %s173 = scalar_select %p172, %s16, 7
        %p174 = scmp.lt.s32.totalorder %s18, 0
        %s175 = scalar_select %p174, %s18, 0
        %s176 = sadd.s32 %s175, %s173
        %s177 = smul.addr %s176, 8
        %s178 = scalar_lea.vmem %s1, %s177
      $region24: #{asr_whisper_forward.62} parent=15 // pred_fallthru
        _
      // Predicated region
      $region25: #{asr_whisper_forward.62} parent=15 // pred_check
        %p179 = pneg %p106
      $region26: #{asr_whisper_forward.62} parent=15 // pred_check_branch
        %181 = sbr.rel (%p179) target = $region28
      $region27: #{asr_whisper_forward.62} parent=15 // pred_region
        %p182 = scmp.lt.s32.totalorder %s16, 7
        %s183 = scalar_select %p182, %s16, 7
        %p184 = scmp.lt.s32.totalorder %s18, 0
        %s185 = scalar_select %p184, %s18, 0
        %s186 = sadd.s32 %s185, %s183
        %s187 = smul.addr %s186, 8
        %s188 = scalar_lea.vmem %s2, %s187
      $region28: #{asr_whisper_forward.62} parent=15 // pred_fallthru
        _
    $region16: #{asr_whisper_forward.62} parent=5 // pred_fallthru
      _
    %p189 = scmp.le.s32.totalorder 1, %s9
    %p190 = scmp.lt.s32.totalorder %s9, 9
    %p191 = pnand %p189, %p190
    %p192 = pneg %p191
    // Predicated region
    $region29: #{asr_whisper_forward.62} parent=5 // pred_check
      _
    $region30: #{asr_whisper_forward.62} parent=5 // pred_check_branch
      %194 = sbr.rel (%p191) target = $region32
    $region31: #{asr_whisper_forward.62} parent=5 // pred_region
      %s195 = ssub.s32 %s9, 1
      %p196 = scmp.lt.s32.totalorder %s19, 7
      %s197 = scalar_select %p196, %s19, 7
      %p198 = scmp.lt.s32.totalorder %s20, 0
      %s199 = scalar_select %p198, %s20, 0
      %s200 = sadd.s32 %s199, %s197
      %s201 = smul.addr %s200, 8
      %s202 = scalar_lea.vmem %s0, %s201
      %p203 = pneg %p56
      %p204 = pneg %p53
      %p205 = scmp.lt.s32.totalorder %s19, 7
      %s206 = scalar_select %p205, %s19, 7
      %p207 = scmp.lt.s32.totalorder %s21, 0
      %s208 = scalar_select %p207, %s21, 0
      %s209 = sadd.s32 %s208, %s206
      %s210 = smul.addr %s209, 8
      %s211 = scalar_lea.vmem %s1, %s210
      %p212 = pneg %p84
      %p213 = pneg %p81
      %p214 = scmp.lt.s32.totalorder %s19, 7
      %s215 = scalar_select %p214, %s19, 7
      %p216 = scmp.lt.s32.totalorder %s21, 0
      %s217 = scalar_select %p216, %s21, 0
      %s218 = sadd.s32 %s217, %s215
      %s219 = smul.addr %s218, 8
      %s220 = scalar_lea.vmem %s2, %s219
      %p221 = pneg %p112
      %p222 = pneg %p109
      %p223 = pneg %p140
      %p224 = pneg %p137
      %p225 = scmp.lt.s32.totalorder %s19, 7
      %s226 = scalar_select %p225, %s19, 7
      %p227 = scmp.lt.s32.totalorder %s20, 0
      %s228 = scalar_select %p227, %s20, 0
      %s229 = sadd.s32 %s228, %s226
      %s230 = smul.addr %s229, 8
      %s231 = scalar_lea.vmem %s3, %s230
      %p232 = scmp.lt.s32.totalorder %s19, 7
      %s233 = scalar_select %p232, %s19, 7
      %p234 = scmp.lt.s32.totalorder %s20, 0
      %s235 = scalar_select %p234, %s20, 0
      %s236 = sadd.s32 %s235, %s233
      %s237 = smul.addr %s236, 8
      %s238 = scalar_lea.vmem %s0, %s237
      %p239 = scmp.lt.s32.totalorder %s19, 7
      %s240 = scalar_select %p239, %s19, 7
      %p241 = scmp.lt.s32.totalorder %s21, 0
      %s242 = scalar_select %p241, %s21, 0
      %s243 = sadd.s32 %s242, %s240
      %s244 = smul.addr %s243, 8
      %s245 = scalar_lea.vmem %s1, %s244
      %p246 = scmp.lt.s32.totalorder %s19, 7
      %s247 = scalar_select %p246, %s19, 7
      %p248 = scmp.lt.s32.totalorder %s21, 0
      %s249 = scalar_select %p248, %s21, 0
      %s250 = sadd.s32 %s249, %s247
      %s251 = smul.addr %s250, 8
      %s252 = scalar_lea.vmem %s2, %s251
      %p253 = scmp.lt.s32.totalorder %s19, 7
      %s254 = scalar_select %p253, %s19, 7
      %p255 = scmp.lt.s32.totalorder %s20, 0
      %s256 = scalar_select %p255, %s20, 0
      %s257 = sadd.s32 %s256, %s254
      %s258 = smul.addr %s257, 8
      %s259 = scalar_lea.vmem %s3, %s258
      %p261 = scmp.eq.s32.totalorder %s21, 0
      // Predicated region
      $region33: #{asr_whisper_forward.62} parent=31 // pred_check
        %p262 = pneg %p261
      $region34: #{asr_whisper_forward.62} parent=31 // pred_check_branch
        %264 = sbr.rel (%p262) target = $region36
      $region35: #{asr_whisper_forward.62} parent=31 // pred_region
        %vm265 = vcmask 7168
        %266 = vst.msk [vmem:[#allocation2] sm:$0xff] %vm265, -1e+30
        %267 = vst.msk [vmem:[#allocation3] sm:$0xff] %vm265, 0.0
        %vm268 = vcmask 64512
        %269 = vst.msk [vmem:[#allocation4] sm:$0xff] %vm268, 0.0
      $region36: #{asr_whisper_forward.62} parent=31 // pred_fallthru
        _
      %v270 = vld [vmem:[%s238] sm:$0xff]
      %v271 = vld [vmem:[%s245] sm:$0xff]
      %v272 = vld [vmem:[%s252] sm:$0xff]
      %v273 = vpack.c.bf16 %v270, %v270
      %v274 = vpack.c.bf16 %v271, %v271
      %vm275 = vcmask 64512
      %v277 = vsel %vm275, %v273, 0
      %v280 = vsel %vm275, %v274, 0
      %282 = vmatpush.bf16.xpose.msra.mxu0 0
      %283 = vmatpush.bf16.xpose.msra.mxu0 0
      %284 = vmatpush.bf16.xpose.msra.mxu0 0
      %285 = vmatpush.bf16.xpose.msra.mxu0 0
      %286 = vmatpush.bf16.xpose.msra.mxu0 0
      %287 = vmatpush.bf16.xpose.msra.mxu0 0
      %288 = vmatpush.bf16.xpose.msra.mxu0 0
      %289 = vmatpush.bf16.xpose.msra.mxu0 %v280
      %290 = vmatmul.bf16.gmra.mxu0 %v277
      %v291 = vpop.f32.mrf.mxu0
      %v292 = vadd.f32 0.0, %v291
      %v293 = vpop.f32.mrf.mxu0
      %294 = vdwg.mxu0
      %v295 = vmul.f32 %v292, 0.35355338
      %v296 = vlaneseq
      %v297 = vshrl.u32 %v296, 7
      %s298 = smul.u32 %s20, 8
      %v299 = vstv %s298
      %v300 = vadd.s32 %v297, %v299
      %v301 = vlaneseq
      %v302 = vand.u32 %v301, 127
      %s303 = smul.u32 %s21, 8
      %v304 = vstv %s303
      %v305 = vadd.s32 %v302, %v304
      %vm306 = vcmp.le.s32.totalorder %v305, %v300
      %v307 = vsel %vm306, %v295, -1e+30
      %v308 = vld [vmem:[#allocation2] sm:$0xff]
      %v309 = vsel %vm275, %v307, -inf
      %310 = vmax.xlane.f32.xlu0 %v309
      %v311 = vpop.xlane.xlu0 %310
      %v312 = vmax.f32 %v308, %v311
      %v313 = vsub.f32 %v308, %v312
      %v314 = vmul.f32 %v313, 1.442695
      %v315 = vpow.pop %v314
      %317 = vset.pattern.permute.xlu0 0
      %318 = vperm.xlu0 %317, %v312
      %v319 = vpop.permute.xlu0 %318
      %v321 = vsub.f32 %v307, %v319
      %v322 = vmul.f32 %v321, 1.442695
      %v323 = vpow.pop %v322
      %v324 = vld [vmem:[#allocation3] sm:$0xff]
      %v325 = vmul.f32 %v315, %v324
      %v326 = vsel %vm275, %v323, 0.0
      %327 = vadd.xlane.f32.xlu0 %v326
      %v328 = vpop.xlane.xlu0 %327
      %v329 = vadd.f32 %v325, %v328
      %vm330 = vcmask 7168
      %331 = vst.msk [vmem:[#allocation3] sm:$0xff] %vm330, %v329
      %v332 = vld [vmem:[#allocation4] sm:$0xff]
      %334 = vset.pattern.permute.xlu0 0
      %335 = vperm.xlu0 %334, %v315
      %v336 = vpop.permute.xlu0 %335
      %v338 = vmul.f32 %v336, %v332
      %v339 = vpack.c.bf16 %v323, %v323
      %v340 = vpack.c.bf16 %v272, %v272
      %v342 = vsel %vm275, %v339, 0
      %vm344 = vcmask 1043456
      %v346 = vsel %vm344, %v340, 0
      %348 = vmatpush.bf16.msra.mxu0 0
      %349 = vmatpush.bf16.msra.mxu0 0
      %350 = vmatpush.bf16.msra.mxu0 0
      %351 = vmatpush.bf16.msra.mxu0 0
      %352 = vmatpush.bf16.msra.mxu0 0
      %353 = vmatpush.bf16.msra.mxu0 0
      %354 = vmatpush.bf16.msra.mxu0 0
      %355 = vmatpush.bf16.msra.mxu0 %v346
      %356 = vmatmul.bf16.gmra.mxu0 %v342
      %v357 = vpop.f32.mrf.mxu0
      %v358 = vadd.f32 0.0, %v357
      %v359 = vpop.f32.mrf.mxu0
      %360 = vdwg.mxu0
      %v361 = vadd.f32 %v338, %v358
      %362 = vst.msk [vmem:[#allocation4] sm:$0xff] %vm275, %v361
      %363 = vst.msk [vmem:[#allocation2] sm:$0xff] %vm330, %v312
      // Predicated region
      $region37: #{asr_whisper_forward.62} parent=31 // pred_check
        %p364 = pneg %p261
      $region38: #{asr_whisper_forward.62} parent=31 // pred_check_branch
        %366 = sbr.rel (%p364) target = $region40
      $region39: #{asr_whisper_forward.62} parent=31 // pred_region
        %v367 = vld [vmem:[#allocation4] sm:$0xff]
        %v368 = vld [vmem:[#allocation3] sm:$0xff]
        %v369 = vrcp.pop %v368
        %371 = vset.pattern.permute.xlu0 0
        %372 = vperm.xlu0 %371, %v369
        %v373 = vpop.permute.xlu0 %372
        %v375 = vmul.f32 %v367, %v373
        %376 = vst.msk [vmem:[%s259] sm:$0xff] %vm275, %v375
      $region40: #{asr_whisper_forward.62} parent=31 // pred_fallthru
        _
      %p377 = scmp.lt.s32.totalorder %s19, 7
      %s378 = scalar_select %p377, %s19, 7
      %p379 = scmp.lt.s32.totalorder %s20, 0
      %s380 = scalar_select %p379, %s20, 0
      %s381 = sadd.s32 %s380, %s378
      %s382 = smul.addr %s381, 8
      %s383 = scalar_lea.vmem %s3, %s382
      // Predicated region
      $region41: #{asr_whisper_forward.62} parent=31 // pred_check
        %p384 = pneg %p137
      $region42: #{asr_whisper_forward.62} parent=31 // pred_check_branch
        %386 = sbr.rel (%p384) target = $region44
      $region43: #{asr_whisper_forward.62} parent=31 // pred_region
        _
      $region44: #{asr_whisper_forward.62} parent=31 // pred_fallthru
        _
    $region32: #{asr_whisper_forward.62} parent=5 // pred_fallthru
      _
    %p387 = scmp.le.s32.totalorder 2, %s9
    // Predicated region
    $region45: #{asr_whisper_forward.62} parent=5 // pred_check
      %p388 = pneg %p387
    $region46: #{asr_whisper_forward.62} parent=5 // pred_check_branch
      %390 = sbr.rel (%p388) target = $region48
    $region47: #{asr_whisper_forward.62} parent=5 // pred_region
      %s391 = ssub.s32 %s9, 2
      // Predicated region
      $region49: #{asr_whisper_forward.62} parent=47 // pred_check
        %p392 = pneg %p143
      $region50: #{asr_whisper_forward.62} parent=47 // pred_check_branch
        %394 = sbr.rel (%p392) target = $region52
      $region51: #{asr_whisper_forward.62} parent=47 // pred_region
        %p395 = scmp.lt.s32.totalorder %s22, 7
        %s396 = scalar_select %p395, %s22, 7
        %p397 = scmp.lt.s32.totalorder %s23, 0
        %s398 = scalar_select %p397, %s23, 0
        %s399 = sadd.s32 %s398, %s396
        %s400 = smul.addr %s399, 8
        %s401 = scalar_lea.vmem %s3, %s400
      $region52: #{asr_whisper_forward.62} parent=47 // pred_fallthru
        _
    $region48: #{asr_whisper_forward.62} parent=5 // pred_fallthru
      _
  $region6: #{asr_whisper_forward.62} parent=0 // loop_footer
    %s13 = sadd.s32 1, %s9
  $region7: #{asr_whisper_forward.62} parent=0 // loop_footer_branch
    %8 = sbr.rel target = $region3
  $region8: #{asr_whisper_forward.62} parent=0 // loop_exit
    _

// kernel: asr_whisper_forward.65
$region0: #{asr_whisper_forward.65}
  #allocation0 [shape = 'u32[]', space=smem, size = 0x4, offset = 0x4, fixed_abs, tag = 'smem constant byte address 0x4 - core index']
  #allocation1 [shape = 'u32[72,128]{1,0:T(1,128)}', space=vmem, size = 0x9000, scoped, tag = 'internal scratch']
  #allocation2 [shape = 'f32[16,32]{1,0:T(8,128)}', space=vmem, size = 0x2000, scoped, tag = 'scratch operand']
  %s0 = inlined_call_operand.vmem [shape: f32[16,32], index: 0, kind: input, shape index: {}]
  %s1 = inlined_call_operand.vmem [shape: f32[32,32], index: 1, kind: input, shape index: {}]
  %s2 = inlined_call_operand.vmem [shape: f32[1,32], index: 2, kind: input, shape index: {}]
  %s3 = inlined_call_operand.vmem [shape: f32[16,32], index: 3, kind: output, shape index: {}]
  %s4 = sld [smem:[#allocation0]]
  $region30: #{asr_whisper_forward.65} parent=0
    _
  %s6 = ssub.s32 1, %s4
  %s7 = scalar_select 0, %s6, %s4
  // Predicated region
  $region2: #{asr_whisper_forward.65} parent=0 // pred_check
    _
  $region3: #{asr_whisper_forward.65} parent=0 // pred_check_branch
    %9 = sbr.rel (0) target = $region5
  $region4: #{asr_whisper_forward.65} parent=0 // pred_region
    _
  $region5: #{asr_whisper_forward.65} parent=0 // pred_fallthru
    _
  // Predicated region
  $region6: #{asr_whisper_forward.65} parent=0 // pred_check
    _
  $region7: #{asr_whisper_forward.65} parent=0 // pred_check_branch
    %11 = sbr.rel (0) target = $region9
  $region8: #{asr_whisper_forward.65} parent=0 // pred_region
    _
  $region9: #{asr_whisper_forward.65} parent=0 // pred_fallthru
    _
  // Predicated region
  $region10: #{asr_whisper_forward.65} parent=0 // pred_check
    _
  $region11: #{asr_whisper_forward.65} parent=0 // pred_check_branch
    %13 = sbr.rel (0) target = $region13
  $region12: #{asr_whisper_forward.65} parent=0 // pred_region
    _
  $region13: #{asr_whisper_forward.65} parent=0 // pred_fallthru
    _
  %p15 = scmp.eq.s32.totalorder 0, 0
  // Predicated region
  $region14: #{asr_whisper_forward.65} parent=0 // pred_check
    %p16 = pneg %p15
  $region15: #{asr_whisper_forward.65} parent=0 // pred_check_branch
    %18 = sbr.rel (%p16) target = $region17
  $region16: #{asr_whisper_forward.65} parent=0 // pred_region
    %vm19 = vcmask 261120
    %20 = vst.msk [vmem:[#allocation2] sm:$0xff] %vm19, 0.0
    %21 = vst.msk [vmem:[#allocation2 + $0x8] sm:$0xff] %vm19, 0.0
  $region17: #{asr_whisper_forward.65} parent=0 // pred_fallthru
    _
  %v22 = vld [vmem:[#allocation2] sm:$0xff]
  %v23 = vld [vmem:[#allocation2 + $0x8] sm:$0xff]
  %v24 = vld [vmem:[%s0] sm:$0xff]
  %v25 = vld [vmem:[%s0 + $0x8] sm:$0xff]
  %v26 = vpack.c.bf16 %v25, %v24
  %v27 = vld [vmem:[%s1] sm:$0xff]
  %v28 = vld [vmem:[%s1 + $0x8] sm:$0xff]
  %v29 = vld [vmem:[%s1 + $0x10] sm:$0xff]
  %v30 = vld [vmem:[%s1 + $0x18] sm:$0xff]
  %v31 = vpack.c.bf16 %v28, %v27
  %v32 = vpack.c.bf16 %v30, %v29
  %vm33 = vcmask 261120
  %v35 = vsel %vm33, %v26, 0
  %37 = vmatpush.bf16.msra.mxu0 0
  %38 = vmatpush.bf16.msra.mxu0 0
  %39 = vmatpush.bf16.msra.mxu0 0
  %40 = vmatpush.bf16.msra.mxu0 0
  %41 = vmatpush.bf16.msra.mxu0 0
  %42 = vmatpush.bf16.msra.mxu0 0
  %43 = vmatpush.bf16.msra.mxu0 %v32
  %44 = vmatpush.bf16.msra.mxu0 %v31
  %45 = vmatmul.bf16.gmra.mxu0 %v35
  %v46 = vpop.f32.mrf.mxu0
  %v47 = vadd.f32 0.0, %v46
  %v48 = vpop.f32.mrf.mxu0
  %v49 = vadd.f32 0.0, %v48
  %50 = vdwg.mxu0
  %v51 = vadd.f32 %v22, %v47
  %v52 = vadd.f32 %v23, %v49
  %53 = vst.msk [vmem:[#allocation2] sm:$0xff] %vm33, %v51
  %54 = vst.msk [vmem:[#allocation2 + $0x8] sm:$0xff] %vm33, %v52
  // Predicated region
  $region18: #{asr_whisper_forward.65} parent=0 // pred_check
    %p55 = pneg %p15
  $region19: #{asr_whisper_forward.65} parent=0 // pred_check_branch
    %57 = sbr.rel (%p55) target = $region21
  $region20: #{asr_whisper_forward.65} parent=0 // pred_region
    %v58 = vld [vmem:[#allocation2] sm:$0xff]
    %v59 = vld [vmem:[#allocation2 + $0x8] sm:$0xff]
    %v60 = vld [vmem:[%s2] sm:$0x1]
    %v62 = vperm.slane %v60, 0
    %v64 = vadd.f32 %v58, %v62
    %v65 = vadd.f32 %v59, %v62
    %66 = vst.msk [vmem:[%s3] sm:$0xff] %vm33, %v64
    %67 = vst.msk [vmem:[%s3 + $0x8] sm:$0xff] %vm33, %v65
  $region21: #{asr_whisper_forward.65} parent=0 // pred_fallthru
    _
  // Predicated region
  $region22: #{asr_whisper_forward.65} parent=0 // pred_check
    _
  $region23: #{asr_whisper_forward.65} parent=0 // pred_check_branch
    %69 = sbr.rel (0) target = $region25
  $region24: #{asr_whisper_forward.65} parent=0 // pred_region
    _
  $region25: #{asr_whisper_forward.65} parent=0 // pred_fallthru
    _
  // Predicated region
  $region26: #{asr_whisper_forward.65} parent=0 // pred_check
    _
  $region27: #{asr_whisper_forward.65} parent=0 // pred_check_branch
    %71 = sbr.rel (0) target = $region29
  $region28: #{asr_whisper_forward.65} parent=0 // pred_region
    _
  $region29: #{asr_whisper_forward.65} parent=0 // pred_fallthru
    _

// kernel: asr_whisper_forward.43
$region0: #{asr_whisper_forward.43}
  #allocation0 [shape = 'u32[]', space=smem, size = 0x4, offset = 0x4, fixed_abs, tag = 'smem constant byte address 0x4 - core index']
  #allocation1 [shape = 'u32[72,128]{1,0:T(1,128)}', space=vmem, size = 0x9000, scoped, tag = 'internal scratch']
  #allocation2 [shape = 'f32[64,32]{1,0:T(8,128)}', space=vmem, size = 0x8000, scoped, tag = 'scratch operand']
  %s0 = inlined_call_operand.vmem [shape: f32[64,48], index: 0, kind: input, shape index: {}]
  %s1 = inlined_call_operand.vmem [shape: f32[48,32], index: 1, kind: input, shape index: {}]
  %s2 = inlined_call_operand.vmem [shape: f32[1,32], index: 2, kind: input, shape index: {}]
  %s3 = inlined_call_operand.vmem [shape: f32[64,32], index: 3, kind: output, shape index: {}]
  %s4 = sld [smem:[#allocation0]]
  $region30: #{asr_whisper_forward.43} parent=0
    _
  %s6 = ssub.s32 1, %s4
  %s7 = scalar_select 0, %s6, %s4
  // Predicated region
  $region2: #{asr_whisper_forward.43} parent=0 // pred_check
    _
  $region3: #{asr_whisper_forward.43} parent=0 // pred_check_branch
    %9 = sbr.rel (0) target = $region5
  $region4: #{asr_whisper_forward.43} parent=0 // pred_region
    _
  $region5: #{asr_whisper_forward.43} parent=0 // pred_fallthru
    _
  // Predicated region
  $region6: #{asr_whisper_forward.43} parent=0 // pred_check
    _
  $region7: #{asr_whisper_forward.43} parent=0 // pred_check_branch
    %11 = sbr.rel (0) target = $region9
  $region8: #{asr_whisper_forward.43} parent=0 // pred_region
    _
  $region9: #{asr_whisper_forward.43} parent=0 // pred_fallthru
    _
  // Predicated region
  $region10: #{asr_whisper_forward.43} parent=0 // pred_check
    _
  $region11: #{asr_whisper_forward.43} parent=0 // pred_check_branch
    %13 = sbr.rel (0) target = $region13
  $region12: #{asr_whisper_forward.43} parent=0 // pred_region
    _
  $region13: #{asr_whisper_forward.43} parent=0 // pred_fallthru
    _
  %p15 = scmp.eq.s32.totalorder 0, 0
  // Predicated region
  $region14: #{asr_whisper_forward.43} parent=0 // pred_check
    %p16 = pneg %p15
  $region15: #{asr_whisper_forward.43} parent=0 // pred_check_branch
    %18 = sbr.rel (%p16) target = $region17
  $region16: #{asr_whisper_forward.43} parent=0 // pred_region
    %vm19 = vcmask 261120
    %20 = vst.msk [vmem:[#allocation2] sm:$0xff] %vm19, 0.0
    %21 = vst.msk [vmem:[#allocation2 + $0x8] sm:$0xff] %vm19, 0.0
    %22 = vst.msk [vmem:[#allocation2 + $0x10] sm:$0xff] %vm19, 0.0
    %23 = vst.msk [vmem:[#allocation2 + $0x18] sm:$0xff] %vm19, 0.0
    %24 = vst.msk [vmem:[#allocation2 + $0x20] sm:$0xff] %vm19, 0.0
    %25 = vst.msk [vmem:[#allocation2 + $0x28] sm:$0xff] %vm19, 0.0
    %26 = vst.msk [vmem:[#allocation2 + $0x30] sm:$0xff] %vm19, 0.0
    %27 = vst.msk [vmem:[#allocation2 + $0x38] sm:$0xff] %vm19, 0.0
  $region17: #{asr_whisper_forward.43} parent=0 // pred_fallthru
    _
  %v28 = vld [vmem:[#allocation2] sm:$0xff]
  %v29 = vld [vmem:[#allocation2 + $0x8] sm:$0xff]
  %v30 = vld [vmem:[#allocation2 + $0x10] sm:$0xff]
  %v31 = vld [vmem:[#allocation2 + $0x18] sm:$0xff]
  %v32 = vld [vmem:[#allocation2 + $0x20] sm:$0xff]
  %v33 = vld [vmem:[#allocation2 + $0x28] sm:$0xff]
  %v34 = vld [vmem:[#allocation2 + $0x30] sm:$0xff]
  %v35 = vld [vmem:[#allocation2 + $0x38] sm:$0xff]
  %v36 = vld [vmem:[%s0] sm:$0xff]
  %v37 = vld [vmem:[%s0 + $0x8] sm:$0xff]
  %v38 = vld [vmem:[%s0 + $0x10] sm:$0xff]
  %v39 = vld [vmem:[%s0 + $0x18] sm:$0xff]
  %v40 = vld [vmem:[%s0 + $0x20] sm:$0xff]
  %v41 = vld [vmem:[%s0 + $0x28] sm:$0xff]
  %v42 = vld [vmem:[%s0 + $0x30] sm:$0xff]
  %v43 = vld [vmem:[%s0 + $0x38] sm:$0xff]
  %v44 = vpack.c.bf16 %v37, %v36
  %v45 = vpack.c.bf16 %v39, %v38
  %v46 = vpack.c.bf16 %v41, %v40
  %v47 = vpack.c.bf16 %v43, %v42
  %v48 = vld [vmem:[%s1] sm:$0xff]
  %v49 = vld [vmem:[%s1 + $0x8] sm:$0xff]
  %v50 = vld [vmem:[%s1 + $0x10] sm:$0xff]
  %v51 = vld [vmem:[%s1 + $0x18] sm:$0xff]
  %v52 = vld [vmem:[%s1 + $0x20] sm:$0xff]
  %v53 = vld [vmem:[%s1 + $0x28] sm:$0xff]
  %v54 = vpack.c.bf16 %v49, %v48
  %v55 = vpack.c.bf16 %v51, %v50
  %v56 = vpack.c.bf16 %v53, %v52
  %vm57 = vcmask 392192
  %v59 = vsel %vm57, %v44, 0
  %v62 = vsel %vm57, %v45, 0
  %v65 = vsel %vm57, %v46, 0
  %v68 = vsel %vm57, %v47, 0
  %70 = vmatpush.bf16.msra.mxu0 0
  %71 = vmatpush.bf16.msra.mxu0 0
  %72 = vmatpush.bf16.msra.mxu0 0
  %73 = vmatpush.bf16.msra.mxu0 0
  %74 = vmatpush.bf16.msra.mxu0 0
  %75 = vmatpush.bf16.msra.mxu0 %v56
  %76 = vmatpush.bf16.msra.mxu0 %v55
  %77 = vmatpush.bf16.msra.mxu0 %v54
  %78 = vmatmul.bf16.gmra.mxu0 %v59
  %v79 = vpop.f32.mrf.mxu0
  %v80 = vadd.f32 0.0, %v79
  %v81 = vpop.f32.mrf.mxu0
  %v82 = vadd.f32 0.0, %v81
  %83 = vmatmul.bf16.gmra.mxu0 %v62
  %v84 = vpop.f32.mrf.mxu0
  %v85 = vadd.f32 0.0, %v84
  %v86 = vpop.f32.mrf.mxu0
  %v87 = vadd.f32 0.0, %v86
  %88 = vmatmul.bf16.gmra.mxu0 %v65
  %v89 = vpop.f32.mrf.mxu0
  %v90 = vadd.f32 0.0, %v89
  %v91 = vpop.f32.mrf.mxu0
  %v92 = vadd.f32 0.0, %v91
  %93 = vmatmul.bf16.gmra.mxu0 %v68
  %v94 = vpop.f32.mrf.mxu0
  %v95 = vadd.f32 0.0, %v94
  %v96 = vpop.f32.mrf.mxu0
  %v97 = vadd.f32 0.0, %v96
  %98 = vdwg.mxu0
  %v99 = vadd.f32 %v28, %v80
  %v100 = vadd.f32 %v29, %v82
  %v101 = vadd.f32 %v30, %v85
  %v102 = vadd.f32 %v31, %v87
  %v103 = vadd.f32 %v32, %v90
  %v104 = vadd.f32 %v33, %v92
  %v105 = vadd.f32 %v34, %v95
  %v106 = vadd.f32 %v35, %v97
  %vm107 = vcmask 261120
  %108 = vst.msk [vmem:[#allocation2] sm:$0xff] %vm107, %v99
  %109 = vst.msk [vmem:[#allocation2 + $0x8] sm:$0xff] %vm107, %v100
  %110 = vst.msk [vmem:[#allocation2 + $0x10] sm:$0xff] %vm107, %v101
  %111 = vst.msk [vmem:[#allocation2 + $0x18] sm:$0xff] %vm107, %v102
  %112 = vst.msk [vmem:[#allocation2 + $0x20] sm:$0xff] %vm107, %v103
  %113 = vst.msk [vmem:[#allocation2 + $0x28] sm:$0xff] %vm107, %v104
  %114 = vst.msk [vmem:[#allocation2 + $0x30] sm:$0xff] %vm107, %v105
  %115 = vst.msk [vmem:[#allocation2 + $0x38] sm:$0xff] %vm107, %v106
  // Predicated region
  $region18: #{asr_whisper_forward.43} parent=0 // pred_check
    %p116 = pneg %p15
  $region19: #{asr_whisper_forward.43} parent=0 // pred_check_branch
    %118 = sbr.rel (%p116) target = $region21
  $region20: #{asr_whisper_forward.43} parent=0 // pred_region
    %v119 = vld [vmem:[#allocation2] sm:$0xff]
    %v120 = vld [vmem:[#allocation2 + $0x8] sm:$0xff]
    %v121 = vld [vmem:[#allocation2 + $0x10] sm:$0xff]
    %v122 = vld [vmem:[#allocation2 + $0x18] sm:$0xff]
    %v123 = vld [vmem:[#allocation2 + $0x20] sm:$0xff]
    %v124 = vld [vmem:[#allocation2 + $0x28] sm:$0xff]
    %v125 = vld [vmem:[#allocation2 + $0x30] sm:$0xff]
    %v126 = vld [vmem:[#allocation2 + $0x38] sm:$0xff]
    %v127 = vld [vmem:[%s2] sm:$0x1]
    %v129 = vperm.slane %v127, 0
    %v131 = vadd.f32 %v119, %v129
    %v132 = vadd.f32 %v120, %v129
    %v133 = vadd.f32 %v121, %v129
    %v134 = vadd.f32 %v122, %v129
    %v135 = vadd.f32 %v123, %v129
    %v136 = vadd.f32 %v124, %v129
    %v137 = vadd.f32 %v125, %v129
    %v138 = vadd.f32 %v126, %v129
    %v139 = vmul.f32 %v131, 0.5
    %v140 = vmul.f32 %v132, 0.5
    %v141 = vmul.f32 %v133, 0.5
    %v142 = vmul.f32 %v134, 0.5
    %v143 = vmul.f32 %v135, 0.5
    %v144 = vmul.f32 %v136, 0.5
    %v145 = vmul.f32 %v137, 0.5
    %v146 = vmul.f32 %v138, 0.5
    %v147 = vmul.f32 %v131, 0.044715
    %v148 = vmul.f32 %v132, 0.044715
    %v149 = vmul.f32 %v133, 0.044715
    %v150 = vmul.f32 %v134, 0.044715
    %v151 = vmul.f32 %v135, 0.044715
    %v152 = vmul.f32 %v136, 0.044715
    %v153 = vmul.f32 %v137, 0.044715
    %v154 = vmul.f32 %v138, 0.044715
    %v155 = vmul.f32 %v147, %v131
    %v156 = vmul.f32 %v148, %v132
    %v157 = vmul.f32 %v149, %v133
    %v158 = vmul.f32 %v150, %v134
    %v159 = vmul.f32 %v151, %v135
    %v160 = vmul.f32 %v152, %v136
    %v161 = vmul.f32 %v153, %v137
    %v162 = vmul.f32 %v154, %v138
    %v163 = vmul.f32 %v155, %v131
    %v164 = vmul.f32 %v156, %v132
    %v165 = vmul.f32 %v157, %v133
    %v166 = vmul.f32 %v158, %v134
    %v167 = vmul.f32 %v159, %v135
    %v168 = vmul.f32 %v160, %v136
    %v169 = vmul.f32 %v161, %v137
    %v170 = vmul.f32 %v162, %v138
    %v171 = vadd.f32 %v131, %v163
    %v172 = vadd.f32 %v132, %v164
    %v173 = vadd.f32 %v133, %v165
    %v174 = vadd.f32 %v134, %v166
    %v175 = vadd.f32 %v135, %v167
    %v176 = vadd.f32 %v136, %v168
    %v177 = vadd.f32 %v137, %v169
    %v178 = vadd.f32 %v138, %v170
    %v179 = vmul.f32 %v171, 0.7978846
    %v180 = vmul.f32 %v172, 0.7978846
    %v181 = vmul.f32 %v173, 0.7978846
    %v182 = vmul.f32 %v174, 0.7978846
    %v183 = vmul.f32 %v175, 0.7978846
    %v184 = vmul.f32 %v176, 0.7978846
    %v185 = vmul.f32 %v177, 0.7978846
    %v186 = vmul.f32 %v178, 0.7978846
    %v187 = vtanh.pop %v179
    %v188 = vtanh.pop %v180
    %v189 = vtanh.pop %v181
    %v190 = vtanh.pop %v182
    %v191 = vtanh.pop %v183
    %v192 = vtanh.pop %v184
    %v193 = vtanh.pop %v185
    %v194 = vtanh.pop %v186
    %v195 = vadd.f32 %v187, 1.0
    %v196 = vadd.f32 %v188, 1.0
    %v197 = vadd.f32 %v189, 1.0
    %v198 = vadd.f32 %v190, 1.0
    %v199 = vadd.f32 %v191, 1.0
    %v200 = vadd.f32 %v192, 1.0
    %v201 = vadd.f32 %v193, 1.0
    %v202 = vadd.f32 %v194, 1.0
    %v203 = vmul.f32 %v139, %v195
    %v204 = vmul.f32 %v140, %v196
    %v205 = vmul.f32 %v141, %v197
    %v206 = vmul.f32 %v142, %v198
    %v207 = vmul.f32 %v143, %v199
    %v208 = vmul.f32 %v144, %v200
    %v209 = vmul.f32 %v145, %v201
    %v210 = vmul.f32 %v146, %v202
    %211 = vst.msk [vmem:[%s3] sm:$0xff] %vm107, %v203
    %212 = vst.msk [vmem:[%s3 + $0x8] sm:$0xff] %vm107, %v204
    %213 = vst.msk [vmem:[%s3 + $0x10] sm:$0xff] %vm107, %v205
    %214 = vst.msk [vmem:[%s3 + $0x18] sm:$0xff] %vm107, %v206
    %215 = vst.msk [vmem:[%s3 + $0x20] sm:$0xff] %vm107, %v207
    %216 = vst.msk [vmem:[%s3 + $0x28] sm:$0xff] %vm107, %v208
    %217 = vst.msk [vmem:[%s3 + $0x30] sm:$0xff] %vm107, %v209
    %218 = vst.msk [vmem:[%s3 + $0x38] sm:$0xff] %vm107, %v210
  $region21: #{asr_whisper_forward.43} parent=0 // pred_fallthru
    _
  // Predicated region
  $region22: #{asr_whisper_forward.43} parent=0 // pred_check
    _
  $region23: #{asr_whisper_forward.43} parent=0 // pred_check_branch
    %220 = sbr.rel (0) target = $region25
  $region24: #{asr_whisper_forward.43} parent=0 // pred_region
    _
  $region25: #{asr_whisper_forward.43} parent=0 // pred_fallthru
    _
  // Predicated region
  $region26: #{asr_whisper_forward.43} parent=0 // pred_check
    _
  $region27: #{asr_whisper_forward.43} parent=0 // pred_check_branch
    %222 = sbr.rel (0) target = $region29
  $region28: #{asr_whisper_forward.43} parent=0 // pred_region
    _
  $region29: #{asr_whisper_forward.43} parent=0 // pred_fallthru
    _

// kernel: asr_whisper_forward.44
$region0: #{asr_whisper_forward.44}
  #allocation0 [shape = 'u32[]', space=smem, size = 0x4, offset = 0x4, fixed_abs, tag = 'smem constant byte address 0x4 - core index']
  #allocation1 [shape = 'u32[72,128]{1,0:T(1,128)}', space=vmem, size = 0x9000, scoped, tag = 'internal scratch']
  #allocation2 [shape = 'f32[32,32]{1,0:T(8,128)}', space=vmem, size = 0x4000, scoped, tag = 'scratch operand']
  %s0 = inlined_call_operand.vmem [shape: f32[32,96], index: 0, kind: input, shape index: {}]
  %s1 = inlined_call_operand.vmem [shape: f32[96,32], index: 1, kind: input, shape index: {}]
  %s2 = inlined_call_operand.vmem [shape: f32[1,32], index: 2, kind: input, shape index: {}]
  %s3 = inlined_call_operand.vmem [shape: f32[32,32], index: 3, kind: output, shape index: {}]
  %s4 = sld [smem:[#allocation0]]
  $region30: #{asr_whisper_forward.44} parent=0
    _
  %s6 = ssub.s32 1, %s4
  %s7 = scalar_select 0, %s6, %s4
  // Predicated region
  $region2: #{asr_whisper_forward.44} parent=0 // pred_check
    _
  $region3: #{asr_whisper_forward.44} parent=0 // pred_check_branch
    %9 = sbr.rel (0) target = $region5
  $region4: #{asr_whisper_forward.44} parent=0 // pred_region
    _
  $region5: #{asr_whisper_forward.44} parent=0 // pred_fallthru
    _
  // Predicated region
  $region6: #{asr_whisper_forward.44} parent=0 // pred_check
    _
  $region7: #{asr_whisper_forward.44} parent=0 // pred_check_branch
    %11 = sbr.rel (0) target = $region9
  $region8: #{asr_whisper_forward.44} parent=0 // pred_region
    _
  $region9: #{asr_whisper_forward.44} parent=0 // pred_fallthru
    _
  // Predicated region
  $region10: #{asr_whisper_forward.44} parent=0 // pred_check
    _
  $region11: #{asr_whisper_forward.44} parent=0 // pred_check_branch
    %13 = sbr.rel (0) target = $region13
  $region12: #{asr_whisper_forward.44} parent=0 // pred_region
    _
  $region13: #{asr_whisper_forward.44} parent=0 // pred_fallthru
    _
  %p15 = scmp.eq.s32.totalorder 0, 0
  // Predicated region
  $region14: #{asr_whisper_forward.44} parent=0 // pred_check
    %p16 = pneg %p15
  $region15: #{asr_whisper_forward.44} parent=0 // pred_check_branch
    %18 = sbr.rel (%p16) target = $region17
  $region16: #{asr_whisper_forward.44} parent=0 // pred_region
    %vm19 = vcmask 261120
    %20 = vst.msk [vmem:[#allocation2] sm:$0xff] %vm19, 0.0
    %21 = vst.msk [vmem:[#allocation2 + $0x8] sm:$0xff] %vm19, 0.0
    %22 = vst.msk [vmem:[#allocation2 + $0x10] sm:$0xff] %vm19, 0.0
    %23 = vst.msk [vmem:[#allocation2 + $0x18] sm:$0xff] %vm19, 0.0
  $region17: #{asr_whisper_forward.44} parent=0 // pred_fallthru
    _
  %v24 = vld [vmem:[#allocation2] sm:$0xff]
  %v25 = vld [vmem:[#allocation2 + $0x8] sm:$0xff]
  %v26 = vld [vmem:[#allocation2 + $0x10] sm:$0xff]
  %v27 = vld [vmem:[#allocation2 + $0x18] sm:$0xff]
  %v28 = vld [vmem:[%s0] sm:$0xff]
  %v29 = vld [vmem:[%s0 + $0x8] sm:$0xff]
  %v30 = vld [vmem:[%s0 + $0x10] sm:$0xff]
  %v31 = vld [vmem:[%s0 + $0x18] sm:$0xff]
  %v32 = vpack.c.bf16 %v29, %v28
  %v33 = vpack.c.bf16 %v31, %v30
  %v34 = vld [vmem:[%s1] sm:$0xff]
  %v35 = vld [vmem:[%s1 + $0x8] sm:$0xff]
  %v36 = vld [vmem:[%s1 + $0x10] sm:$0xff]
  %v37 = vld [vmem:[%s1 + $0x18] sm:$0xff]
  %v38 = vld [vmem:[%s1 + $0x20] sm:$0xff]
  %v39 = vld [vmem:[%s1 + $0x28] sm:$0xff]
  %v40 = vld [vmem:[%s1 + $0x30] sm:$0xff]
  %v41 = vld [vmem:[%s1 + $0x38] sm:$0xff]
  %v42 = vld [vmem:[%s1 + $0x40] sm:$0xff]
  %v43 = vld [vmem:[%s1 + $0x48] sm:$0xff]
  %v44 = vld [vmem:[%s1 + $0x50] sm:$0xff]
  %v45 = vld [vmem:[%s1 + $0x58] sm:$0xff]
  %v46 = vpack.c.bf16 %v35, %v34
  %v47 = vpack.c.bf16 %v37, %v36
  %v48 = vpack.c.bf16 %v39, %v38
  %v49 = vpack.c.bf16 %v41, %v40
  %v50 = vpack.c.bf16 %v43, %v42
  %v51 = vpack.c.bf16 %v45, %v44
  %vm52 = vcmask 785408
  %v54 = vsel %vm52, %v32, 0
  %v57 = vsel %vm52, %v33, 0
  %59 = vmatpush.bf16.msra.mxu0 0
  %60 = vmatpush.bf16.msra.mxu0 0
  %61 = vmatpush.bf16.msra.mxu0 %v51
  %62 = vmatpush.bf16.msra.mxu0 %v50
  %63 = vmatpush.bf16.msra.mxu0 %v49
  %64 = vmatpush.bf16.msra.mxu0 %v48
  %65 = vmatpush.bf16.msra.mxu0 %v47
  %66 = vmatpush.bf16.msra.mxu0 %v46
  %67 = vmatmul.bf16.gmra.mxu0 %v54
  %v68 = vpop.f32.mrf.mxu0
  %v69 = vadd.f32 0.0, %v68
  %v70 = vpop.f32.mrf.mxu0
  %v71 = vadd.f32 0.0, %v70
  %72 = vmatmul.bf16.gmra.mxu0 %v57
  %v73 = vpop.f32.mrf.mxu0
  %v74 = vadd.f32 0.0, %v73
  %v75 = vpop.f32.mrf.mxu0
  %v76 = vadd.f32 0.0, %v75
  %77 = vdwg.mxu0
  %v78 = vadd.f32 %v24, %v69
  %v79 = vadd.f32 %v25, %v71
  %v80 = vadd.f32 %v26, %v74
  %v81 = vadd.f32 %v27, %v76
  %vm82 = vcmask 261120
  %83 = vst.msk [vmem:[#allocation2] sm:$0xff] %vm82, %v78
  %84 = vst.msk [vmem:[#allocation2 + $0x8] sm:$0xff] %vm82, %v79
  %85 = vst.msk [vmem:[#allocation2 + $0x10] sm:$0xff] %vm82, %v80
  %86 = vst.msk [vmem:[#allocation2 + $0x18] sm:$0xff] %vm82, %v81
  // Predicated region
  $region18: #{asr_whisper_forward.44} parent=0 // pred_check
    %p87 = pneg %p15
  $region19: #{asr_whisper_forward.44} parent=0 // pred_check_branch
    %89 = sbr.rel (%p87) target = $region21
  $region20: #{asr_whisper_forward.44} parent=0 // pred_region
    %v90 = vld [vmem:[#allocation2] sm:$0xff]
    %v91 = vld [vmem:[#allocation2 + $0x8] sm:$0xff]
    %v92 = vld [vmem:[#allocation2 + $0x10] sm:$0xff]
    %v93 = vld [vmem:[#allocation2 + $0x18] sm:$0xff]
    %v94 = vld [vmem:[%s2] sm:$0x1]
    %v96 = vperm.slane %v94, 0
    %v98 = vadd.f32 %v90, %v96
    %v99 = vadd.f32 %v91, %v96
    %v100 = vadd.f32 %v92, %v96
    %v101 = vadd.f32 %v93, %v96
    %v102 = vmul.f32 %v98, 0.5
    %v103 = vmul.f32 %v99, 0.5
    %v104 = vmul.f32 %v100, 0.5
    %v105 = vmul.f32 %v101, 0.5
    %v106 = vmul.f32 %v98, 0.044715
    %v107 = vmul.f32 %v99, 0.044715
    %v108 = vmul.f32 %v100, 0.044715
    %v109 = vmul.f32 %v101, 0.044715
    %v110 = vmul.f32 %v106, %v98
    %v111 = vmul.f32 %v107, %v99
    %v112 = vmul.f32 %v108, %v100
    %v113 = vmul.f32 %v109, %v101
    %v114 = vmul.f32 %v110, %v98
    %v115 = vmul.f32 %v111, %v99
    %v116 = vmul.f32 %v112, %v100
    %v117 = vmul.f32 %v113, %v101
    %v118 = vadd.f32 %v98, %v114
    %v119 = vadd.f32 %v99, %v115
    %v120 = vadd.f32 %v100, %v116
    %v121 = vadd.f32 %v101, %v117
    %v122 = vmul.f32 %v118, 0.7978846
    %v123 = vmul.f32 %v119, 0.7978846
    %v124 = vmul.f32 %v120, 0.7978846
    %v125 = vmul.f32 %v121, 0.7978846
    %v126 = vtanh.pop %v122
    %v127 = vtanh.pop %v123
    %v128 = vtanh.pop %v124
    %v129 = vtanh.pop %v125
    %v130 = vadd.f32 %v126, 1.0
    %v131 = vadd.f32 %v127, 1.0
    %v132 = vadd.f32 %v128, 1.0
    %v133 = vadd.f32 %v129, 1.0
    %v134 = vmul.f32 %v102, %v130
    %v135 = vmul.f32 %v103, %v131
    %v136 = vmul.f32 %v104, %v132
    %v137 = vmul.f32 %v105, %v133
    %138 = vst.msk [vmem:[%s3] sm:$0xff] %vm82, %v134
    %139 = vst.msk [vmem:[%s3 + $0x8] sm:$0xff] %vm82, %v135
    %140 = vst.msk [vmem:[%s3 + $0x10] sm:$0xff] %vm82, %v136
    %141 = vst.msk [vmem:[%s3 + $0x18] sm:$0xff] %vm82, %v137
  $region21: #{asr_whisper_forward.44} parent=0 // pred_fallthru
    _
  // Predicated region
  $region22: #{asr_whisper_forward.44} parent=0 // pred_check
    _
  $region23: #{asr_whisper_forward.44} parent=0 // pred_check_branch
    %143 = sbr.rel (0) target = $region25
  $region24: #{asr_whisper_forward.44} parent=0 // pred_region
    _
  $region25: #{asr_whisper_forward.44} parent=0 // pred_fallthru
    _
  // Predicated region
  $region26: #{asr_whisper_forward.44} parent=0 // pred_check
    _
  $region27: #{asr_whisper_forward.44} parent=0 // pred_check_branch
    %145 = sbr.rel (0) target = $region29
  $region28: #{asr_whisper_forward.44} parent=0 // pred_region
    _
  $region29: #{asr_whisper_forward.44} parent=0 // pred_fallthru
    _

// kernel: asr_whisper_forward.45
$region0: #{asr_whisper_forward.45}
  #allocation0 [shape = 'u32[]', space=smem, size = 0x4, offset = 0x4, fixed_abs, tag = 'smem constant byte address 0x4 - core index']
  #allocation1 [shape = 'u32[72,128]{1,0:T(1,128)}', space=vmem, size = 0x9000, scoped, tag = 'internal scratch']
  %s0 = inlined_call_operand.vmem [shape: f32[32,32], index: 0, kind: input, shape index: {}]
  %s1 = inlined_call_operand.vmem [shape: f32[1,32], index: 1, kind: input, shape index: {}]
  %s2 = inlined_call_operand.vmem [shape: f32[1,32], index: 2, kind: input, shape index: {}]
  %s3 = inlined_call_operand.vmem [shape: f32[32,32], index: 3, kind: output, shape index: {}]
  %s4 = sld [smem:[#allocation0]]
  $region22: #{asr_whisper_forward.45} parent=0
    _
  %s6 = ssub.s32 1, %s4
  %s7 = scalar_select 0, %s6, %s4
  // Predicated region
  $region2: #{asr_whisper_forward.45} parent=0 // pred_check
    _
  $region3: #{asr_whisper_forward.45} parent=0 // pred_check_branch
    %9 = sbr.rel (0) target = $region5
  $region4: #{asr_whisper_forward.45} parent=0 // pred_region
    _
  $region5: #{asr_whisper_forward.45} parent=0 // pred_fallthru
    _
  // Predicated region
  $region6: #{asr_whisper_forward.45} parent=0 // pred_check
    _
  $region7: #{asr_whisper_forward.45} parent=0 // pred_check_branch
    %11 = sbr.rel (0) target = $region9
  $region8: #{asr_whisper_forward.45} parent=0 // pred_region
    _
  $region9: #{asr_whisper_forward.45} parent=0 // pred_fallthru
    _
  // Predicated region
  $region10: #{asr_whisper_forward.45} parent=0 // pred_check
    _
  $region11: #{asr_whisper_forward.45} parent=0 // pred_check_branch
    %13 = sbr.rel (0) target = $region13
  $region12: #{asr_whisper_forward.45} parent=0 // pred_region
    _
  $region13: #{asr_whisper_forward.45} parent=0 // pred_fallthru
    _
  %v14 = vld [vmem:[%s0] sm:$0xff]
  %v15 = vld [vmem:[%s0 + $0x8] sm:$0xff]
  %v16 = vld [vmem:[%s0 + $0x10] sm:$0xff]
  %v17 = vld [vmem:[%s0 + $0x18] sm:$0xff]
  %vm18 = vcmask 261120
  %v19 = vsel %vm18, %v14, 0.0
  %20 = vadd.xlane.f32.xlu0 %v19
  %v21 = vpop.xlane.xlu0 %20
  %v22 = vsel %vm18, %v15, 0.0
  %23 = vadd.xlane.f32.xlu0 %v22
  %v24 = vpop.xlane.xlu0 %23
  %v25 = vsel %vm18, %v16, 0.0
  %26 = vadd.xlane.f32.xlu0 %v25
  %v27 = vpop.xlane.xlu0 %26
  %v28 = vsel %vm18, %v17, 0.0
  %29 = vadd.xlane.f32.xlu0 %v28
  %v30 = vpop.xlane.xlu0 %29
  %v31 = vrcp.pop 32.0
  %v32 = vmul.f32 32.0, %v31
  %v33 = vsub.f32 1.0, %v32
  %v34 = vmul.f32 %v31, %v33
  %v35 = vadd.f32 %v31, %v34
  %vm36 = vweird.f32 %v31
  %v37 = vsel %vm36, %v31, %v35
  %v38 = vmul.f32 %v21, %v37
  %v39 = vmul.f32 %v24, %v37
  %v40 = vmul.f32 %v27, %v37
  %v41 = vmul.f32 %v30, %v37
  %v42 = vsub.f32 %v14, %v38
  %v43 = vsub.f32 %v15, %v39
  %v44 = vsub.f32 %v16, %v40
  %v45 = vsub.f32 %v17, %v41
  %v46 = vmul.f32 %v42, %v42
  %v47 = vmul.f32 %v43, %v43
  %v48 = vmul.f32 %v44, %v44
  %v49 = vmul.f32 %v45, %v45
  %v50 = vsel %vm18, %v46, 0.0
  %51 = vadd.xlane.f32.xlu0 %v50
  %v52 = vpop.xlane.xlu0 %51
  %v53 = vsel %vm18, %v47, 0.0
  %54 = vadd.xlane.f32.xlu0 %v53
  %v55 = vpop.xlane.xlu0 %54
  %v56 = vsel %vm18, %v48, 0.0
  %57 = vadd.xlane.f32.xlu0 %v56
  %v58 = vpop.xlane.xlu0 %57
  %v59 = vsel %vm18, %v49, 0.0
  %60 = vadd.xlane.f32.xlu0 %v59
  %v61 = vpop.xlane.xlu0 %60
  %v62 = vmul.f32 %v52, %v37
  %v63 = vmul.f32 %v55, %v37
  %v64 = vmul.f32 %v58, %v37
  %v65 = vmul.f32 %v61, %v37
  %v66 = vadd.f32 %v62, 1e-05
  %v67 = vadd.f32 %v63, 1e-05
  %v68 = vadd.f32 %v64, 1e-05
  %v69 = vadd.f32 %v65, 1e-05
  %v70 = vrsqrt.pop %v66
  %v71 = vmul.f32 %v70, %v66
  %v72 = vmul.f32 %v71, %v70
  %v73 = vmul.f32 0.5, %v72
  %v74 = vsub.f32 1.5, %v73
  %v75 = vmul.f32 %v70, %v74
  %vm76 = vweird.f32 %v66
  %vm77 = vweird.f32 %v70
  %vm78 = vmor %vm76, %vm77
  %v79 = vsel %vm78, %v70, %v75
  %v80 = vrsqrt.pop %v67
  %v81 = vmul.f32 %v80, %v67
  %v82 = vmul.f32 %v81, %v80
  %v83 = vmul.f32 0.5, %v82
  %v84 = vsub.f32 1.5, %v83
  %v85 = vmul.f32 %v80, %v84
  %vm86 = vweird.f32 %v67
  %vm87 = vweird.f32 %v80
  %vm88 = vmor %vm86, %vm87
  %v89 = vsel %vm88, %v80, %v85
  %v90 = vrsqrt.pop %v68
  %v91 = vmul.f32 %v90, %v68
  %v92 = vmul.f32 %v91, %v90
  %v93 = vmul.f32 0.5, %v92
  %v94 = vsub.f32 1.5, %v93
  %v95 = vmul.f32 %v90, %v94
  %vm96 = vweird.f32 %v68
  %vm97 = vweird.f32 %v90
  %vm98 = vmor %vm96, %vm97
  %v99 = vsel %vm98, %v90, %v95
  %v100 = vrsqrt.pop %v69
  %v101 = vmul.f32 %v100, %v69
  %v102 = vmul.f32 %v101, %v100
  %v103 = vmul.f32 0.5, %v102
  %v104 = vsub.f32 1.5, %v103
  %v105 = vmul.f32 %v100, %v104
  %vm106 = vweird.f32 %v69
  %vm107 = vweird.f32 %v100
  %vm108 = vmor %vm106, %vm107
  %v109 = vsel %vm108, %v100, %v105
  %v110 = vmul.f32 %v42, %v79
  %v111 = vmul.f32 %v43, %v89
  %v112 = vmul.f32 %v44, %v99
  %v113 = vmul.f32 %v45, %v109
  %v114 = vld [vmem:[%s1] sm:$0x1]
  %v116 = vperm.slane %v114, 0
  %v118 = vmul.f32 %v110, %v116
  %v119 = vmul.f32 %v111, %v116
  %v120 = vmul.f32 %v112, %v116
  %v121 = vmul.f32 %v113, %v116
  %v122 = vld [vmem:[%s2] sm:$0x1]
  %v124 = vperm.slane %v122, 0
  %v126 = vadd.f32 %v118, %v124
  %v127 = vadd.f32 %v119, %v124
  %v128 = vadd.f32 %v120, %v124
  %v129 = vadd.f32 %v121, %v124
  %130 = vst.msk [vmem:[%s3] sm:$0xff] %vm18, %v126
  %131 = vst.msk [vmem:[%s3 + $0x8] sm:$0xff] %vm18, %v127
  %132 = vst.msk [vmem:[%s3 + $0x10] sm:$0xff] %vm18, %v128
  %133 = vst.msk [vmem:[%s3 + $0x18] sm:$0xff] %vm18, %v129
  // Predicated region
  $region14: #{asr_whisper_forward.45} parent=0 // pred_check
    _
  $region15: #{asr_whisper_forward.45} parent=0 // pred_check_branch
    %135 = sbr.rel (0) target = $region17
  $region16: #{asr_whisper_forward.45} parent=0 // pred_region
    _
  $region17: #{asr_whisper_forward.45} parent=0 // pred_fallthru
    _
  // Predicated region
  $region18: #{asr_whisper_forward.45} parent=0 // pred_check
    _
  $region19: #{asr_whisper_forward.45} parent=0 // pred_check_branch
    %137 = sbr.rel (0) target = $region21
  $region20: #{asr_whisper_forward.45} parent=0 // pred_region
    _
  $region21: #{asr_whisper_forward.45} parent=0 // pred_fallthru
    _

// kernel: asr_whisper_forward.46
$region0: #{asr_whisper_forward.46}
  #allocation0 [shape = 'u32[]', space=smem, size = 0x4, offset = 0x4, fixed_abs, tag = 'smem constant byte address 0x4 - core index']
  #allocation1 [shape = 'u32[72,128]{1,0:T(1,128)}', space=vmem, size = 0x9000, scoped, tag = 'internal scratch']
  #allocation2 [shape = 'f32[32,96]{1,0:T(8,128)}', space=vmem, size = 0x4000, scoped, tag = 'scratch operand']
  %s0 = inlined_call_operand.vmem [shape: f32[32,32], index: 0, kind: input, shape index: {}]
  %s1 = inlined_call_operand.vmem [shape: f32[32,96], index: 1, kind: input, shape index: {}]
  %s2 = inlined_call_operand.vmem [shape: f32[1,96], index: 2, kind: input, shape index: {}]
  %s3 = inlined_call_operand.vmem [shape: f32[32,96], index: 3, kind: output, shape index: {}]
  %s4 = sld [smem:[#allocation0]]
  $region30: #{asr_whisper_forward.46} parent=0
    _
  %s6 = ssub.s32 1, %s4
  %s7 = scalar_select 0, %s6, %s4
  // Predicated region
  $region2: #{asr_whisper_forward.46} parent=0 // pred_check
    _
  $region3: #{asr_whisper_forward.46} parent=0 // pred_check_branch
    %9 = sbr.rel (0) target = $region5
  $region4: #{asr_whisper_forward.46} parent=0 // pred_region
    _
  $region5: #{asr_whisper_forward.46} parent=0 // pred_fallthru
    _
  // Predicated region
  $region6: #{asr_whisper_forward.46} parent=0 // pred_check
    _
  $region7: #{asr_whisper_forward.46} parent=0 // pred_check_branch
    %11 = sbr.rel (0) target = $region9
  $region8: #{asr_whisper_forward.46} parent=0 // pred_region
    _
  $region9: #{asr_whisper_forward.46} parent=0 // pred_fallthru
    _
  // Predicated region
  $region10: #{asr_whisper_forward.46} parent=0 // pred_check
    _
  $region11: #{asr_whisper_forward.46} parent=0 // pred_check_branch
    %13 = sbr.rel (0) target = $region13
  $region12: #{asr_whisper_forward.46} parent=0 // pred_region
    _
  $region13: #{asr_whisper_forward.46} parent=0 // pred_fallthru
    _
  %p15 = scmp.eq.s32.totalorder 0, 0
  // Predicated region
  $region14: #{asr_whisper_forward.46} parent=0 // pred_check
    %p16 = pneg %p15
  $region15: #{asr_whisper_forward.46} parent=0 // pred_check_branch
    %18 = sbr.rel (%p16) target = $region17
  $region16: #{asr_whisper_forward.46} parent=0 // pred_region
    %vm19 = vcmask 785408
    %20 = vst.msk [vmem:[#allocation2] sm:$0xff] %vm19, 0.0
    %21 = vst.msk [vmem:[#allocation2 + $0x8] sm:$0xff] %vm19, 0.0
    %22 = vst.msk [vmem:[#allocation2 + $0x10] sm:$0xff] %vm19, 0.0
    %23 = vst.msk [vmem:[#allocation2 + $0x18] sm:$0xff] %vm19, 0.0
  $region17: #{asr_whisper_forward.46} parent=0 // pred_fallthru
    _
  %v24 = vld [vmem:[#allocation2] sm:$0xff]
  %v25 = vld [vmem:[#allocation2 + $0x8] sm:$0xff]
  %v26 = vld [vmem:[#allocation2 + $0x10] sm:$0xff]
  %v27 = vld [vmem:[#allocation2 + $0x18] sm:$0xff]
  %v28 = vld [vmem:[%s0] sm:$0xff]
  %v29 = vld [vmem:[%s0 + $0x8] sm:$0xff]
  %v30 = vld [vmem:[%s0 + $0x10] sm:$0xff]
  %v31 = vld [vmem:[%s0 + $0x18] sm:$0xff]
  %v32 = vpack.c.bf16 %v29, %v28
  %v33 = vpack.c.bf16 %v31, %v30
  %v34 = vld [vmem:[%s1] sm:$0xff]
  %v35 = vld [vmem:[%s1 + $0x8] sm:$0xff]
  %v36 = vld [vmem:[%s1 + $0x10] sm:$0xff]
  %v37 = vld [vmem:[%s1 + $0x18] sm:$0xff]
  %v38 = vpack.c.bf16 %v35, %v34
  %v39 = vpack.c.bf16 %v37, %v36
  %vm40 = vcmask 261120
  %v42 = vsel %vm40, %v32, 0
  %v45 = vsel %vm40, %v33, 0
  %47 = vmatpush.bf16.msra.mxu0 0
  %48 = vmatpush.bf16.msra.mxu0 0
  %49 = vmatpush.bf16.msra.mxu0 0
  %50 = vmatpush.bf16.msra.mxu0 0
  %51 = vmatpush.bf16.msra.mxu0 0
  %52 = vmatpush.bf16.msra.mxu0 0
  %53 = vmatpush.bf16.msra.mxu0 %v39
  %54 = vmatpush.bf16.msra.mxu0 %v38
  %55 = vmatmul.bf16.gmra.mxu0 %v42
  %v56 = vpop.f32.mrf.mxu0
  %v57 = vadd.f32 0.0, %v56
  %v58 = vpop.f32.mrf.mxu0
  %v59 = vadd.f32 0.0, %v58
  %60 = vmatmul.bf16.gmra.mxu0 %v45
  %v61 = vpop.f32.mrf.mxu0
  %v62 = vadd.f32 0.0, %v61
  %v63 = vpop.f32.mrf.mxu0
  %v64 = vadd.f32 0.0, %v63
  %65 = vdwg.mxu0
  %v66 = vadd.f32 %v24, %v57
  %v67 = vadd.f32 %v25, %v59
  %v68 = vadd.f32 %v26, %v62
  %v69 = vadd.f32 %v27, %v64
  %vm70 = vcmask 785408
  %71 = vst.msk [vmem:[#allocation2] sm:$0xff] %vm70, %v66
  %72 = vst.msk [vmem:[#allocation2 + $0x8] sm:$0xff] %vm70, %v67
  %73 = vst.msk [vmem:[#allocation2 + $0x10] sm:$0xff] %vm70, %v68
  %74 = vst.msk [vmem:[#allocation2 + $0x18] sm:$0xff] %vm70, %v69
  // Predicated region
  $region18: #{asr_whisper_forward.46} parent=0 // pred_check
    %p75 = pneg %p15
  $region19: #{asr_whisper_forward.46} parent=0 // pred_check_branch
    %77 = sbr.rel (%p75) target = $region21
  $region20: #{asr_whisper_forward.46} parent=0 // pred_region
    %v78 = vld [vmem:[#allocation2] sm:$0xff]
    %v79 = vld [vmem:[#allocation2 + $0x8] sm:$0xff]
    %v80 = vld [vmem:[#allocation2 + $0x10] sm:$0xff]
    %v81 = vld [vmem:[#allocation2 + $0x18] sm:$0xff]
    %v82 = vld [vmem:[%s2] sm:$0x1]
    %v84 = vperm.slane %v82, 0
    %v86 = vadd.f32 %v78, %v84
    %v87 = vadd.f32 %v79, %v84
    %v88 = vadd.f32 %v80, %v84
    %v89 = vadd.f32 %v81, %v84
    %90 = vst.msk [vmem:[%s3] sm:$0xff] %vm70, %v86
    %91 = vst.msk [vmem:[%s3 + $0x8] sm:$0xff] %vm70, %v87
    %92 = vst.msk [vmem:[%s3 + $0x10] sm:$0xff] %vm70, %v88
    %93 = vst.msk [vmem:[%s3 + $0x18] sm:$0xff] %vm70, %v89
  $region21: #{asr_whisper_forward.46} parent=0 // pred_fallthru
    _
  // Predicated region
  $region22: #{asr_whisper_forward.46} parent=0 // pred_check
    _
  $region23: #{asr_whisper_forward.46} parent=0 // pred_check_branch
    %95 = sbr.rel (0) target = $region25
  $region24: #{asr_whisper_forward.46} parent=0 // pred_region
    _
  $region25: #{asr_whisper_forward.46} parent=0 // pred_fallthru
    _
  // Predicated region
  $region26: #{asr_whisper_forward.46} parent=0 // pred_check
    _
  $region27: #{asr_whisper_forward.46} parent=0 // pred_check_branch
    %97 = sbr.rel (0) target = $region29
  $region28: #{asr_whisper_forward.46} parent=0 // pred_region
    _
  $region29: #{asr_whisper_forward.46} parent=0 // pred_fallthru
    _

// kernel: asr_whisper_forward.47
$region0: #{asr_whisper_forward.47}
  #allocation0 [shape = 'u32[]', space=smem, size = 0x4, offset = 0x4, fixed_abs, tag = 'smem constant byte address 0x4 - core index']
  #allocation1 [shape = 'u32[72,128]{1,0:T(1,128)}', space=vmem, size = 0x9000, scoped, tag = 'internal scratch']
  #allocation2 [shape = 'f32[16,1]{1,0:T(8,128)}', space=vmem, size = 0x2000, scoped, tag = 'scratch operand']
  #allocation3 [shape = 'f32[16,1]{1,0:T(8,128)}', space=vmem, size = 0x2000, scoped, tag = 'scratch operand']
  #allocation4 [shape = 'f32[16,8]{1,0:T(8,128)}', space=vmem, size = 0x2000, scoped, tag = 'scratch operand']
  %s0 = inlined_call_operand.vmem [shape: f32[8,16,8], index: 0, kind: input, shape index: {}]
  %s1 = inlined_call_operand.vmem [shape: f32[8,16,8], index: 1, kind: input, shape index: {}]
  %s2 = inlined_call_operand.vmem [shape: f32[8,16,8], index: 2, kind: input, shape index: {}]
  %s3 = inlined_call_operand.vmem [shape: f32[8,16,8], index: 3, kind: output, shape index: {}]
  %s4 = sld [smem:[#allocation0]]
  $region53: #{asr_whisper_forward.47} parent=0
    _
  %s6 = ssub.s32 1, %s4
  %s7 = scalar_select 0, %s6, %s4
  loop: start=0, step=1, limit=10
  $region2: #{asr_whisper_forward.47} parent=0 // loop_pre_header
    _
  $region3: #{asr_whisper_forward.47} parent=0 // loop_header
    %s9 = sphi 0, %s13
    %p10 = scmp.ge.s32.totalorder %s9, 10
    %s16 = sphi 0, %s35
    %s17 = sphi 0, %s31
    %s18 = sphi 0, %s27
    %s19 = sphi 0, %s16
    %s20 = sphi 0, %s17
    %s21 = sphi 0, %s18
    %s22 = sphi 0, %s19
    %s23 = sphi 0, %s20
    %s24 = sphi 0, %s21
    %s40 = sphi 0, %s42
    %s43 = sphi 0, %s40
    %s44 = sphi 0, %s43
    %s60 = sphi 0, %s44
    %s68 = sphi 0, %s70
    %s71 = sphi 0, %s68
    %s72 = sphi 0, %s71
    %s88 = sphi 0, %s72
    %s96 = sphi 0, %s98
    %s99 = sphi 0, %s96
    %s100 = sphi 0, %s99
    %s116 = sphi 0, %s100
    %s124 = sphi 0, %s126
    %s127 = sphi 0, %s124
    %s128 = sphi 0, %s127
    %s144 = sphi 0, %s128
  $region4: #{asr_whisper_forward.47} parent=0 // loop_header_branch
    %12 = sbr.rel (%p10) target = $region8
  $region5: #{asr_whisper_forward.47} parent=0 // loop_body
    %s14 = ssub.s32 %s9, 1
    %s15 = ssub.s32 %s9, 2
    %s25 = sadd.s32 1, %s18
    %p26 = scmp.ge.s32.totalorder %s25, 1
    %s27 = scalar_select %p26, 0, %s25
    %s28 = sadd.s32 1, %s17
    %s29 = scalar_select %p26, %s28, %s17
    %p30 = scmp.ge.s32.totalorder %s29, 1
    %s31 = scalar_select %p30, 0, %s29
    %s32 = sadd.s32 1, %s16
    %s33 = scalar_select %p30, %s32, %s16
    %p34 = scmp.ge.s32.totalorder %s33, 8
    %s35 = scalar_select %p34, 0, %s33
    %s36 = ssub.s32 %s16, %s35
    %s37 = ssub.s32 %s17, %s31
    %s38 = sor.u32 %s36, %s37
    %p39 = scmp.eq.s32.totalorder %s38, 0
    %s41 = sadd.s32 %s40, 1
    %s42 = scalar_select %p39, %s40, %s41
    %p45 = pneg %p39
    %p46 = scmp.eq.s32.totalorder %s9, 7
    %p47 = por %p45, %p46
    %p48 = scmp.ne.s32.totalorder %s40, %s43
    %p49 = scmp.eq.s32.totalorder %s9, 0
    %p50 = por %p48, %p49
    %p51 = scmp.ne.s32.totalorder %s40, %s43
    %p52 = scmp.eq.s32.totalorder %s14, 7
    %p53 = por %p51, %p52
    %p54 = scmp.ne.s32.totalorder %s43, %s44
    %p55 = scmp.eq.s32.totalorder %s14, 0
    %p56 = por %p54, %p55
    %p57 = scmp.ne.s32.totalorder %s43, %s44
    %p58 = scmp.eq.s32.totalorder %s15, 7
    %p59 = por %p57, %p58
    %p61 = scmp.ne.s32.totalorder %s44, %s60
    %p62 = scmp.eq.s32.totalorder %s15, 0
    %p63 = por %p61, %p62
    %s64 = ssub.s32 %s16, %s35
    %s65 = ssub.s32 %s18, %s27
    %s66 = sor.u32 %s64, %s65
    %p67 = scmp.eq.s32.totalorder %s66, 0
    %s69 = sadd.s32 %s68, 1
    %s70 = scalar_select %p67, %s68, %s69
    %p73 = pneg %p67
    %p74 = scmp.eq.s32.totalorder %s9, 7
    %p75 = por %p73, %p74
    %p76 = scmp.ne.s32.totalorder %s68, %s71
    %p77 = scmp.eq.s32.totalorder %s9, 0
    %p78 = por %p76, %p77
    %p79 = scmp.ne.s32.totalorder %s68, %s71
    %p80 = scmp.eq.s32.totalorder %s14, 7
    %p81 = por %p79, %p80
    %p82 = scmp.ne.s32.totalorder %s71, %s72
    %p83 = scmp.eq.s32.totalorder %s14, 0
    %p84 = por %p82, %p83
    %p85 = scmp.ne.s32.totalorder %s71, %s72
    %p86 = scmp.eq.s32.totalorder %s15, 7
    %p87 = por %p85, %p86
    %p89 = scmp.ne.s32.totalorder %s72, %s88
    %p90 = scmp.eq.s32.totalorder %s15, 0
    %p91 = por %p89, %p90
    %s92 = ssub.s32 %s16, %s35
    %s93 = ssub.s32 %s18, %s27
    %s94 = sor.u32 %s92, %s93
    %p95 = scmp.eq.s32.totalorder %s94, 0
    %s97 = sadd.s32 %s96, 1
    %s98 = scalar_select %p95, %s96, %s97
    %p101 = pneg %p95
    %p102 = scmp.eq.s32.totalorder %s9, 7
    %p103 = por %p101, %p102
    %p104 = scmp.ne.s32.totalorder %s96, %s99
    %p105 = scmp.eq.s32.totalorder %s9, 0
    %p106 = por %p104, %p105
    %p107 = scmp.ne.s32.totalorder %s96, %s99
    %p108 = scmp.eq.s32.totalorder %s14, 7
    %p109 = por %p107, %p108
    %p110 = scmp.ne.s32.totalorder %s99, %s100
    %p111 = scmp.eq.s32.totalorder %s14, 0
    %p112 = por %p110, %p111
    %p113 = scmp.ne.s32.totalorder %s99, %s100
    %p114 = scmp.eq.s32.totalorder %s15, 7
    %p115 = por %p113, %p114
    %p117 = scmp.ne.s32.totalorder %s100, %s116
    %p118 = scmp.eq.s32.totalorder %s15, 0
    %p119 = por %p117, %p118
    %s120 = ssub.s32 %s16, %s35
    %s121 = ssub.s32 %s17, %s31
    %s122 = sor.u32 %s120, %s121
    %p123 = scmp.eq.s32.totalorder %s122, 0
    %s125 = sadd.s32 %s124, 1
    %s126 = scalar_select %p123, %s124, %s125
    %p129 = pneg %p123
    %p130 = scmp.eq.s32.totalorder %s9, 7
    %p131 = por %p129, %p130
    %p132 = scmp.ne.s32.totalorder %s124, %s127
    %p133 = scmp.eq.s32.totalorder %s9, 0
    %p134 = por %p132, %p133
    %p135 = scmp.ne.s32.totalorder %s124, %s127
    %p136 = scmp.eq.s32.totalorder %s14, 7
    %p137 = por %p135, %p136
    %p138 = scmp.ne.s32.totalorder %s127, %s128
    %p139 = scmp.eq.s32.totalorder %s14, 0
    %p140 = por %p138, %p139
    %p141 = scmp.ne.s32.totalorder %s127, %s128
    %p142 = scmp.eq.s32.totalorder %s15, 7
    %p143 = por %p141, %p142
    %p145 = scmp.ne.s32.totalorder %s128, %s144
    %p146 = scmp.eq.s32.totalorder %s15, 0
    %p147 = por %p145, %p146
    %p148 = scmp.le.s32.totalorder 1, %s9
    %p149 = scmp.lt.s32.totalorder %s9, 9
    %p150 = pnand %p148, %p149
    %p151 = pneg %p150
    // Predicated region
    $region9: #{asr_whisper_forward.47} parent=5 // pred_check
      _
    $region10: #{asr_whisper_forward.47} parent=5 // pred_check_branch
      %153 = sbr.rel (%p150) target = $region12
    $region11: #{asr_whisper_forward.47} parent=5 // pred_region
      %s154 = ssub.s32 %s9, 1
    $region12: #{asr_whisper_forward.47} parent=5 // pred_fallthru
      _
    %p155 = scmp.lt.s32.totalorder %s9, 8
    // Predicated region
    $region13: #{asr_whisper_forward.47} parent=5 // pred_check
      %p156 = pneg %p155
    $region14: #{asr_whisper_forward.47} parent=5 // pred_check_branch
      %158 = sbr.rel (%p156) target = $region16
    $region15: #{asr_whisper_forward.47} parent=5 // pred_region
      // Predicated region
      $region17: #{asr_whisper_forward.47} parent=15 // pred_check
        %p159 = pneg %p50
      $region18: #{asr_whisper_forward.47} parent=15 // pred_check_branch
        %161 = sbr.rel (%p159) target = $region20
      $region19: #{asr_whisper_forward.47} parent=15 // pred_region
        %s162 = smul.u32 2, %s17
        %p163 = scmp.lt.s32.totalorder %s16, 7
        %s164 = scalar_select %p163, %s16, 7
        %p165 = scmp.lt.s32.totalorder %s162, 1
        %s166 = scalar_select %p165, %s162, 1
        %s167 = smul.addr %s164, 2
        %s168 = sadd.s32 %s166, %s167
        %s169 = smul.addr %s168, 8
        %s170 = scalar_lea.vmem %s0, %s169
        %s171 = smul.u32 2, %s17
      $region20: #{asr_whisper_forward.47} parent=15 // pred_fallthru
        _
      // Predicated region
      $region21: #{asr_whisper_forward.47} parent=15 // pred_check
        %p172 = pneg %p78
      $region22: #{asr_whisper_forward.47} parent=15 // pred_check_branch
        %174 = sbr.rel (%p172) target = $region24
      $region23: #{asr_whisper_forward.47} parent=15 // pred_region
        %s175 = smul.u32 2, %s18
        %p176 = scmp.lt.s32.totalorder %s16, 7
        %s177 = scalar_select %p176, %s16, 7
        %p178 = scmp.lt.s32.totalorder %s175, 1
        %s179 = scalar_select %p178, %s175, 1
        %s180 = smul.addr %s177, 2
        %s181 = sadd.s32 %s179, %s180
        %s182 = smul.addr %s181, 8
        %s183 = scalar_lea.vmem %s1, %s182
        %s184 = smul.u32 2, %s18
      $region24: #{asr_whisper_forward.47} parent=15 // pred_fallthru
        _
      // Predicated region
      $region25: #{asr_whisper_forward.47} parent=15 // pred_check
        %p185 = pneg %p106
      $region26: #{asr_whisper_forward.47} parent=15 // pred_check_branch
        %187 = sbr.rel (%p185) target = $region28
      $region27: #{asr_whisper_forward.47} parent=15 // pred_region
        %s188 = smul.u32 2, %s18
        %p189 = scmp.lt.s32.totalorder %s16, 7
        %s190 = scalar_select %p189, %s16, 7
        %p191 = scmp.lt.s32.totalorder %s188, 1
        %s192 = scalar_select %p191, %s188, 1
        %s193 = smul.addr %s190, 2
        %s194 = sadd.s32 %s192, %s193
        %s195 = smul.addr %s194, 8
        %s196 = scalar_lea.vmem %s2, %s195
        %s197 = smul.u32 2, %s18
      $region28: #{asr_whisper_forward.47} parent=15 // pred_fallthru
        _
    $region16: #{asr_whisper_forward.47} parent=5 // pred_fallthru
      _
    %p198 = scmp.le.s32.totalorder 1, %s9
    %p199 = scmp.lt.s32.totalorder %s9, 9
    %p200 = pnand %p198, %p199
    %p201 = pneg %p200
    // Predicated region
    $region29: #{asr_whisper_forward.47} parent=5 // pred_check
      _
    $region30: #{asr_whisper_forward.47} parent=5 // pred_check_branch
      %203 = sbr.rel (%p200) target = $region32
    $region31: #{asr_whisper_forward.47} parent=5 // pred_region
      %s204 = ssub.s32 %s9, 1
      %s205 = smul.u32 2, %s20
      %p206 = scmp.lt.s32.totalorder %s19, 7
      %s207 = scalar_select %p206, %s19, 7
      %p208 = scmp.lt.s32.totalorder %s205, 1
      %s209 = scalar_select %p208, %s205, 1
      %s210 = smul.addr %s207, 2
      %s211 = sadd.s32 %s209, %s210
      %s212 = smul.addr %s211, 8
      %s213 = scalar_lea.vmem %s0, %s212
      %p214 = pneg %p56
      %p215 = pneg %p53
      %s216 = smul.u32 2, %s21
      %p217 = scmp.lt.s32.totalorder %s19, 7
      %s218 = scalar_select %p217, %s19, 7
      %p219 = scmp.lt.s32.totalorder %s216, 1
      %s220 = scalar_select %p219, %s216, 1
      %s221 = smul.addr %s218, 2
      %s222 = sadd.s32 %s220, %s221
      %s223 = smul.addr %s222, 8
      %s224 = scalar_lea.vmem %s1, %s223
      %p225 = pneg %p84
      %p226 = pneg %p81
      %s227 = smul.u32 2, %s21
      %p228 = scmp.lt.s32.totalorder %s19, 7
      %s229 = scalar_select %p228, %s19, 7
      %p230 = scmp.lt.s32.totalorder %s227, 1
      %s231 = scalar_select %p230, %s227, 1
      %s232 = smul.addr %s229, 2
      %s233 = sadd.s32 %s231, %s232
      %s234 = smul.addr %s233, 8
      %s235 = scalar_lea.vmem %s2, %s234
      %p236 = pneg %p112
      %p237 = pneg %p109
      %p238 = pneg %p140
      %p239 = pneg %p137
      %s240 = smul.u32 2, %s20
      %p241 = scmp.lt.s32.totalorder %s19, 7
      %s242 = scalar_select %p241, %s19, 7
      %p243 = scmp.lt.s32.totalorder %s240, 1
      %s244 = scalar_select %p243, %s240, 1
      %s245 = smul.addr %s242, 2
      %s246 = sadd.s32 %s244, %s245
      %s247 = smul.addr %s246, 8
      %s248 = scalar_lea.vmem %s3, %s247
      %s249 = smul.u32 2, %s20
      %p250 = scmp.lt.s32.totalorder %s19, 7
      %s251 = scalar_select %p250, %s19, 7
      %p252 = scmp.lt.s32.totalorder %s249, 1
      %s253 = scalar_select %p252, %s249, 1
      %s254 = smul.addr %s251, 2
      %s255 = sadd.s32 %s253, %s254
      %s256 = smul.addr %s255, 8
      %s257 = scalar_lea.vmem %s0, %s256
      %s258 = smul.u32 2, %s20
      %s259 = smul.u32 2, %s21
      %p260 = scmp.lt.s32.totalorder %s19, 7
      %s261 = scalar_select %p260, %s19, 7
      %p262 = scmp.lt.s32.totalorder %s259, 1
      %s263 = scalar_select %p262, %s259, 1
      %s264 = smul.addr %s261, 2
      %s265 = sadd.s32 %s263, %s264
      %s266 = smul.addr %s265, 8
      %s267 = scalar_lea.vmem %s1, %s266
      %s268 = smul.u32 2, %s21
      %s269 = smul.u32 2, %s21
      %p270 = scmp.lt.s32.totalorder %s19, 7
      %s271 = scalar_select %p270, %s19, 7
      %p272 = scmp.lt.s32.totalorder %s269, 1
      %s273 = scalar_select %p272, %s269, 1
      %s274 = smul.addr %s271, 2
      %s275 = sadd.s32 %s273, %s274
      %s276 = smul.addr %s275, 8
      %s277 = scalar_lea.vmem %s2, %s276
      %s278 = smul.u32 2, %s21
      %s279 = smul.u32 2, %s20
      %p280 = scmp.lt.s32.totalorder %s19, 7
      %s281 = scalar_select %p280, %s19, 7
      %p282 = scmp.lt.s32.totalorder %s279, 1
      %s283 = scalar_select %p282, %s279, 1
      %s284 = smul.addr %s281, 2
      %s285 = sadd.s32 %s283, %s284
      %s286 = smul.addr %s285, 8
      %s287 = scalar_lea.vmem %s3, %s286
      %s288 = smul.u32 2, %s20
      %p290 = scmp.eq.s32.totalorder %s21, 0
      // Predicated region
      $region33: #{asr_whisper_forward.47} parent=31 // pred_check
        %p291 = pneg %p290
      $region34: #{asr_whisper_forward.47} parent=31 // pred_check_branch
        %293 = sbr.rel (%p291) target = $region36
      $region35: #{asr_whisper_forward.47} parent=31 // pred_region
        %vm294 = vcmask 7168
        %295 = vst.msk [vmem:[#allocation2] sm:$0xff] %vm294, -1e+30
        %296 = vst.msk [vmem:[#allocation2 + $0x8] sm:$0xff] %vm294, -1e+30
        %297 = vst.msk [vmem:[#allocation3] sm:$0xff] %vm294, 0.0
        %298 = vst.msk [vmem:[#allocation3 + $0x8] sm:$0xff] %vm294, 0.0
        %vm299 = vcmask 64512
        %300 = vst.msk [vmem:[#allocation4] sm:$0xff] %vm299, 0.0
        %301 = vst.msk [vmem:[#allocation4 + $0x8] sm:$0xff] %vm299, 0.0
      $region36: #{asr_whisper_forward.47} parent=31 // pred_fallthru
        _
      %v302 = vld [vmem:[%s257] sm:$0xff]
      %v303 = vld [vmem:[%s257 + $0x8] sm:$0xff]
      %v304 = vld [vmem:[%s267] sm:$0xff]
      %v305 = vld [vmem:[%s267 + $0x8] sm:$0xff]
      %v306 = vld [vmem:[%s277] sm:$0xff]
      %v307 = vld [vmem:[%s277 + $0x8] sm:$0xff]
      %v308 = vpack.c.bf16 %v303, %v302
      %v309 = vpack.c.bf16 %v305, %v304
      %vm310 = vcmask 64512
      %v312 = vsel %vm310, %v308, 0
      %v315 = vsel %vm310, %v309, 0
      %317 = vmatpush.bf16.xpose.msra.mxu0 0
      %318 = vmatpush.bf16.xpose.msra.mxu0 0
      %319 = vmatpush.bf16.xpose.msra.mxu0 0
      %320 = vmatpush.bf16.xpose.msra.mxu0 0
      %321 = vmatpush.bf16.xpose.msra.mxu0 0
      %322 = vmatpush.bf16.xpose.msra.mxu0 0
      %323 = vmatpush.bf16.xpose.msra.mxu0 0
      %324 = vmatpush.bf16.xpose.msra.mxu0 %v315
      %325 = vmatmul.bf16.gmra.mxu0 %v312
      %v326 = vpop.f32.mrf.mxu0
      %v327 = vadd.f32 0.0, %v326
      %v328 = vpop.f32.mrf.mxu0
      %v329 = vadd.f32 0.0, %v328
      %330 = vdwg.mxu0
      %v331 = vmul.f32 %v327, 0.35355338
      %v332 = vmul.f32 %v329, 0.35355338
      %v333 = vld [vmem:[#allocation2] sm:$0xff]
      %v334 = vld [vmem:[#allocation2 + $0x8] sm:$0xff]
      %vm335 = vcmask 130048
      %v336 = vsel %vm335, %v331, -inf
      %337 = vmax.xlane.f32.xlu0 %v336
      %v338 = vpop.xlane.xlu0 %337
      %v339 = vsel %vm335, %v332, -inf
      %340 = vmax.xlane.f32.xlu0 %v339
      %v341 = vpop.xlane.xlu0 %340
      %v342 = vmax.f32 %v333, %v338
      %v343 = vmax.f32 %v334, %v341
      %v344 = vsub.f32 %v333, %v342
      %v345 = vsub.f32 %v334, %v343
      %v346 = vmul.f32 %v344, 1.442695
      %v347 = vpow.pop %v346
      %v348 = vmul.f32 %v345, 1.442695
      %v349 = vpow.pop %v348
      %351 = vset.pattern.permute.xlu0 0
      %352 = vperm.xlu0 %351, %v342
      %v353 = vpop.permute.xlu0 %352
      %356 = vset.pattern.permute.xlu0 0
      %357 = vperm.xlu0 %356, %v343
      %v358 = vpop.permute.xlu0 %357
      %v360 = vsub.f32 %v331, %v353
      %v361 = vsub.f32 %v332, %v358
      %v362 = vmul.f32 %v360, 1.442695
      %v363 = vpow.pop %v362
      %v364 = vmul.f32 %v361, 1.442695
      %v365 = vpow.pop %v364
      %v366 = vld [vmem:[#allocation3] sm:$0xff]
      %v367 = vld [vmem:[#allocation3 + $0x8] sm:$0xff]
      %v368 = vmul.f32 %v347, %v366
      %v369 = vmul.f32 %v349, %v367
      %v370 = vsel %vm335, %v363, 0.0
      %371 = vadd.xlane.f32.xlu0 %v370
      %v372 = vpop.xlane.xlu0 %371
      %v373 = vsel %vm335, %v365, 0.0
      %374 = vadd.xlane.f32.xlu0 %v373
      %v375 = vpop.xlane.xlu0 %374
      %v376 = vadd.f32 %v368, %v372
      %v377 = vadd.f32 %v369, %v375
      %vm378 = vcmask 7168
      %379 = vst.msk [vmem:[#allocation3] sm:$0xff] %vm378, %v376
      %380 = vst.msk [vmem:[#allocation3 + $0x8] sm:$0xff] %vm378, %v377
      %v381 = vld [vmem:[#allocation4] sm:$0xff]
      %v382 = vld [vmem:[#allocation4 + $0x8] sm:$0xff]
      %384 = vset.pattern.permute.xlu0 0
      %385 = vperm.xlu0 %384, %v347
      %v386 = vpop.permute.xlu0 %385
      %389 = vset.pattern.permute.xlu0 0
      %390 = vperm.xlu0 %389, %v349
      %v391 = vpop.permute.xlu0 %390
      %v393 = vmul.f32 %v386, %v381
      %v394 = vmul.f32 %v391, %v382
      %v395 = vpack.c.bf16 %v365, %v363
      %v396 = vpack.c.bf16 %v307, %v306
      %v398 = vsel %vm335, %v395, 0
      %400 = vmatpush.bf16.msra.mxu0 0
      %401 = vmatpush.bf16.msra.mxu0 0
      %402 = vmatpush.bf16.msra.mxu0 0
      %403 = vmatpush.bf16.msra.mxu0 0
      %404 = vmatpush.bf16.msra.mxu0 0
      %405 = vmatpush.bf16.msra.mxu0 0
      %406 = vmatpush.bf16.msra.mxu0 0
      %407 = vmatpush.bf16.msra.mxu0 %v396
      %408 = vmatmul.bf16.gmra.mxu0 %v398
      %v409 = vpop.f32.mrf.mxu0
      %v410 = vadd.f32 0.0, %v409
      %v411 = vpop.f32.mrf.mxu0
      %v412 = vadd.f32 0.0, %v411
      %413 = vdwg.mxu0
      %v414 = vadd.f32 %v393, %v410
      %v415 = vadd.f32 %v394, %v412
      %416 = vst.msk [vmem:[#allocation4] sm:$0xff] %vm310, %v414
      %417 = vst.msk [vmem:[#allocation4 + $0x8] sm:$0xff] %vm310, %v415
      %418 = vst.msk [vmem:[#allocation2] sm:$0xff] %vm378, %v342
      %419 = vst.msk [vmem:[#allocation2 + $0x8] sm:$0xff] %vm378, %v343
      // Predicated region
      $region37: #{asr_whisper_forward.47} parent=31 // pred_check
        %p420 = pneg %p290
      $region38: #{asr_whisper_forward.47} parent=31 // pred_check_branch
        %422 = sbr.rel (%p420) target = $region40
      $region39: #{asr_whisper_forward.47} parent=31 // pred_region
        %v423 = vld [vmem:[#allocation4] sm:$0xff]
        %v424 = vld [vmem:[#allocation4 + $0x8] sm:$0xff]
        %v425 = vld [vmem:[#allocation3] sm:$0xff]
        %v426 = vld [vmem:[#allocation3 + $0x8] sm:$0xff]
        %v427 = vrcp.pop %v425
        %v428 = vrcp.pop %v426
        %430 = vset.pattern.permute.xlu0 0
        %431 = vperm.xlu0 %430, %v427
        %v432 = vpop.permute.xlu0 %431
        %435 = vset.pattern.permute.xlu0 0
        %436 = vperm.xlu0 %435, %v428
        %v437 = vpop.permute.xlu0 %436
        %v439 = vmul.f32 %v423, %v432
        %v440 = vmul.f32 %v424, %v437
        %441 = vst.msk [vmem:[%s287] sm:$0xff] %vm310, %v439
        %442 = vst.msk [vmem:[%s287 + $0x8] sm:$0xff] %vm310, %v440
      $region40: #{asr_whisper_forward.47} parent=31 // pred_fallthru
        _
      %s443 = smul.u32 2, %s20
      %p444 = scmp.lt.s32.totalorder %s19, 7
      %s445 = scalar_select %p444, %s19, 7
      %p446 = scmp.lt.s32.totalorder %s443, 1
      %s447 = scalar_select %p446, %s443, 1
      %s448 = smul.addr %s445, 2
      %s449 = sadd.s32 %s447, %s448
      %s450 = smul.addr %s449, 8
      %s451 = scalar_lea.vmem %s3, %s450
      // Predicated region
      $region41: #{asr_whisper_forward.47} parent=31 // pred_check
        %p452 = pneg %p137
      $region42: #{asr_whisper_forward.47} parent=31 // pred_check_branch
        %454 = sbr.rel (%p452) target = $region44
      $region43: #{asr_whisper_forward.47} parent=31 // pred_region
        %s455 = smul.u32 2, %s20
      $region44: #{asr_whisper_forward.47} parent=31 // pred_fallthru
        _
    $region32: #{asr_whisper_forward.47} parent=5 // pred_fallthru
      _
    %p456 = scmp.le.s32.totalorder 2, %s9
    // Predicated region
    $region45: #{asr_whisper_forward.47} parent=5 // pred_check
      %p457 = pneg %p456
    $region46: #{asr_whisper_forward.47} parent=5 // pred_check_branch
      %459 = sbr.rel (%p457) target = $region48
    $region47: #{asr_whisper_forward.47} parent=5 // pred_region
      %s460 = ssub.s32 %s9, 2
      // Predicated region
      $region49: #{asr_whisper_forward.47} parent=47 // pred_check
        %p461 = pneg %p143
      $region50: #{asr_whisper_forward.47} parent=47 // pred_check_branch
        %463 = sbr.rel (%p461) target = $region52
      $region51: #{asr_whisper_forward.47} parent=47 // pred_region
        %s464 = smul.u32 2, %s23
        %p465 = scmp.lt.s32.totalorder %s22, 7
        %s466 = scalar_select %p465, %s22, 7
        %p467 = scmp.lt.s32.totalorder %s464, 1
        %s468 = scalar_select %p467, %s464, 1
        %s469 = smul.addr %s466, 2
        %s470 = sadd.s32 %s468, %s469
        %s471 = smul.addr %s470, 8
        %s472 = scalar_lea.vmem %s3, %s471
      $region52: #{asr_whisper_forward.47} parent=47 // pred_fallthru
        _
    $region48: #{asr_whisper_forward.47} parent=5 // pred_fallthru
      _
  $region6: #{asr_whisper_forward.47} parent=0 // loop_footer
    %s13 = sadd.s32 1, %s9
  $region7: #{asr_whisper_forward.47} parent=0 // loop_footer_branch
    %8 = sbr.rel target = $region3
  $region8: #{asr_whisper_forward.47} parent=0 // loop_exit
    _

// kernel: asr_whisper_forward.48
$region0: #{asr_whisper_forward.48}
  #allocation0 [shape = 'u32[]', space=smem, size = 0x4, offset = 0x4, fixed_abs, tag = 'smem constant byte address 0x4 - core index']
  #allocation1 [shape = 'u32[72,128]{1,0:T(1,128)}', space=vmem, size = 0x9000, scoped, tag = 'internal scratch']
  #allocation2 [shape = 'f32[32,32]{1,0:T(8,128)}', space=vmem, size = 0x4000, scoped, tag = 'scratch operand']
  %s0 = inlined_call_operand.vmem [shape: f32[32,32], index: 0, kind: input, shape index: {}]
  %s1 = inlined_call_operand.vmem [shape: f32[32,32], index: 1, kind: input, shape index: {}]
  %s2 = inlined_call_operand.vmem [shape: f32[1,32], index: 2, kind: input, shape index: {}]
  %s3 = inlined_call_operand.vmem [shape: f32[32,32], index: 3, kind: input, shape index: {}]
  %s4 = inlined_call_operand.vmem [shape: f32[32,32], index: 4, kind: output, shape index: {}]
  %s5 = sld [smem:[#allocation0]]
  $region34: #{asr_whisper_forward.48} parent=0
    _
  %s7 = ssub.s32 1, %s5
  %s8 = scalar_select 0, %s7, %s5
  // Predicated region
  $region2: #{asr_whisper_forward.48} parent=0 // pred_check
    _
  $region3: #{asr_whisper_forward.48} parent=0 // pred_check_branch
    %10 = sbr.rel (0) target = $region5
  $region4: #{asr_whisper_forward.48} parent=0 // pred_region
    _
  $region5: #{asr_whisper_forward.48} parent=0 // pred_fallthru
    _
  // Predicated region
  $region6: #{asr_whisper_forward.48} parent=0 // pred_check
    _
  $region7: #{asr_whisper_forward.48} parent=0 // pred_check_branch
    %12 = sbr.rel (0) target = $region9
  $region8: #{asr_whisper_forward.48} parent=0 // pred_region
    _
  $region9: #{asr_whisper_forward.48} parent=0 // pred_fallthru
    _
  // Predicated region
  $region10: #{asr_whisper_forward.48} parent=0 // pred_check
    _
  $region11: #{asr_whisper_forward.48} parent=0 // pred_check_branch
    %14 = sbr.rel (0) target = $region13
  $region12: #{asr_whisper_forward.48} parent=0 // pred_region
    _
  $region13: #{asr_whisper_forward.48} parent=0 // pred_fallthru
    _
  // Predicated region
  $region14: #{asr_whisper_forward.48} parent=0 // pred_check
    _
  $region15: #{asr_whisper_forward.48} parent=0 // pred_check_branch
    %16 = sbr.rel (0) target = $region17
  $region16: #{asr_whisper_forward.48} parent=0 // pred_region
    _
  $region17: #{asr_whisper_forward.48} parent=0 // pred_fallthru
    _
  %p18 = scmp.eq.s32.totalorder 0, 0
  // Predicated region
  $region18: #{asr_whisper_forward.48} parent=0 // pred_check
    %p19 = pneg %p18
  $region19: #{asr_whisper_forward.48} parent=0 // pred_check_branch
    %21 = sbr.rel (%p19) target = $region21
  $region20: #{asr_whisper_forward.48} parent=0 // pred_region
    %vm22 = vcmask 261120
    %23 = vst.msk [vmem:[#allocation2] sm:$0xff] %vm22, 0.0
    %24 = vst.msk [vmem:[#allocation2 + $0x8] sm:$0xff] %vm22, 0.0
    %25 = vst.msk [vmem:[#allocation2 + $0x10] sm:$0xff] %vm22, 0.0
    %26 = vst.msk [vmem:[#allocation2 + $0x18] sm:$0xff] %vm22, 0.0
  $region21: #{asr_whisper_forward.48} parent=0 // pred_fallthru
    _
  %v27 = vld [vmem:[#allocation2] sm:$0xff]
  %v28 = vld [vmem:[#allocation2 + $0x8] sm:$0xff]
  %v29 = vld [vmem:[#allocation2 + $0x10] sm:$0xff]
  %v30 = vld [vmem:[#allocation2 + $0x18] sm:$0xff]
  %v31 = vld [vmem:[%s0] sm:$0xff]
  %v32 = vld [vmem:[%s0 + $0x8] sm:$0xff]
  %v33 = vld [vmem:[%s0 + $0x10] sm:$0xff]
  %v34 = vld [vmem:[%s0 + $0x18] sm:$0xff]
  %v35 = vpack.c.bf16 %v32, %v31
  %v36 = vpack.c.bf16 %v34, %v33
  %v37 = vld [vmem:[%s1] sm:$0xff]
  %v38 = vld [vmem:[%s1 + $0x8] sm:$0xff]
  %v39 = vld [vmem:[%s1 + $0x10] sm:$0xff]
  %v40 = vld [vmem:[%s1 + $0x18] sm:$0xff]
  %v41 = vpack.c.bf16 %v38, %v37
  %v42 = vpack.c.bf16 %v40, %v39
  %vm43 = vcmask 261120
  %v45 = vsel %vm43, %v35, 0
  %v48 = vsel %vm43, %v36, 0
  %50 = vmatpush.bf16.msra.mxu0 0
  %51 = vmatpush.bf16.msra.mxu0 0
  %52 = vmatpush.bf16.msra.mxu0 0
  %53 = vmatpush.bf16.msra.mxu0 0
  %54 = vmatpush.bf16.msra.mxu0 0
  %55 = vmatpush.bf16.msra.mxu0 0
  %56 = vmatpush.bf16.msra.mxu0 %v42
  %57 = vmatpush.bf16.msra.mxu0 %v41
  %58 = vmatmul.bf16.gmra.mxu0 %v45
  %v59 = vpop.f32.mrf.mxu0
  %v60 = vadd.f32 0.0, %v59
  %v61 = vpop.f32.mrf.mxu0
  %v62 = vadd.f32 0.0, %v61
  %63 = vmatmul.bf16.gmra.mxu0 %v48
  %v64 = vpop.f32.mrf.mxu0
  %v65 = vadd.f32 0.0, %v64
  %v66 = vpop.f32.mrf.mxu0
  %v67 = vadd.f32 0.0, %v66
  %68 = vdwg.mxu0
  %v69 = vadd.f32 %v27, %v60
  %v70 = vadd.f32 %v28, %v62
  %v71 = vadd.f32 %v29, %v65
  %v72 = vadd.f32 %v30, %v67
  %73 = vst.msk [vmem:[#allocation2] sm:$0xff] %vm43, %v69
  %74 = vst.msk [vmem:[#allocation2 + $0x8] sm:$0xff] %vm43, %v70
  %75 = vst.msk [vmem:[#allocation2 + $0x10] sm:$0xff] %vm43, %v71
  %76 = vst.msk [vmem:[#allocation2 + $0x18] sm:$0xff] %vm43, %v72
  // Predicated region
  $region22: #{asr_whisper_forward.48} parent=0 // pred_check
    %p77 = pneg %p18
  $region23: #{asr_whisper_forward.48} parent=0 // pred_check_branch
    %79 = sbr.rel (%p77) target = $region25
  $region24: #{asr_whisper_forward.48} parent=0 // pred_region
    %v80 = vld [vmem:[#allocation2] sm:$0xff]
    %v81 = vld [vmem:[#allocation2 + $0x8] sm:$0xff]
    %v82 = vld [vmem:[#allocation2 + $0x10] sm:$0xff]
    %v83 = vld [vmem:[#allocation2 + $0x18] sm:$0xff]
    %v84 = vld [vmem:[%s2] sm:$0x1]
    %v86 = vperm.slane %v84, 0
    %v88 = vadd.f32 %v80, %v86
    %v89 = vadd.f32 %v81, %v86
    %v90 = vadd.f32 %v82, %v86
    %v91 = vadd.f32 %v83, %v86
    %v92 = vld [vmem:[%s3] sm:$0xff]
    %v93 = vld [vmem:[%s3 + $0x8] sm:$0xff]
    %v94 = vld [vmem:[%s3 + $0x10] sm:$0xff]
    %v95 = vld [vmem:[%s3 + $0x18] sm:$0xff]
    %v96 = vadd.f32 %v88, %v92
    %v97 = vadd.f32 %v89, %v93
    %v98 = vadd.f32 %v90, %v94
    %v99 = vadd.f32 %v91, %v95
    %100 = vst.msk [vmem:[%s4] sm:$0xff] %vm43, %v96
    %101 = vst.msk [vmem:[%s4 + $0x8] sm:$0xff] %vm43, %v97
    %102 = vst.msk [vmem:[%s4 + $0x10] sm:$0xff] %vm43, %v98
    %103 = vst.msk [vmem:[%s4 + $0x18] sm:$0xff] %vm43, %v99
  $region25: #{asr_whisper_forward.48} parent=0 // pred_fallthru
    _
  // Predicated region
  $region26: #{asr_whisper_forward.48} parent=0 // pred_check
    _
  $region27: #{asr_whisper_forward.48} parent=0 // pred_check_branch
    %105 = sbr.rel (0) target = $region29
  $region28: #{asr_whisper_forward.48} parent=0 // pred_region
    _
  $region29: #{asr_whisper_forward.48} parent=0 // pred_fallthru
    _
  // Predicated region
  $region30: #{asr_whisper_forward.48} parent=0 // pred_check
    _
  $region31: #{asr_whisper_forward.48} parent=0 // pred_check_branch
    %107 = sbr.rel (0) target = $region33
  $region32: #{asr_whisper_forward.48} parent=0 // pred_region
    _
  $region33: #{asr_whisper_forward.48} parent=0 // pred_fallthru
    _

// kernel: asr_whisper_forward.50
$region0: #{asr_whisper_forward.50}
  #allocation0 [shape = 'u32[]', space=smem, size = 0x4, offset = 0x4, fixed_abs, tag = 'smem constant byte address 0x4 - core index']
  #allocation1 [shape = 'u32[72,128]{1,0:T(1,128)}', space=vmem, size = 0x9000, scoped, tag = 'internal scratch']
  #allocation2 [shape = 'f32[32,128]{1,0:T(8,128)}', space=vmem, size = 0x4000, scoped, tag = 'scratch operand']
  %s0 = inlined_call_operand.vmem [shape: f32[32,32], index: 0, kind: input, shape index: {}]
  %s1 = inlined_call_operand.vmem [shape: f32[32,128], index: 1, kind: input, shape index: {}]
  %s2 = inlined_call_operand.vmem [shape: f32[1,128], index: 2, kind: input, shape index: {}]
  %s3 = inlined_call_operand.vmem [shape: f32[32,128], index: 3, kind: output, shape index: {}]
  %s4 = sld [smem:[#allocation0]]
  $region30: #{asr_whisper_forward.50} parent=0
    _
  %s6 = ssub.s32 1, %s4
  %s7 = scalar_select 0, %s6, %s4
  // Predicated region
  $region2: #{asr_whisper_forward.50} parent=0 // pred_check
    _
  $region3: #{asr_whisper_forward.50} parent=0 // pred_check_branch
    %9 = sbr.rel (0) target = $region5
  $region4: #{asr_whisper_forward.50} parent=0 // pred_region
    _
  $region5: #{asr_whisper_forward.50} parent=0 // pred_fallthru
    _
  // Predicated region
  $region6: #{asr_whisper_forward.50} parent=0 // pred_check
    _
  $region7: #{asr_whisper_forward.50} parent=0 // pred_check_branch
    %11 = sbr.rel (0) target = $region9
  $region8: #{asr_whisper_forward.50} parent=0 // pred_region
    _
  $region9: #{asr_whisper_forward.50} parent=0 // pred_fallthru
    _
  // Predicated region
  $region10: #{asr_whisper_forward.50} parent=0 // pred_check
    _
  $region11: #{asr_whisper_forward.50} parent=0 // pred_check_branch
    %13 = sbr.rel (0) target = $region13
  $region12: #{asr_whisper_forward.50} parent=0 // pred_region
    _
  $region13: #{asr_whisper_forward.50} parent=0 // pred_fallthru
    _
  %p15 = scmp.eq.s32.totalorder 0, 0
  // Predicated region
  $region14: #{asr_whisper_forward.50} parent=0 // pred_check
    %p16 = pneg %p15
  $region15: #{asr_whisper_forward.50} parent=0 // pred_check_branch
    %18 = sbr.rel (%p16) target = $region17
  $region16: #{asr_whisper_forward.50} parent=0 // pred_region
    %19 = vst [vmem:[#allocation2] sm:$0xff] 0.0
    %20 = vst [vmem:[#allocation2 + $0x8] sm:$0xff] 0.0
    %21 = vst [vmem:[#allocation2 + $0x10] sm:$0xff] 0.0
    %22 = vst [vmem:[#allocation2 + $0x18] sm:$0xff] 0.0
  $region17: #{asr_whisper_forward.50} parent=0 // pred_fallthru
    _
  %v23 = vld [vmem:[#allocation2] sm:$0xff]
  %v24 = vld [vmem:[#allocation2 + $0x8] sm:$0xff]
  %v25 = vld [vmem:[#allocation2 + $0x10] sm:$0xff]
  %v26 = vld [vmem:[#allocation2 + $0x18] sm:$0xff]
  %v27 = vld [vmem:[%s0] sm:$0xff]
  %v28 = vld [vmem:[%s0 + $0x8] sm:$0xff]
  %v29 = vld [vmem:[%s0 + $0x10] sm:$0xff]
  %v30 = vld [vmem:[%s0 + $0x18] sm:$0xff]
  %v31 = vpack.c.bf16 %v28, %v27
  %v32 = vpack.c.bf16 %v30, %v29
  %v33 = vld [vmem:[%s1] sm:$0xff]
  %v34 = vld [vmem:[%s1 + $0x8] sm:$0xff]
  %v35 = vld [vmem:[%s1 + $0x10] sm:$0xff]
  %v36 = vld [vmem:[%s1 + $0x18] sm:$0xff]
  %v37 = vpack.c.bf16 %v34, %v33
  %v38 = vpack.c.bf16 %v36, %v35
  %vm39 = vcmask 261120
  %v41 = vsel %vm39, %v31, 0
  %v44 = vsel %vm39, %v32, 0
  %46 = vmatpush.bf16.msra.mxu0 0
  %47 = vmatpush.bf16.msra.mxu0 0
  %48 = vmatpush.bf16.msra.mxu0 0
  %49 = vmatpush.bf16.msra.mxu0 0
  %50 = vmatpush.bf16.msra.mxu0 0
  %51 = vmatpush.bf16.msra.mxu0 0
  %52 = vmatpush.bf16.msra.mxu0 %v38
  %53 = vmatpush.bf16.msra.mxu0 %v37
  %54 = vmatmul.bf16.gmra.mxu0 %v41
  %v55 = vpop.f32.mrf.mxu0
  %v56 = vadd.f32 0.0, %v55
  %v57 = vpop.f32.mrf.mxu0
  %v58 = vadd.f32 0.0, %v57
  %59 = vmatmul.bf16.gmra.mxu0 %v44
  %v60 = vpop.f32.mrf.mxu0
  %v61 = vadd.f32 0.0, %v60
  %v62 = vpop.f32.mrf.mxu0
  %v63 = vadd.f32 0.0, %v62
  %64 = vdwg.mxu0
  %v65 = vadd.f32 %v23, %v56
  %v66 = vadd.f32 %v24, %v58
  %v67 = vadd.f32 %v25, %v61
  %v68 = vadd.f32 %v26, %v63
  %69 = vst [vmem:[#allocation2] sm:$0xff] %v65
  %70 = vst [vmem:[#allocation2 + $0x8] sm:$0xff] %v66
  %71 = vst [vmem:[#allocation2 + $0x10] sm:$0xff] %v67
  %72 = vst [vmem:[#allocation2 + $0x18] sm:$0xff] %v68
  // Predicated region
  $region18: #{asr_whisper_forward.50} parent=0 // pred_check
    %p73 = pneg %p15
  $region19: #{asr_whisper_forward.50} parent=0 // pred_check_branch
    %75 = sbr.rel (%p73) target = $region21
  $region20: #{asr_whisper_forward.50} parent=0 // pred_region
    %v76 = vld [vmem:[#allocation2] sm:$0xff]
    %v77 = vld [vmem:[#allocation2 + $0x8] sm:$0xff]
    %v78 = vld [vmem:[#allocation2 + $0x10] sm:$0xff]
    %v79 = vld [vmem:[#allocation2 + $0x18] sm:$0xff]
    %v80 = vld [vmem:[%s2] sm:$0x1]
    %v82 = vperm.slane %v80, 0
    %v84 = vadd.f32 %v76, %v82
    %v85 = vadd.f32 %v77, %v82
    %v86 = vadd.f32 %v78, %v82
    %v87 = vadd.f32 %v79, %v82
    %v88 = vmul.f32 %v84, 0.5
    %v89 = vmul.f32 %v85, 0.5
    %v90 = vmul.f32 %v86, 0.5
    %v91 = vmul.f32 %v87, 0.5
    %v92 = vmul.f32 %v84, 0.044715
    %v93 = vmul.f32 %v85, 0.044715
    %v94 = vmul.f32 %v86, 0.044715
    %v95 = vmul.f32 %v87, 0.044715
    %v96 = vmul.f32 %v92, %v84
    %v97 = vmul.f32 %v93, %v85
    %v98 = vmul.f32 %v94, %v86
    %v99 = vmul.f32 %v95, %v87
    %v100 = vmul.f32 %v96, %v84
    %v101 = vmul.f32 %v97, %v85
    %v102 = vmul.f32 %v98, %v86
    %v103 = vmul.f32 %v99, %v87
    %v104 = vadd.f32 %v84, %v100
    %v105 = vadd.f32 %v85, %v101
    %v106 = vadd.f32 %v86, %v102
    %v107 = vadd.f32 %v87, %v103
    %v108 = vmul.f32 %v104, 0.7978846
    %v109 = vmul.f32 %v105, 0.7978846
    %v110 = vmul.f32 %v106, 0.7978846
    %v111 = vmul.f32 %v107, 0.7978846
    %v112 = vtanh.pop %v108
    %v113 = vtanh.pop %v109
    %v114 = vtanh.pop %v110
    %v115 = vtanh.pop %v111
    %v116 = vadd.f32 %v112, 1.0
    %v117 = vadd.f32 %v113, 1.0
    %v118 = vadd.f32 %v114, 1.0
    %v119 = vadd.f32 %v115, 1.0
    %v120 = vmul.f32 %v88, %v116
    %v121 = vmul.f32 %v89, %v117
    %v122 = vmul.f32 %v90, %v118
    %v123 = vmul.f32 %v91, %v119
    %124 = vst [vmem:[%s3] sm:$0xff] %v120
    %125 = vst [vmem:[%s3 + $0x8] sm:$0xff] %v121
    %126 = vst [vmem:[%s3 + $0x10] sm:$0xff] %v122
    %127 = vst [vmem:[%s3 + $0x18] sm:$0xff] %v123
  $region21: #{asr_whisper_forward.50} parent=0 // pred_fallthru
    _
  // Predicated region
  $region22: #{asr_whisper_forward.50} parent=0 // pred_check
    _
  $region23: #{asr_whisper_forward.50} parent=0 // pred_check_branch
    %129 = sbr.rel (0) target = $region25
  $region24: #{asr_whisper_forward.50} parent=0 // pred_region
    _
  $region25: #{asr_whisper_forward.50} parent=0 // pred_fallthru
    _
  // Predicated region
  $region26: #{asr_whisper_forward.50} parent=0 // pred_check
    _
  $region27: #{asr_whisper_forward.50} parent=0 // pred_check_branch
    %131 = sbr.rel (0) target = $region29
  $region28: #{asr_whisper_forward.50} parent=0 // pred_region
    _
  $region29: #{asr_whisper_forward.50} parent=0 // pred_fallthru
    _

// kernel: asr_whisper_forward.66
$region0: #{asr_whisper_forward.66}
  #allocation0 [shape = 'u32[]', space=smem, size = 0x4, offset = 0x4, fixed_abs, tag = 'smem constant byte address 0x4 - core index']
  #allocation1 [shape = 'u32[72,128]{1,0:T(1,128)}', space=vmem, size = 0x9000, scoped, tag = 'internal scratch']
  #allocation2 [shape = 'f32[32,64]{1,0:T(8,128)}', space=vmem, size = 0x4000, scoped, tag = 'scratch operand']
  %s0 = inlined_call_operand.vmem [shape: f32[32,32], index: 0, kind: input, shape index: {}]
  %s1 = inlined_call_operand.vmem [shape: f32[32,64], index: 1, kind: input, shape index: {}]
  %s2 = inlined_call_operand.vmem [shape: f32[1,64], index: 2, kind: input, shape index: {}]
  %s3 = inlined_call_operand.vmem [shape: f32[32,64], index: 3, kind: output, shape index: {}]
  %s4 = sld [smem:[#allocation0]]
  $region30: #{asr_whisper_forward.66} parent=0
    _
  %s6 = ssub.s32 1, %s4
  %s7 = scalar_select 0, %s6, %s4
  // Predicated region
  $region2: #{asr_whisper_forward.66} parent=0 // pred_check
    _
  $region3: #{asr_whisper_forward.66} parent=0 // pred_check_branch
    %9 = sbr.rel (0) target = $region5
  $region4: #{asr_whisper_forward.66} parent=0 // pred_region
    _
  $region5: #{asr_whisper_forward.66} parent=0 // pred_fallthru
    _
  // Predicated region
  $region6: #{asr_whisper_forward.66} parent=0 // pred_check
    _
  $region7: #{asr_whisper_forward.66} parent=0 // pred_check_branch
    %11 = sbr.rel (0) target = $region9
  $region8: #{asr_whisper_forward.66} parent=0 // pred_region
    _
  $region9: #{asr_whisper_forward.66} parent=0 // pred_fallthru
    _
  // Predicated region
  $region10: #{asr_whisper_forward.66} parent=0 // pred_check
    _
  $region11: #{asr_whisper_forward.66} parent=0 // pred_check_branch
    %13 = sbr.rel (0) target = $region13
  $region12: #{asr_whisper_forward.66} parent=0 // pred_region
    _
  $region13: #{asr_whisper_forward.66} parent=0 // pred_fallthru
    _
  %p15 = scmp.eq.s32.totalorder 0, 0
  // Predicated region
  $region14: #{asr_whisper_forward.66} parent=0 // pred_check
    %p16 = pneg %p15
  $region15: #{asr_whisper_forward.66} parent=0 // pred_check_branch
    %18 = sbr.rel (%p16) target = $region17
  $region16: #{asr_whisper_forward.66} parent=0 // pred_region
    %vm19 = vcmask 523264
    %20 = vst.msk [vmem:[#allocation2] sm:$0xff] %vm19, 0.0
    %21 = vst.msk [vmem:[#allocation2 + $0x8] sm:$0xff] %vm19, 0.0
    %22 = vst.msk [vmem:[#allocation2 + $0x10] sm:$0xff] %vm19, 0.0
    %23 = vst.msk [vmem:[#allocation2 + $0x18] sm:$0xff] %vm19, 0.0
  $region17: #{asr_whisper_forward.66} parent=0 // pred_fallthru
    _
  %v24 = vld [vmem:[#allocation2] sm:$0xff]
  %v25 = vld [vmem:[#allocation2 + $0x8] sm:$0xff]
  %v26 = vld [vmem:[#allocation2 + $0x10] sm:$0xff]
  %v27 = vld [vmem:[#allocation2 + $0x18] sm:$0xff]
  %v28 = vld [vmem:[%s0] sm:$0xff]
  %v29 = vld [vmem:[%s0 + $0x8] sm:$0xff]
  %v30 = vld [vmem:[%s0 + $0x10] sm:$0xff]
  %v31 = vld [vmem:[%s0 + $0x18] sm:$0xff]
  %v32 = vpack.c.bf16 %v29, %v28
  %v33 = vpack.c.bf16 %v31, %v30
  %v34 = vld [vmem:[%s1] sm:$0xff]
  %v35 = vld [vmem:[%s1 + $0x8] sm:$0xff]
  %v36 = vld [vmem:[%s1 + $0x10] sm:$0xff]
  %v37 = vld [vmem:[%s1 + $0x18] sm:$0xff]
  %v38 = vpack.c.bf16 %v35, %v34
  %v39 = vpack.c.bf16 %v37, %v36
  %vm40 = vcmask 261120
  %v42 = vsel %vm40, %v32, 0
  %v45 = vsel %vm40, %v33, 0
  %47 = vmatpush.bf16.msra.mxu0 0
  %48 = vmatpush.bf16.msra.mxu0 0
  %49 = vmatpush.bf16.msra.mxu0 0
  %50 = vmatpush.bf16.msra.mxu0 0
  %51 = vmatpush.bf16.msra.mxu0 0
  %52 = vmatpush.bf16.msra.mxu0 0
  %53 = vmatpush.bf16.msra.mxu0 %v39
  %54 = vmatpush.bf16.msra.mxu0 %v38
  %55 = vmatmul.bf16.gmra.mxu0 %v42
  %v56 = vpop.f32.mrf.mxu0
  %v57 = vadd.f32 0.0, %v56
  %v58 = vpop.f32.mrf.mxu0
  %v59 = vadd.f32 0.0, %v58
  %60 = vmatmul.bf16.gmra.mxu0 %v45
  %v61 = vpop.f32.mrf.mxu0
  %v62 = vadd.f32 0.0, %v61
  %v63 = vpop.f32.mrf.mxu0
  %v64 = vadd.f32 0.0, %v63
  %65 = vdwg.mxu0
  %v66 = vadd.f32 %v24, %v57
  %v67 = vadd.f32 %v25, %v59
  %v68 = vadd.f32 %v26, %v62
  %v69 = vadd.f32 %v27, %v64
  %vm70 = vcmask 523264
  %71 = vst.msk [vmem:[#allocation2] sm:$0xff] %vm70, %v66
  %72 = vst.msk [vmem:[#allocation2 + $0x8] sm:$0xff] %vm70, %v67
  %73 = vst.msk [vmem:[#allocation2 + $0x10] sm:$0xff] %vm70, %v68
  %74 = vst.msk [vmem:[#allocation2 + $0x18] sm:$0xff] %vm70, %v69
  // Predicated region
  $region18: #{asr_whisper_forward.66} parent=0 // pred_check
    %p75 = pneg %p15
  $region19: #{asr_whisper_forward.66} parent=0 // pred_check_branch
    %77 = sbr.rel (%p75) target = $region21
  $region20: #{asr_whisper_forward.66} parent=0 // pred_region
    %v78 = vld [vmem:[#allocation2] sm:$0xff]
    %v79 = vld [vmem:[#allocation2 + $0x8] sm:$0xff]
    %v80 = vld [vmem:[#allocation2 + $0x10] sm:$0xff]
    %v81 = vld [vmem:[#allocation2 + $0x18] sm:$0xff]
    %v82 = vld [vmem:[%s2] sm:$0x1]
    %v84 = vperm.slane %v82, 0
    %v86 = vadd.f32 %v78, %v84
    %v87 = vadd.f32 %v79, %v84
    %v88 = vadd.f32 %v80, %v84
    %v89 = vadd.f32 %v81, %v84
    %90 = vst.msk [vmem:[%s3] sm:$0xff] %vm70, %v86
    %91 = vst.msk [vmem:[%s3 + $0x8] sm:$0xff] %vm70, %v87
    %92 = vst.msk [vmem:[%s3 + $0x10] sm:$0xff] %vm70, %v88
    %93 = vst.msk [vmem:[%s3 + $0x18] sm:$0xff] %vm70, %v89
  $region21: #{asr_whisper_forward.66} parent=0 // pred_fallthru
    _
  // Predicated region
  $region22: #{asr_whisper_forward.66} parent=0 // pred_check
    _
  $region23: #{asr_whisper_forward.66} parent=0 // pred_check_branch
    %95 = sbr.rel (0) target = $region25
  $region24: #{asr_whisper_forward.66} parent=0 // pred_region
    _
  $region25: #{asr_whisper_forward.66} parent=0 // pred_fallthru
    _
  // Predicated region
  $region26: #{asr_whisper_forward.66} parent=0 // pred_check
    _
  $region27: #{asr_whisper_forward.66} parent=0 // pred_check_branch
    %97 = sbr.rel (0) target = $region29
  $region28: #{asr_whisper_forward.66} parent=0 // pred_region
    _
  $region29: #{asr_whisper_forward.66} parent=0 // pred_fallthru
    _

// kernel: asr_whisper_forward.51
$region0: #{asr_whisper_forward.51}
  #allocation0 [shape = 'u32[]', space=smem, size = 0x4, offset = 0x4, fixed_abs, tag = 'smem constant byte address 0x4 - core index']
  #allocation1 [shape = 'u32[72,128]{1,0:T(1,128)}', space=vmem, size = 0x9000, scoped, tag = 'internal scratch']
  #allocation2 [shape = 'f32[32,32]{1,0:T(8,128)}', space=vmem, size = 0x4000, scoped, tag = 'scratch operand']
  %s0 = inlined_call_operand.vmem [shape: f32[32,128], index: 0, kind: input, shape index: {}]
  %s1 = inlined_call_operand.vmem [shape: f32[128,32], index: 1, kind: input, shape index: {}]
  %s2 = inlined_call_operand.vmem [shape: f32[1,32], index: 2, kind: input, shape index: {}]
  %s3 = inlined_call_operand.vmem [shape: f32[32,32], index: 3, kind: input, shape index: {}]
  %s4 = inlined_call_operand.vmem [shape: f32[32,32], index: 4, kind: output, shape index: {}]
  %s5 = sld [smem:[#allocation0]]
  $region34: #{asr_whisper_forward.51} parent=0
    _
  %s7 = ssub.s32 1, %s5
  %s8 = scalar_select 0, %s7, %s5
  // Predicated region
  $region2: #{asr_whisper_forward.51} parent=0 // pred_check
    _
  $region3: #{asr_whisper_forward.51} parent=0 // pred_check_branch
    %10 = sbr.rel (0) target = $region5
  $region4: #{asr_whisper_forward.51} parent=0 // pred_region
    _
  $region5: #{asr_whisper_forward.51} parent=0 // pred_fallthru
    _
  // Predicated region
  $region6: #{asr_whisper_forward.51} parent=0 // pred_check
    _
  $region7: #{asr_whisper_forward.51} parent=0 // pred_check_branch
    %12 = sbr.rel (0) target = $region9
  $region8: #{asr_whisper_forward.51} parent=0 // pred_region
    _
  $region9: #{asr_whisper_forward.51} parent=0 // pred_fallthru
    _
  // Predicated region
  $region10: #{asr_whisper_forward.51} parent=0 // pred_check
    _
  $region11: #{asr_whisper_forward.51} parent=0 // pred_check_branch
    %14 = sbr.rel (0) target = $region13
  $region12: #{asr_whisper_forward.51} parent=0 // pred_region
    _
  $region13: #{asr_whisper_forward.51} parent=0 // pred_fallthru
    _
  // Predicated region
  $region14: #{asr_whisper_forward.51} parent=0 // pred_check
    _
  $region15: #{asr_whisper_forward.51} parent=0 // pred_check_branch
    %16 = sbr.rel (0) target = $region17
  $region16: #{asr_whisper_forward.51} parent=0 // pred_region
    _
  $region17: #{asr_whisper_forward.51} parent=0 // pred_fallthru
    _
  %p17 = scmp.eq.s32.totalorder 0, 0
  // Predicated region
  $region18: #{asr_whisper_forward.51} parent=0 // pred_check
    %p18 = pneg %p17
  $region19: #{asr_whisper_forward.51} parent=0 // pred_check_branch
    %20 = sbr.rel (%p18) target = $region21
  $region20: #{asr_whisper_forward.51} parent=0 // pred_region
    %vm21 = vcmask 261120
    %22 = vst.msk [vmem:[#allocation2] sm:$0xff] %vm21, 0.0
    %23 = vst.msk [vmem:[#allocation2 + $0x8] sm:$0xff] %vm21, 0.0
    %24 = vst.msk [vmem:[#allocation2 + $0x10] sm:$0xff] %vm21, 0.0
    %25 = vst.msk [vmem:[#allocation2 + $0x18] sm:$0xff] %vm21, 0.0
  $region21: #{asr_whisper_forward.51} parent=0 // pred_fallthru
    _
  %v26 = vld [vmem:[#allocation2] sm:$0xff]
  %v27 = vld [vmem:[#allocation2 + $0x8] sm:$0xff]
  %v28 = vld [vmem:[#allocation2 + $0x10] sm:$0xff]
  %v29 = vld [vmem:[#allocation2 + $0x18] sm:$0xff]
  %v30 = vld [vmem:[%s0] sm:$0xff]
  %v31 = vld [vmem:[%s0 + $0x8] sm:$0xff]
  %v32 = vld [vmem:[%s0 + $0x10] sm:$0xff]
  %v33 = vld [vmem:[%s0 + $0x18] sm:$0xff]
  %v34 = vpack.c.bf16 %v31, %v30
  %v35 = vpack.c.bf16 %v33, %v32
  %v36 = vld [vmem:[%s1] sm:$0xff]
  %v37 = vld [vmem:[%s1 + $0x8] sm:$0xff]
  %v38 = vld [vmem:[%s1 + $0x10] sm:$0xff]
  %v39 = vld [vmem:[%s1 + $0x18] sm:$0xff]
  %v40 = vld [vmem:[%s1 + $0x20] sm:$0xff]
  %v41 = vld [vmem:[%s1 + $0x28] sm:$0xff]
  %v42 = vld [vmem:[%s1 + $0x30] sm:$0xff]
  %v43 = vld [vmem:[%s1 + $0x38] sm:$0xff]
  %v44 = vld [vmem:[%s1 + $0x40] sm:$0xff]
  %v45 = vld [vmem:[%s1 + $0x48] sm:$0xff]
  %v46 = vld [vmem:[%s1 + $0x50] sm:$0xff]
  %v47 = vld [vmem:[%s1 + $0x58] sm:$0xff]
  %v48 = vld [vmem:[%s1 + $0x60] sm:$0xff]
  %v49 = vld [vmem:[%s1 + $0x68] sm:$0xff]
  %v50 = vld [vmem:[%s1 + $0x70] sm:$0xff]
  %v51 = vld [vmem:[%s1 + $0x78] sm:$0xff]
  %v52 = vpack.c.bf16 %v37, %v36
  %v53 = vpack.c.bf16 %v39, %v38
  %v54 = vpack.c.bf16 %v41, %v40
  %v55 = vpack.c.bf16 %v43, %v42
  %v56 = vpack.c.bf16 %v45, %v44
  %v57 = vpack.c.bf16 %v47, %v46
  %v58 = vpack.c.bf16 %v49, %v48
  %v59 = vpack.c.bf16 %v51, %v50
  %60 = vmatpush.bf16.msra.mxu0 %v59
  %61 = vmatpush.bf16.msra.mxu0 %v58
  %62 = vmatpush.bf16.msra.mxu0 %v57
  %63 = vmatpush.bf16.msra.mxu0 %v56
  %64 = vmatpush.bf16.msra.mxu0 %v55
  %65 = vmatpush.bf16.msra.mxu0 %v54
  %66 = vmatpush.bf16.msra.mxu0 %v53
  %67 = vmatpush.bf16.msra.mxu0 %v52
  %68 = vmatmul.bf16.gmra.mxu0 %v34
  %v69 = vpop.f32.mrf.mxu0
  %v70 = vadd.f32 0.0, %v69
  %v71 = vpop.f32.mrf.mxu0
  %v72 = vadd.f32 0.0, %v71
  %73 = vmatmul.bf16.gmra.mxu0 %v35
  %v74 = vpop.f32.mrf.mxu0
  %v75 = vadd.f32 0.0, %v74
  %v76 = vpop.f32.mrf.mxu0
  %v77 = vadd.f32 0.0, %v76
  %78 = vdwg.mxu0
  %v79 = vadd.f32 %v26, %v70
  %v80 = vadd.f32 %v27, %v72
  %v81 = vadd.f32 %v28, %v75
  %v82 = vadd.f32 %v29, %v77
  %vm83 = vcmask 261120
  %84 = vst.msk [vmem:[#allocation2] sm:$0xff] %vm83, %v79
  %85 = vst.msk [vmem:[#allocation2 + $0x8] sm:$0xff] %vm83, %v80
  %86 = vst.msk [vmem:[#allocation2 + $0x10] sm:$0xff] %vm83, %v81
  %87 = vst.msk [vmem:[#allocation2 + $0x18] sm:$0xff] %vm83, %v82
  // Predicated region
  $region22: #{asr_whisper_forward.51} parent=0 // pred_check
    %p88 = pneg %p17
  $region23: #{asr_whisper_forward.51} parent=0 // pred_check_branch
    %90 = sbr.rel (%p88) target = $region25
  $region24: #{asr_whisper_forward.51} parent=0 // pred_region
    %v91 = vld [vmem:[#allocation2] sm:$0xff]
    %v92 = vld [vmem:[#allocation2 + $0x8] sm:$0xff]
    %v93 = vld [vmem:[#allocation2 + $0x10] sm:$0xff]
    %v94 = vld [vmem:[#allocation2 + $0x18] sm:$0xff]
    %v95 = vld [vmem:[%s2] sm:$0x1]
    %v97 = vperm.slane %v95, 0
    %v99 = vadd.f32 %v91, %v97
    %v100 = vadd.f32 %v92, %v97
    %v101 = vadd.f32 %v93, %v97
    %v102 = vadd.f32 %v94, %v97
    %v103 = vld [vmem:[%s3] sm:$0xff]
    %v104 = vld [vmem:[%s3 + $0x8] sm:$0xff]
    %v105 = vld [vmem:[%s3 + $0x10] sm:$0xff]
    %v106 = vld [vmem:[%s3 + $0x18] sm:$0xff]
    %v107 = vadd.f32 %v99, %v103
    %v108 = vadd.f32 %v100, %v104
    %v109 = vadd.f32 %v101, %v105
    %v110 = vadd.f32 %v102, %v106
    %111 = vst.msk [vmem:[%s4] sm:$0xff] %vm83, %v107
    %112 = vst.msk [vmem:[%s4 + $0x8] sm:$0xff] %vm83, %v108
    %113 = vst.msk [vmem:[%s4 + $0x10] sm:$0xff] %vm83, %v109
    %114 = vst.msk [vmem:[%s4 + $0x18] sm:$0xff] %vm83, %v110
  $region25: #{asr_whisper_forward.51} parent=0 // pred_fallthru
    _
  // Predicated region
  $region26: #{asr_whisper_forward.51} parent=0 // pred_check
    _
  $region27: #{asr_whisper_forward.51} parent=0 // pred_check_branch
    %116 = sbr.rel (0) target = $region29
  $region28: #{asr_whisper_forward.51} parent=0 // pred_region
    _
  $region29: #{asr_whisper_forward.51} parent=0 // pred_fallthru
    _
  // Predicated region
  $region30: #{asr_whisper_forward.51} parent=0 // pred_check
    _
  $region31: #{asr_whisper_forward.51} parent=0 // pred_check_branch
    %118 = sbr.rel (0) target = $region33
  $region32: #{asr_whisper_forward.51} parent=0 // pred_region
    _
  $region33: #{asr_whisper_forward.51} parent=0 // pred_fallthru
    _

// kernel: asr_whisper_forward.70
$region0: #{asr_whisper_forward.70}
  #allocation0 [shape = 'u32[]', space=smem, size = 0x4, offset = 0x4, fixed_abs, tag = 'smem constant byte address 0x4 - core index']
  #allocation1 [shape = 'u32[72,128]{1,0:T(1,128)}', space=vmem, size = 0x9000, scoped, tag = 'internal scratch']
  #allocation2 [shape = 'f32[16,128]{1,0:T(8,128)}', space=vmem, size = 0x2000, scoped, tag = 'scratch operand']
  %s0 = inlined_call_operand.vmem [shape: f32[16,32], index: 0, kind: input, shape index: {}]
  %s1 = inlined_call_operand.vmem [shape: f32[32,128], index: 1, kind: input, shape index: {}]
  %s2 = inlined_call_operand.vmem [shape: f32[1,128], index: 2, kind: input, shape index: {}]
  %s3 = inlined_call_operand.vmem [shape: f32[16,128], index: 3, kind: output, shape index: {}]
  %s4 = sld [smem:[#allocation0]]
  $region30: #{asr_whisper_forward.70} parent=0
    _
  %s6 = ssub.s32 1, %s4
  %s7 = scalar_select 0, %s6, %s4
  // Predicated region
  $region2: #{asr_whisper_forward.70} parent=0 // pred_check
    _
  $region3: #{asr_whisper_forward.70} parent=0 // pred_check_branch
    %9 = sbr.rel (0) target = $region5
  $region4: #{asr_whisper_forward.70} parent=0 // pred_region
    _
  $region5: #{asr_whisper_forward.70} parent=0 // pred_fallthru
    _
  // Predicated region
  $region6: #{asr_whisper_forward.70} parent=0 // pred_check
    _
  $region7: #{asr_whisper_forward.70} parent=0 // pred_check_branch
    %11 = sbr.rel (0) target = $region9
  $region8: #{asr_whisper_forward.70} parent=0 // pred_region
    _
  $region9: #{asr_whisper_forward.70} parent=0 // pred_fallthru
    _
  // Predicated region
  $region10: #{asr_whisper_forward.70} parent=0 // pred_check
    _
  $region11: #{asr_whisper_forward.70} parent=0 // pred_check_branch
    %13 = sbr.rel (0) target = $region13
  $region12: #{asr_whisper_forward.70} parent=0 // pred_region
    _
  $region13: #{asr_whisper_forward.70} parent=0 // pred_fallthru
    _
  %p15 = scmp.eq.s32.totalorder 0, 0
  // Predicated region
  $region14: #{asr_whisper_forward.70} parent=0 // pred_check
    %p16 = pneg %p15
  $region15: #{asr_whisper_forward.70} parent=0 // pred_check_branch
    %18 = sbr.rel (%p16) target = $region17
  $region16: #{asr_whisper_forward.70} parent=0 // pred_region
    %19 = vst [vmem:[#allocation2] sm:$0xff] 0.0
    %20 = vst [vmem:[#allocation2 + $0x8] sm:$0xff] 0.0
  $region17: #{asr_whisper_forward.70} parent=0 // pred_fallthru
    _
  %v21 = vld [vmem:[#allocation2] sm:$0xff]
  %v22 = vld [vmem:[#allocation2 + $0x8] sm:$0xff]
  %v23 = vld [vmem:[%s0] sm:$0xff]
  %v24 = vld [vmem:[%s0 + $0x8] sm:$0xff]
  %v25 = vpack.c.bf16 %v24, %v23
  %v26 = vld [vmem:[%s1] sm:$0xff]
  %v27 = vld [vmem:[%s1 + $0x8] sm:$0xff]
  %v28 = vld [vmem:[%s1 + $0x10] sm:$0xff]
  %v29 = vld [vmem:[%s1 + $0x18] sm:$0xff]
  %v30 = vpack.c.bf16 %v27, %v26
  %v31 = vpack.c.bf16 %v29, %v28
  %vm32 = vcmask 261120
  %v34 = vsel %vm32, %v25, 0
  %36 = vmatpush.bf16.msra.mxu0 0
  %37 = vmatpush.bf16.msra.mxu0 0
  %38 = vmatpush.bf16.msra.mxu0 0
  %39 = vmatpush.bf16.msra.mxu0 0
  %40 = vmatpush.bf16.msra.mxu0 0
  %41 = vmatpush.bf16.msra.mxu0 0
  %42 = vmatpush.bf16.msra.mxu0 %v31
  %43 = vmatpush.bf16.msra.mxu0 %v30
  %44 = vmatmul.bf16.gmra.mxu0 %v34
  %v45 = vpop.f32.mrf.mxu0
  %v46 = vadd.f32 0.0, %v45
  %v47 = vpop.f32.mrf.mxu0
  %v48 = vadd.f32 0.0, %v47
  %49 = vdwg.mxu0
  %v50 = vadd.f32 %v21, %v46
  %v51 = vadd.f32 %v22, %v48
  %52 = vst [vmem:[#allocation2] sm:$0xff] %v50
  %53 = vst [vmem:[#allocation2 + $0x8] sm:$0xff] %v51
  // Predicated region
  $region18: #{asr_whisper_forward.70} parent=0 // pred_check
    %p54 = pneg %p15
  $region19: #{asr_whisper_forward.70} parent=0 // pred_check_branch
    %56 = sbr.rel (%p54) target = $region21
  $region20: #{asr_whisper_forward.70} parent=0 // pred_region
    %v57 = vld [vmem:[#allocation2] sm:$0xff]
    %v58 = vld [vmem:[#allocation2 + $0x8] sm:$0xff]
    %v59 = vld [vmem:[%s2] sm:$0x1]
    %v61 = vperm.slane %v59, 0
    %v63 = vadd.f32 %v57, %v61
    %v64 = vadd.f32 %v58, %v61
    %v65 = vmul.f32 %v63, 0.5
    %v66 = vmul.f32 %v64, 0.5
    %v67 = vmul.f32 %v63, 0.044715
    %v68 = vmul.f32 %v64, 0.044715
    %v69 = vmul.f32 %v67, %v63
    %v70 = vmul.f32 %v68, %v64
    %v71 = vmul.f32 %v69, %v63
    %v72 = vmul.f32 %v70, %v64
    %v73 = vadd.f32 %v63, %v71
    %v74 = vadd.f32 %v64, %v72
    %v75 = vmul.f32 %v73, 0.7978846
    %v76 = vmul.f32 %v74, 0.7978846
    %v77 = vtanh.pop %v75
    %v78 = vtanh.pop %v76
    %v79 = vadd.f32 %v77, 1.0
    %v80 = vadd.f32 %v78, 1.0
    %v81 = vmul.f32 %v65, %v79
    %v82 = vmul.f32 %v66, %v80
    %83 = vst [vmem:[%s3] sm:$0xff] %v81
    %84 = vst [vmem:[%s3 + $0x8] sm:$0xff] %v82
  $region21: #{asr_whisper_forward.70} parent=0 // pred_fallthru
    _
  // Predicated region
  $region22: #{asr_whisper_forward.70} parent=0 // pred_check
    _
  $region23: #{asr_whisper_forward.70} parent=0 // pred_check_branch
    %86 = sbr.rel (0) target = $region25
  $region24: #{asr_whisper_forward.70} parent=0 // pred_region
    _
  $region25: #{asr_whisper_forward.70} parent=0 // pred_fallthru
    _
  // Predicated region
  $region26: #{asr_whisper_forward.70} parent=0 // pred_check
    _
  $region27: #{asr_whisper_forward.70} parent=0 // pred_check_branch
    %88 = sbr.rel (0) target = $region29
  $region28: #{asr_whisper_forward.70} parent=0 // pred_region
    _
  $region29: #{asr_whisper_forward.70} parent=0 // pred_fallthru
    _

// kernel: asr_whisper_forward.67
$region0: #{asr_whisper_forward.67}
  #allocation0 [shape = 'u32[]', space=smem, size = 0x4, offset = 0x4, fixed_abs, tag = 'smem constant byte address 0x4 - core index']
  #allocation1 [shape = 'u32[72,128]{1,0:T(1,128)}', space=vmem, size = 0x9000, scoped, tag = 'internal scratch']
  #allocation2 [shape = 'f32[8,1]{1,0:T(8,128)}', space=vmem, size = 0x1000, scoped, tag = 'scratch operand']
  #allocation3 [shape = 'f32[8,1]{1,0:T(8,128)}', space=vmem, size = 0x1000, scoped, tag = 'scratch operand']
  #allocation4 [shape = 'f32[8,8]{1,0:T(8,128)}', space=vmem, size = 0x1000, scoped, tag = 'scratch operand']
  %s0 = inlined_call_operand.vmem [shape: f32[8,8,8], index: 0, kind: input, shape index: {}]
  %s1 = inlined_call_operand.vmem [shape: f32[8,16,8], index: 1, kind: input, shape index: {}]
  %s2 = inlined_call_operand.vmem [shape: f32[8,16,8], index: 2, kind: input, shape index: {}]
  %s3 = inlined_call_operand.vmem [shape: f32[8,8,8], index: 3, kind: output, shape index: {}]
  %s4 = sld [smem:[#allocation0]]
  $region53: #{asr_whisper_forward.67} parent=0
    _
  %s6 = ssub.s32 1, %s4
  %s7 = scalar_select 0, %s6, %s4
  loop: start=0, step=1, limit=10
  $region2: #{asr_whisper_forward.67} parent=0 // loop_pre_header
    _
  $region3: #{asr_whisper_forward.67} parent=0 // loop_header
    %s9 = sphi 0, %s13
    %p10 = scmp.ge.s32.totalorder %s9, 10
    %s16 = sphi 0, %s35
    %s17 = sphi 0, %s31
    %s18 = sphi 0, %s27
    %s19 = sphi 0, %s16
    %s20 = sphi 0, %s17
    %s21 = sphi 0, %s18
    %s22 = sphi 0, %s19
    %s23 = sphi 0, %s20
    %s24 = sphi 0, %s21
    %s40 = sphi 0, %s42
    %s43 = sphi 0, %s40
    %s44 = sphi 0, %s43
    %s60 = sphi 0, %s44
    %s68 = sphi 0, %s70
    %s71 = sphi 0, %s68
    %s72 = sphi 0, %s71
    %s88 = sphi 0, %s72
    %s96 = sphi 0, %s98
    %s99 = sphi 0, %s96
    %s100 = sphi 0, %s99
    %s116 = sphi 0, %s100
    %s124 = sphi 0, %s126
    %s127 = sphi 0, %s124
    %s128 = sphi 0, %s127
    %s144 = sphi 0, %s128
  $region4: #{asr_whisper_forward.67} parent=0 // loop_header_branch
    %12 = sbr.rel (%p10) target = $region8
  $region5: #{asr_whisper_forward.67} parent=0 // loop_body
    %s14 = ssub.s32 %s9, 1
    %s15 = ssub.s32 %s9, 2
    %s25 = sadd.s32 1, %s18
    %p26 = scmp.ge.s32.totalorder %s25, 1
    %s27 = scalar_select %p26, 0, %s25
    %s28 = sadd.s32 1, %s17
    %s29 = scalar_select %p26, %s28, %s17
    %p30 = scmp.ge.s32.totalorder %s29, 1
    %s31 = scalar_select %p30, 0, %s29
    %s32 = sadd.s32 1, %s16
    %s33 = scalar_select %p30, %s32, %s16
    %p34 = scmp.ge.s32.totalorder %s33, 8
    %s35 = scalar_select %p34, 0, %s33
    %s36 = ssub.s32 %s16, %s35
    %s37 = ssub.s32 %s17, %s31
    %s38 = sor.u32 %s36, %s37
    %p39 = scmp.eq.s32.totalorder %s38, 0
    %s41 = sadd.s32 %s40, 1
    %s42 = scalar_select %p39, %s40, %s41
    %p45 = pneg %p39
    %p46 = scmp.eq.s32.totalorder %s9, 7
    %p47 = por %p45, %p46
    %p48 = scmp.ne.s32.totalorder %s40, %s43
    %p49 = scmp.eq.s32.totalorder %s9, 0
    %p50 = por %p48, %p49
    %p51 = scmp.ne.s32.totalorder %s40, %s43
    %p52 = scmp.eq.s32.totalorder %s14, 7
    %p53 = por %p51, %p52
    %p54 = scmp.ne.s32.totalorder %s43, %s44
    %p55 = scmp.eq.s32.totalorder %s14, 0
    %p56 = por %p54, %p55
    %p57 = scmp.ne.s32.totalorder %s43, %s44
    %p58 = scmp.eq.s32.totalorder %s15, 7
    %p59 = por %p57, %p58
    %p61 = scmp.ne.s32.totalorder %s44, %s60
    %p62 = scmp.eq.s32.totalorder %s15, 0
    %p63 = por %p61, %p62
    %s64 = ssub.s32 %s16, %s35
    %s65 = ssub.s32 %s18, %s27
    %s66 = sor.u32 %s64, %s65
    %p67 = scmp.eq.s32.totalorder %s66, 0
    %s69 = sadd.s32 %s68, 1
    %s70 = scalar_select %p67, %s68, %s69
    %p73 = pneg %p67
    %p74 = scmp.eq.s32.totalorder %s9, 7
    %p75 = por %p73, %p74
    %p76 = scmp.ne.s32.totalorder %s68, %s71
    %p77 = scmp.eq.s32.totalorder %s9, 0
    %p78 = por %p76, %p77
    %p79 = scmp.ne.s32.totalorder %s68, %s71
    %p80 = scmp.eq.s32.totalorder %s14, 7
    %p81 = por %p79, %p80
    %p82 = scmp.ne.s32.totalorder %s71, %s72
    %p83 = scmp.eq.s32.totalorder %s14, 0
    %p84 = por %p82, %p83
    %p85 = scmp.ne.s32.totalorder %s71, %s72
    %p86 = scmp.eq.s32.totalorder %s15, 7
    %p87 = por %p85, %p86
    %p89 = scmp.ne.s32.totalorder %s72, %s88
    %p90 = scmp.eq.s32.totalorder %s15, 0
    %p91 = por %p89, %p90
    %s92 = ssub.s32 %s16, %s35
    %s93 = ssub.s32 %s18, %s27
    %s94 = sor.u32 %s92, %s93
    %p95 = scmp.eq.s32.totalorder %s94, 0
    %s97 = sadd.s32 %s96, 1
    %s98 = scalar_select %p95, %s96, %s97
    %p101 = pneg %p95
    %p102 = scmp.eq.s32.totalorder %s9, 7
    %p103 = por %p101, %p102
    %p104 = scmp.ne.s32.totalorder %s96, %s99
    %p105 = scmp.eq.s32.totalorder %s9, 0
    %p106 = por %p104, %p105
    %p107 = scmp.ne.s32.totalorder %s96, %s99
    %p108 = scmp.eq.s32.totalorder %s14, 7
    %p109 = por %p107, %p108
    %p110 = scmp.ne.s32.totalorder %s99, %s100
    %p111 = scmp.eq.s32.totalorder %s14, 0
    %p112 = por %p110, %p111
    %p113 = scmp.ne.s32.totalorder %s99, %s100
    %p114 = scmp.eq.s32.totalorder %s15, 7
    %p115 = por %p113, %p114
    %p117 = scmp.ne.s32.totalorder %s100, %s116
    %p118 = scmp.eq.s32.totalorder %s15, 0
    %p119 = por %p117, %p118
    %s120 = ssub.s32 %s16, %s35
    %s121 = ssub.s32 %s17, %s31
    %s122 = sor.u32 %s120, %s121
    %p123 = scmp.eq.s32.totalorder %s122, 0
    %s125 = sadd.s32 %s124, 1
    %s126 = scalar_select %p123, %s124, %s125
    %p129 = pneg %p123
    %p130 = scmp.eq.s32.totalorder %s9, 7
    %p131 = por %p129, %p130
    %p132 = scmp.ne.s32.totalorder %s124, %s127
    %p133 = scmp.eq.s32.totalorder %s9, 0
    %p134 = por %p132, %p133
    %p135 = scmp.ne.s32.totalorder %s124, %s127
    %p136 = scmp.eq.s32.totalorder %s14, 7
    %p137 = por %p135, %p136
    %p138 = scmp.ne.s32.totalorder %s127, %s128
    %p139 = scmp.eq.s32.totalorder %s14, 0
    %p140 = por %p138, %p139
    %p141 = scmp.ne.s32.totalorder %s127, %s128
    %p142 = scmp.eq.s32.totalorder %s15, 7
    %p143 = por %p141, %p142
    %p145 = scmp.ne.s32.totalorder %s128, %s144
    %p146 = scmp.eq.s32.totalorder %s15, 0
    %p147 = por %p145, %p146
    %p148 = scmp.le.s32.totalorder 1, %s9
    %p149 = scmp.lt.s32.totalorder %s9, 9
    %p150 = pnand %p148, %p149
    %p151 = pneg %p150
    // Predicated region
    $region9: #{asr_whisper_forward.67} parent=5 // pred_check
      _
    $region10: #{asr_whisper_forward.67} parent=5 // pred_check_branch
      %153 = sbr.rel (%p150) target = $region12
    $region11: #{asr_whisper_forward.67} parent=5 // pred_region
      %s154 = ssub.s32 %s9, 1
    $region12: #{asr_whisper_forward.67} parent=5 // pred_fallthru
      _
    %p155 = scmp.lt.s32.totalorder %s9, 8
    // Predicated region
    $region13: #{asr_whisper_forward.67} parent=5 // pred_check
      %p156 = pneg %p155
    $region14: #{asr_whisper_forward.67} parent=5 // pred_check_branch
      %158 = sbr.rel (%p156) target = $region16
    $region15: #{asr_whisper_forward.67} parent=5 // pred_region
      // Predicated region
      $region17: #{asr_whisper_forward.67} parent=15 // pred_check
        %p159 = pneg %p50
      $region18: #{asr_whisper_forward.67} parent=15 // pred_check_branch
        %161 = sbr.rel (%p159) target = $region20
      $region19: #{asr_whisper_forward.67} parent=15 // pred_region
        %p162 = scmp.lt.s32.totalorder %s16, 7
        %s163 = scalar_select %p162, %s16, 7
        %p164 = scmp.lt.s32.totalorder %s17, 0
        %s165 = scalar_select %p164, %s17, 0
        %s166 = sadd.s32 %s165, %s163
        %s167 = smul.addr %s166, 8
        %s168 = scalar_lea.vmem %s0, %s167
      $region20: #{asr_whisper_forward.67} parent=15 // pred_fallthru
        _
      // Predicated region
      $region21: #{asr_whisper_forward.67} parent=15 // pred_check
        %p169 = pneg %p78
      $region22: #{asr_whisper_forward.67} parent=15 // pred_check_branch
        %171 = sbr.rel (%p169) target = $region24
      $region23: #{asr_whisper_forward.67} parent=15 // pred_region
        %s172 = smul.u32 2, %s18
        %p173 = scmp.lt.s32.totalorder %s16, 7
        %s174 = scalar_select %p173, %s16, 7
        %p175 = scmp.lt.s32.totalorder %s172, 1
        %s176 = scalar_select %p175, %s172, 1
        %s177 = smul.addr %s174, 2
        %s178 = sadd.s32 %s176, %s177
        %s179 = smul.addr %s178, 8
        %s180 = scalar_lea.vmem %s1, %s179
        %s181 = smul.u32 2, %s18
      $region24: #{asr_whisper_forward.67} parent=15 // pred_fallthru
        _
      // Predicated region
      $region25: #{asr_whisper_forward.67} parent=15 // pred_check
        %p182 = pneg %p106
      $region26: #{asr_whisper_forward.67} parent=15 // pred_check_branch
        %184 = sbr.rel (%p182) target = $region28
      $region27: #{asr_whisper_forward.67} parent=15 // pred_region
        %s185 = smul.u32 2, %s18
        %p186 = scmp.lt.s32.totalorder %s16, 7
        %s187 = scalar_select %p186, %s16, 7
        %p188 = scmp.lt.s32.totalorder %s185, 1
        %s189 = scalar_select %p188, %s185, 1
        %s190 = smul.addr %s187, 2
        %s191 = sadd.s32 %s189, %s190
        %s192 = smul.addr %s191, 8
        %s193 = scalar_lea.vmem %s2, %s192
        %s194 = smul.u32 2, %s18
      $region28: #{asr_whisper_forward.67} parent=15 // pred_fallthru
        _
    $region16: #{asr_whisper_forward.67} parent=5 // pred_fallthru
      _
    %p195 = scmp.le.s32.totalorder 1, %s9
    %p196 = scmp.lt.s32.totalorder %s9, 9
    %p197 = pnand %p195, %p196
    %p198 = pneg %p197
    // Predicated region
    $region29: #{asr_whisper_forward.67} parent=5 // pred_check
      _
    $region30: #{asr_whisper_forward.67} parent=5 // pred_check_branch
      %200 = sbr.rel (%p197) target = $region32
    $region31: #{asr_whisper_forward.67} parent=5 // pred_region
      %s201 = ssub.s32 %s9, 1
      %p202 = scmp.lt.s32.totalorder %s19, 7
      %s203 = scalar_select %p202, %s19, 7
      %p204 = scmp.lt.s32.totalorder %s20, 0
      %s205 = scalar_select %p204, %s20, 0
      %s206 = sadd.s32 %s205, %s203
      %s207 = smul.addr %s206, 8
      %s208 = scalar_lea.vmem %s0, %s207
      %p209 = pneg %p56
      %p210 = pneg %p53
      %s211 = smul.u32 2, %s21
      %p212 = scmp.lt.s32.totalorder %s19, 7
      %s213 = scalar_select %p212, %s19, 7
      %p214 = scmp.lt.s32.totalorder %s211, 1
      %s215 = scalar_select %p214, %s211, 1
      %s216 = smul.addr %s213, 2
      %s217 = sadd.s32 %s215, %s216
      %s218 = smul.addr %s217, 8
      %s219 = scalar_lea.vmem %s1, %s218
      %p220 = pneg %p84
      %p221 = pneg %p81
      %s222 = smul.u32 2, %s21
      %p223 = scmp.lt.s32.totalorder %s19, 7
      %s224 = scalar_select %p223, %s19, 7
      %p225 = scmp.lt.s32.totalorder %s222, 1
      %s226 = scalar_select %p225, %s222, 1
      %s227 = smul.addr %s224, 2
      %s228 = sadd.s32 %s226, %s227
      %s229 = smul.addr %s228, 8
      %s230 = scalar_lea.vmem %s2, %s229
      %p231 = pneg %p112
      %p232 = pneg %p109
      %p233 = pneg %p140
      %p234 = pneg %p137
      %p235 = scmp.lt.s32.totalorder %s19, 7
      %s236 = scalar_select %p235, %s19, 7
      %p237 = scmp.lt.s32.totalorder %s20, 0
      %s238 = scalar_select %p237, %s20, 0
      %s239 = sadd.s32 %s238, %s236
      %s240 = smul.addr %s239, 8
      %s241 = scalar_lea.vmem %s3, %s240
      %p242 = scmp.lt.s32.totalorder %s19, 7
      %s243 = scalar_select %p242, %s19, 7
      %p244 = scmp.lt.s32.totalorder %s20, 0
      %s245 = scalar_select %p244, %s20, 0
      %s246 = sadd.s32 %s245, %s243
      %s247 = smul.addr %s246, 8
      %s248 = scalar_lea.vmem %s0, %s247
      %s249 = smul.u32 2, %s21
      %p250 = scmp.lt.s32.totalorder %s19, 7
      %s251 = scalar_select %p250, %s19, 7
      %p252 = scmp.lt.s32.totalorder %s249, 1
      %s253 = scalar_select %p252, %s249, 1
      %s254 = smul.addr %s251, 2
      %s255 = sadd.s32 %s253, %s254
      %s256 = smul.addr %s255, 8
      %s257 = scalar_lea.vmem %s1, %s256
      %s258 = smul.u32 2, %s21
      %s259 = smul.u32 2, %s21
      %p260 = scmp.lt.s32.totalorder %s19, 7
      %s261 = scalar_select %p260, %s19, 7
      %p262 = scmp.lt.s32.totalorder %s259, 1
      %s263 = scalar_select %p262, %s259, 1
      %s264 = smul.addr %s261, 2
      %s265 = sadd.s32 %s263, %s264
      %s266 = smul.addr %s265, 8
      %s267 = scalar_lea.vmem %s2, %s266
      %s268 = smul.u32 2, %s21
      %p269 = scmp.lt.s32.totalorder %s19, 7
      %s270 = scalar_select %p269, %s19, 7
      %p271 = scmp.lt.s32.totalorder %s20, 0
      %s272 = scalar_select %p271, %s20, 0
      %s273 = sadd.s32 %s272, %s270
      %s274 = smul.addr %s273, 8
      %s275 = scalar_lea.vmem %s3, %s274
      %p277 = scmp.eq.s32.totalorder %s21, 0
      // Predicated region
      $region33: #{asr_whisper_forward.67} parent=31 // pred_check
        %p278 = pneg %p277
      $region34: #{asr_whisper_forward.67} parent=31 // pred_check_branch
        %280 = sbr.rel (%p278) target = $region36
      $region35: #{asr_whisper_forward.67} parent=31 // pred_region
        %vm281 = vcmask 7168
        %282 = vst.msk [vmem:[#allocation2] sm:$0xff] %vm281, -1e+30
        %283 = vst.msk [vmem:[#allocation3] sm:$0xff] %vm281, 0.0
        %vm284 = vcmask 64512
        %285 = vst.msk [vmem:[#allocation4] sm:$0xff] %vm284, 0.0
      $region36: #{asr_whisper_forward.67} parent=31 // pred_fallthru
        _
      %v286 = vld [vmem:[%s248] sm:$0xff]
      %v287 = vld [vmem:[%s257] sm:$0xff]
      %v288 = vld [vmem:[%s257 + $0x8] sm:$0xff]
      %v289 = vld [vmem:[%s267] sm:$0xff]
      %v290 = vld [vmem:[%s267 + $0x8] sm:$0xff]
      %v291 = vpack.c.bf16 %v286, %v286
      %v292 = vpack.c.bf16 %v288, %v287
      %vm293 = vcmask 64512
      %v295 = vsel %vm293, %v291, 0
      %v298 = vsel %vm293, %v292, 0
      %300 = vmatpush.bf16.xpose.msra.mxu0 0
      %301 = vmatpush.bf16.xpose.msra.mxu0 0
      %302 = vmatpush.bf16.xpose.msra.mxu0 0
      %303 = vmatpush.bf16.xpose.msra.mxu0 0
      %304 = vmatpush.bf16.xpose.msra.mxu0 0
      %305 = vmatpush.bf16.xpose.msra.mxu0 0
      %306 = vmatpush.bf16.xpose.msra.mxu0 0
      %307 = vmatpush.bf16.xpose.msra.mxu0 %v298
      %308 = vmatmul.bf16.gmra.mxu0 %v295
      %v309 = vpop.f32.mrf.mxu0
      %v310 = vadd.f32 0.0, %v309
      %v311 = vpop.f32.mrf.mxu0
      %312 = vdwg.mxu0
      %v313 = vmul.f32 %v310, 0.35355338
      %v314 = vld [vmem:[#allocation2] sm:$0xff]
      %vm315 = vcmask 130048
      %v316 = vsel %vm315, %v313, -inf
      %317 = vmax.xlane.f32.xlu0 %v316
      %v318 = vpop.xlane.xlu0 %317
      %v319 = vmax.f32 %v314, %v318
      %v320 = vsub.f32 %v314, %v319
      %v321 = vmul.f32 %v320, 1.442695
      %v322 = vpow.pop %v321
      %324 = vset.pattern.permute.xlu0 0
      %325 = vperm.xlu0 %324, %v319
      %v326 = vpop.permute.xlu0 %325
      %v328 = vsub.f32 %v313, %v326
      %v329 = vmul.f32 %v328, 1.442695
      %v330 = vpow.pop %v329
      %v331 = vld [vmem:[#allocation3] sm:$0xff]
      %v332 = vmul.f32 %v322, %v331
      %v333 = vsel %vm315, %v330, 0.0
      %334 = vadd.xlane.f32.xlu0 %v333
      %v335 = vpop.xlane.xlu0 %334
      %v336 = vadd.f32 %v332, %v335
      %vm337 = vcmask 7168
      %338 = vst.msk [vmem:[#allocation3] sm:$0xff] %vm337, %v336
      %v339 = vld [vmem:[#allocation4] sm:$0xff]
      %341 = vset.pattern.permute.xlu0 0
      %342 = vperm.xlu0 %341, %v322
      %v343 = vpop.permute.xlu0 %342
      %v345 = vmul.f32 %v343, %v339
      %v346 = vpack.c.bf16 %v330, %v330
      %v347 = vpack.c.bf16 %v290, %v289
      %v349 = vsel %vm315, %v346, 0
      %351 = vmatpush.bf16.msra.mxu0 0
      %352 = vmatpush.bf16.msra.mxu0 0
      %353 = vmatpush.bf16.msra.mxu0 0
      %354 = vmatpush.bf16.msra.mxu0 0
      %355 = vmatpush.bf16.msra.mxu0 0
      %356 = vmatpush.bf16.msra.mxu0 0
      %357 = vmatpush.bf16.msra.mxu0 0
      %358 = vmatpush.bf16.msra.mxu0 %v347
      %359 = vmatmul.bf16.gmra.mxu0 %v349
      %v360 = vpop.f32.mrf.mxu0
      %v361 = vadd.f32 0.0, %v360
      %v362 = vpop.f32.mrf.mxu0
      %363 = vdwg.mxu0
      %v364 = vadd.f32 %v345, %v361
      %365 = vst.msk [vmem:[#allocation4] sm:$0xff] %vm293, %v364
      %366 = vst.msk [vmem:[#allocation2] sm:$0xff] %vm337, %v319
      // Predicated region
      $region37: #{asr_whisper_forward.67} parent=31 // pred_check
        %p367 = pneg %p277
      $region38: #{asr_whisper_forward.67} parent=31 // pred_check_branch
        %369 = sbr.rel (%p367) target = $region40
      $region39: #{asr_whisper_forward.67} parent=31 // pred_region
        %v370 = vld [vmem:[#allocation4] sm:$0xff]
        %v371 = vld [vmem:[#allocation3] sm:$0xff]
        %v372 = vrcp.pop %v371
        %374 = vset.pattern.permute.xlu0 0
        %375 = vperm.xlu0 %374, %v372
        %v376 = vpop.permute.xlu0 %375
        %v378 = vmul.f32 %v370, %v376
        %379 = vst.msk [vmem:[%s275] sm:$0xff] %vm293, %v378
      $region40: #{asr_whisper_forward.67} parent=31 // pred_fallthru
        _
      %p380 = scmp.lt.s32.totalorder %s19, 7
      %s381 = scalar_select %p380, %s19, 7
      %p382 = scmp.lt.s32.totalorder %s20, 0
      %s383 = scalar_select %p382, %s20, 0
      %s384 = sadd.s32 %s383, %s381
      %s385 = smul.addr %s384, 8
      %s386 = scalar_lea.vmem %s3, %s385
      // Predicated region
      $region41: #{asr_whisper_forward.67} parent=31 // pred_check
        %p387 = pneg %p137
      $region42: #{asr_whisper_forward.67} parent=31 // pred_check_branch
        %389 = sbr.rel (%p387) target = $region44
      $region43: #{asr_whisper_forward.67} parent=31 // pred_region
        _
      $region44: #{asr_whisper_forward.67} parent=31 // pred_fallthru
        _
    $region32: #{asr_whisper_forward.67} parent=5 // pred_fallthru
      _
    %p390 = scmp.le.s32.totalorder 2, %s9
    // Predicated region
    $region45: #{asr_whisper_forward.67} parent=5 // pred_check
      %p391 = pneg %p390
    $region46: #{asr_whisper_forward.67} parent=5 // pred_check_branch
      %393 = sbr.rel (%p391) target = $region48
    $region47: #{asr_whisper_forward.67} parent=5 // pred_region
      %s394 = ssub.s32 %s9, 2
      // Predicated region
      $region49: #{asr_whisper_forward.67} parent=47 // pred_check
        %p395 = pneg %p143
      $region50: #{asr_whisper_forward.67} parent=47 // pred_check_branch
        %397 = sbr.rel (%p395) target = $region52
      $region51: #{asr_whisper_forward.67} parent=47 // pred_region
        %p398 = scmp.lt.s32.totalorder %s22, 7
        %s399 = scalar_select %p398, %s22, 7
        %p400 = scmp.lt.s32.totalorder %s23, 0
        %s401 = scalar_select %p400, %s23, 0
        %s402 = sadd.s32 %s401, %s399
        %s403 = smul.addr %s402, 8
        %s404 = scalar_lea.vmem %s3, %s403
      $region52: #{asr_whisper_forward.67} parent=47 // pred_fallthru
        _
    $region48: #{asr_whisper_forward.67} parent=5 // pred_fallthru
      _
  $region6: #{asr_whisper_forward.67} parent=0 // loop_footer
    %s13 = sadd.s32 1, %s9
  $region7: #{asr_whisper_forward.67} parent=0 // loop_footer_branch
    %8 = sbr.rel target = $region3
  $region8: #{asr_whisper_forward.67} parent=0 // loop_exit
    _

// kernel: asr_whisper_forward.71
$region0: #{asr_whisper_forward.71}
  #allocation0 [shape = 'u32[]', space=smem, size = 0x4, offset = 0x4, fixed_abs, tag = 'smem constant byte address 0x4 - core index']
  #allocation1 [shape = 'u32[72,128]{1,0:T(1,128)}', space=vmem, size = 0x9000, scoped, tag = 'internal scratch']
  #allocation2 [shape = 'f32[16,32]{1,0:T(8,128)}', space=vmem, size = 0x2000, scoped, tag = 'scratch operand']
  %s0 = inlined_call_operand.vmem [shape: f32[16,128], index: 0, kind: input, shape index: {}]
  %s1 = inlined_call_operand.vmem [shape: f32[128,32], index: 1, kind: input, shape index: {}]
  %s2 = inlined_call_operand.vmem [shape: f32[1,32], index: 2, kind: input, shape index: {}]
  %s3 = inlined_call_operand.vmem [shape: f32[16,32], index: 3, kind: input, shape index: {}]
  %s4 = inlined_call_operand.vmem [shape: f32[16,32], index: 4, kind: output, shape index: {}]
  %s5 = sld [smem:[#allocation0]]
  $region34: #{asr_whisper_forward.71} parent=0
    _
  %s7 = ssub.s32 1, %s5
  %s8 = scalar_select 0, %s7, %s5
  // Predicated region
  $region2: #{asr_whisper_forward.71} parent=0 // pred_check
    _
  $region3: #{asr_whisper_forward.71} parent=0 // pred_check_branch
    %10 = sbr.rel (0) target = $region5
  $region4: #{asr_whisper_forward.71} parent=0 // pred_region
    _
  $region5: #{asr_whisper_forward.71} parent=0 // pred_fallthru
    _
  // Predicated region
  $region6: #{asr_whisper_forward.71} parent=0 // pred_check
    _
  $region7: #{asr_whisper_forward.71} parent=0 // pred_check_branch
    %12 = sbr.rel (0) target = $region9
  $region8: #{asr_whisper_forward.71} parent=0 // pred_region
    _
  $region9: #{asr_whisper_forward.71} parent=0 // pred_fallthru
    _
  // Predicated region
  $region10: #{asr_whisper_forward.71} parent=0 // pred_check
    _
  $region11: #{asr_whisper_forward.71} parent=0 // pred_check_branch
    %14 = sbr.rel (0) target = $region13
  $region12: #{asr_whisper_forward.71} parent=0 // pred_region
    _
  $region13: #{asr_whisper_forward.71} parent=0 // pred_fallthru
    _
  // Predicated region
  $region14: #{asr_whisper_forward.71} parent=0 // pred_check
    _
  $region15: #{asr_whisper_forward.71} parent=0 // pred_check_branch
    %16 = sbr.rel (0) target = $region17
  $region16: #{asr_whisper_forward.71} parent=0 // pred_region
    _
  $region17: #{asr_whisper_forward.71} parent=0 // pred_fallthru
    _
  %p17 = scmp.eq.s32.totalorder 0, 0
  // Predicated region
  $region18: #{asr_whisper_forward.71} parent=0 // pred_check
    %p18 = pneg %p17
  $region19: #{asr_whisper_forward.71} parent=0 // pred_check_branch
    %20 = sbr.rel (%p18) target = $region21
  $region20: #{asr_whisper_forward.71} parent=0 // pred_region
    %vm21 = vcmask 261120
    %22 = vst.msk [vmem:[#allocation2] sm:$0xff] %vm21, 0.0
    %23 = vst.msk [vmem:[#allocation2 + $0x8] sm:$0xff] %vm21, 0.0
  $region21: #{asr_whisper_forward.71} parent=0 // pred_fallthru
    _
  %v24 = vld [vmem:[#allocation2] sm:$0xff]
  %v25 = vld [vmem:[#allocation2 + $0x8] sm:$0xff]
  %v26 = vld [vmem:[%s0] sm:$0xff]
  %v27 = vld [vmem:[%s0 + $0x8] sm:$0xff]
  %v28 = vpack.c.bf16 %v27, %v26
  %v29 = vld [vmem:[%s1] sm:$0xff]
  %v30 = vld [vmem:[%s1 + $0x8] sm:$0xff]
  %v31 = vld [vmem:[%s1 + $0x10] sm:$0xff]
  %v32 = vld [vmem:[%s1 + $0x18] sm:$0xff]
  %v33 = vld [vmem:[%s1 + $0x20] sm:$0xff]
  %v34 = vld [vmem:[%s1 + $0x28] sm:$0xff]
  %v35 = vld [vmem:[%s1 + $0x30] sm:$0xff]
  %v36 = vld [vmem:[%s1 + $0x38] sm:$0xff]
  %v37 = vld [vmem:[%s1 + $0x40] sm:$0xff]
  %v38 = vld [vmem:[%s1 + $0x48] sm:$0xff]
  %v39 = vld [vmem:[%s1 + $0x50] sm:$0xff]
  %v40 = vld [vmem:[%s1 + $0x58] sm:$0xff]
  %v41 = vld [vmem:[%s1 + $0x60] sm:$0xff]
  %v42 = vld [vmem:[%s1 + $0x68] sm:$0xff]
  %v43 = vld [vmem:[%s1 + $0x70] sm:$0xff]
  %v44 = vld [vmem:[%s1 + $0x78] sm:$0xff]
  %v45 = vpack.c.bf16 %v30, %v29
  %v46 = vpack.c.bf16 %v32, %v31
  %v47 = vpack.c.bf16 %v34, %v33
  %v48 = vpack.c.bf16 %v36, %v35
  %v49 = vpack.c.bf16 %v38, %v37
  %v50 = vpack.c.bf16 %v40, %v39
  %v51 = vpack.c.bf16 %v42, %v41
  %v52 = vpack.c.bf16 %v44, %v43
  %53 = vmatpush.bf16.msra.mxu0 %v52
  %54 = vmatpush.bf16.msra.mxu0 %v51
  %55 = vmatpush.bf16.msra.mxu0 %v50
  %56 = vmatpush.bf16.msra.mxu0 %v49
  %57 = vmatpush.bf16.msra.mxu0 %v48
  %58 = vmatpush.bf16.msra.mxu0 %v47
  %59 = vmatpush.bf16.msra.mxu0 %v46
  %60 = vmatpush.bf16.msra.mxu0 %v45
  %61 = vmatmul.bf16.gmra.mxu0 %v28
  %v62 = vpop.f32.mrf.mxu0
  %v63 = vadd.f32 0.0, %v62
  %v64 = vpop.f32.mrf.mxu0
  %v65 = vadd.f32 0.0, %v64
  %66 = vdwg.mxu0
  %v67 = vadd.f32 %v24, %v63
  %v68 = vadd.f32 %v25, %v65
  %vm69 = vcmask 261120
  %70 = vst.msk [vmem:[#allocation2] sm:$0xff] %vm69, %v67
  %71 = vst.msk [vmem:[#allocation2 + $0x8] sm:$0xff] %vm69, %v68
  // Predicated region
  $region22: #{asr_whisper_forward.71} parent=0 // pred_check
    %p72 = pneg %p17
  $region23: #{asr_whisper_forward.71} parent=0 // pred_check_branch
    %74 = sbr.rel (%p72) target = $region25
  $region24: #{asr_whisper_forward.71} parent=0 // pred_region
    %v75 = vld [vmem:[#allocation2] sm:$0xff]
    %v76 = vld [vmem:[#allocation2 + $0x8] sm:$0xff]
    %v77 = vld [vmem:[%s2] sm:$0x1]
    %v79 = vperm.slane %v77, 0
    %v81 = vadd.f32 %v75, %v79
    %v82 = vadd.f32 %v76, %v79
    %v83 = vld [vmem:[%s3] sm:$0xff]
    %v84 = vld [vmem:[%s3 + $0x8] sm:$0xff]
    %v85 = vadd.f32 %v81, %v83
    %v86 = vadd.f32 %v82, %v84
    %87 = vst.msk [vmem:[%s4] sm:$0xff] %vm69, %v85
    %88 = vst.msk [vmem:[%s4 + $0x8] sm:$0xff] %vm69, %v86
  $region25: #{asr_whisper_forward.71} parent=0 // pred_fallthru
    _
  // Predicated region
  $region26: #{asr_whisper_forward.71} parent=0 // pred_check
    _
  $region27: #{asr_whisper_forward.71} parent=0 // pred_check_branch
    %90 = sbr.rel (0) target = $region29
  $region28: #{asr_whisper_forward.71} parent=0 // pred_region
    _
  $region29: #{asr_whisper_forward.71} parent=0 // pred_fallthru
    _
  // Predicated region
  $region30: #{asr_whisper_forward.71} parent=0 // pred_check
    _
  $region31: #{asr_whisper_forward.71} parent=0 // pred_check_branch
    %92 = sbr.rel (0) target = $region33
  $region32: #{asr_whisper_forward.71} parent=0 // pred_region
    _
  $region33: #{asr_whisper_forward.71} parent=0 // pred_fallthru
    _

// kernel: asr_whisper_forward.85
$region0: #{asr_whisper_forward.85}
  #allocation0 [shape = 'u32[]', space=smem, size = 0x4, offset = 0x4, fixed_abs, tag = 'smem constant byte address 0x4 - core index']
  #allocation1 [shape = 'u32[72,128]{1,0:T(1,128)}', space=vmem, size = 0x9000, scoped, tag = 'internal scratch']
  #allocation2 [shape = 'f32[16,64]{1,0:T(8,128)}', space=vmem, size = 0x2000, scoped, tag = 'scratch operand']
  %s0 = inlined_call_operand.vmem [shape: f32[16,32], index: 0, kind: input, shape index: {}]
  %s1 = inlined_call_operand.vmem [shape: f32[32,64], index: 1, kind: input, shape index: {}]
  %s2 = inlined_call_operand.hbm [shape: f32[16,64], index: 2, kind: output, shape index: {}]
  %s3 = sld [smem:[#allocation0]]
  $region26: #{asr_whisper_forward.85} parent=0
    _
  %s5 = ssub.s32 1, %s3
  %s6 = scalar_select 0, %s5, %s3
  $region1: #{asr_whisper_forward.85} parent=0
    #allocation3 [shape = 'u8[8192]{0}', space=vmem, size = 0x2000, scoped, tag = 'output window, operand 0, single buffered']
    #allocation4 [shape = 's32[1]{0}', space=sflag, size = 0x4, scoped, tag = 'scoped memory for asr_whisper_forward.85']
    %7 = vsyncpa [#allocation4], 0
    // Predicated region
    $region2: #{asr_whisper_forward.85} parent=1 // pred_check
      _
    $region3: #{asr_whisper_forward.85} parent=1 // pred_check_branch
      %9 = sbr.rel (0) target = $region5
    $region4: #{asr_whisper_forward.85} parent=1 // pred_region
      _
    $region5: #{asr_whisper_forward.85} parent=1 // pred_fallthru
      _
    // Predicated region
    $region6: #{asr_whisper_forward.85} parent=1 // pred_check
      _
    $region7: #{asr_whisper_forward.85} parent=1 // pred_check_branch
      %11 = sbr.rel (0) target = $region9
    $region8: #{asr_whisper_forward.85} parent=1 // pred_region
      _
    $region9: #{asr_whisper_forward.85} parent=1 // pred_fallthru
      _
    %p13 = scmp.eq.s32.totalorder 0, 0
    // Predicated region
    $region10: #{asr_whisper_forward.85} parent=1 // pred_check
      %p14 = pneg %p13
    $region11: #{asr_whisper_forward.85} parent=1 // pred_check_branch
      %16 = sbr.rel (%p14) target = $region13
    $region12: #{asr_whisper_forward.85} parent=1 // pred_region
      %vm17 = vcmask 523264
      %18 = vst.msk [vmem:[#allocation2] sm:$0xff] %vm17, 0.0
      %19 = vst.msk [vmem:[#allocation2 + $0x8] sm:$0xff] %vm17, 0.0
    $region13: #{asr_whisper_forward.85} parent=1 // pred_fallthru
      _
    %v20 = vld [vmem:[#allocation2] sm:$0xff]
    %v21 = vld [vmem:[#allocation2 + $0x8] sm:$0xff]
    %v22 = vld [vmem:[%s0] sm:$0xff]
    %v23 = vld [vmem:[%s0 + $0x8] sm:$0xff]
    %v24 = vpack.c.bf16 %v23, %v22
    %v25 = vld [vmem:[%s1] sm:$0xff]
    %v26 = vld [vmem:[%s1 + $0x8] sm:$0xff]
    %v27 = vld [vmem:[%s1 + $0x10] sm:$0xff]
    %v28 = vld [vmem:[%s1 + $0x18] sm:$0xff]
    %v29 = vpack.c.bf16 %v26, %v25
    %v30 = vpack.c.bf16 %v28, %v27
    %vm31 = vcmask 261120
    %v33 = vsel %vm31, %v24, 0
    %35 = vmatpush.bf16.msra.mxu0 0
    %36 = vmatpush.bf16.msra.mxu0 0
    %37 = vmatpush.bf16.msra.mxu0 0
    %38 = vmatpush.bf16.msra.mxu0 0
    %39 = vmatpush.bf16.msra.mxu0 0
    %40 = vmatpush.bf16.msra.mxu0 0
    %41 = vmatpush.bf16.msra.mxu0 %v30
    %42 = vmatpush.bf16.msra.mxu0 %v29
    %43 = vmatmul.bf16.gmra.mxu0 %v33
    %v44 = vpop.f32.mrf.mxu0
    %v45 = vadd.f32 0.0, %v44
    %v46 = vpop.f32.mrf.mxu0
    %v47 = vadd.f32 0.0, %v46
    %48 = vdwg.mxu0
    %v49 = vadd.f32 %v20, %v45
    %v50 = vadd.f32 %v21, %v47
    %vm51 = vcmask 523264
    %52 = vst.msk [vmem:[#allocation2] sm:$0xff] %vm51, %v49
    %53 = vst.msk [vmem:[#allocation2 + $0x8] sm:$0xff] %vm51, %v50
    // Predicated region
    $region14: #{asr_whisper_forward.85} parent=1 // pred_check
      %p54 = pneg %p13
    $region15: #{asr_whisper_forward.85} parent=1 // pred_check_branch
      %56 = sbr.rel (%p54) target = $region17
    $region16: #{asr_whisper_forward.85} parent=1 // pred_region
      %v57 = vld [vmem:[#allocation2] sm:$0xff]
      %v58 = vld [vmem:[#allocation2 + $0x8] sm:$0xff]
      %59 = vst.msk [vmem:[#allocation3] sm:$0xff] %vm51, %v57
      %60 = vst.msk [vmem:[#allocation3 + $0x8] sm:$0xff] %vm51, %v58
    $region17: #{asr_whisper_forward.85} parent=1 // pred_fallthru
      _
    // Predicated region
    $region18: #{asr_whisper_forward.85} parent=1 // pred_check
      _
    $region19: #{asr_whisper_forward.85} parent=1 // pred_check_branch
      %62 = sbr.rel (0) target = $region21
    $region20: #{asr_whisper_forward.85} parent=1 // pred_region
      %64 = vsyncadd [#allocation4], 0
      %s65 = sshll.u32 [#allocation3], 4
      %s66 = int_to_ptr.vmem [resolvable:$true] %s65
      %s67 = sshll.u32 %s2, 4
      %s68 = int_to_ptr.hbm [resolvable:$true] %s67
      %73 = dma.vmem_to_hbm [thread:$0]  %s66, 256, %s68, [#allocation4], 128, 128, 8
    $region21: #{asr_whisper_forward.85} parent=1 // pred_fallthru
      _
    // Predicated region
    $region22: #{asr_whisper_forward.85} parent=1 // pred_check
      _
    $region23: #{asr_whisper_forward.85} parent=1 // pred_check_branch
      %75 = sbr.rel (0) target = $region25
    $region24: #{asr_whisper_forward.85} parent=1 // pred_region
      %77 = dma.done [#allocation4], 256
    $region25: #{asr_whisper_forward.85} parent=1 // pred_fallthru
      _
    %78 = vsyncpa [#allocation4], 1

</llo_original>
